<compile_context>
chip_gen: v5e
topology: v5e:2x2
jax: 0.10.0
libtpu: 0.0.40
codegen_flags: <defaults>
</compile_context>

<pallas_src>
import functools

import jax
import jax.numpy as jnp
from jax.experimental import pallas as pl
from jax.experimental.pallas import tpu as pltpu

BN_EPS = 1e-5
LANE = 128                # lane-dense padded width for features / hidden / classes
NUM_LAYERS = 5
GRAPHS_PER_BLOCK = 8      # graphs per grid step -> MLP matmul M = 8*16 = 128 rows


# ----------------------------- fused Pallas kernel ------------------------------ #

def gin_fused_kernel(a_ref, x_ref, w1_ref, b1_ref, w2_ref, b2_ref,
                     gamma_ref, beta_ref, wf1_ref, bf1_ref, wf2_ref, bf2_ref,
                     out_ref, *, num_layers, num_classes, bb, n):
    a = a_ref[...]                       # [BB, N, N]    bf16: adjacency + I (integer counts)
    h = x_ref[...]                       # [BB, N, LANE] bf16: node features, zero-padded lanes
    inv_n = 1.0 / n

    for l in range(num_layers):          # static unroll; a, h, weights stay VMEM-resident
        # GINConv (eps=0): nn(x + sum_{j in N(i)} x_j) == nn((A + I) @ x), per graph.
        agg = jnp.einsum('bij,bjd->bid', a, h,
                         preferred_element_type=jnp.float32)          # [BB, N, LANE] f32
        # MLP (Linear -> ReLU -> Linear) on flattened rows: M = BB*N per vmatmul.
        z = jnp.dot(agg.reshape(bb * n, LANE).astype(jnp.bfloat16), w1_ref[l],
                    preferred_element_type=jnp.float32) + b1_ref[l]
        z = jnp.maximum(z, 0.0)
        z = jnp.dot(z.astype(jnp.bfloat16), w2_ref[l],
                    preferred_element_type=jnp.float32) + b2_ref[l]
        # forward(): x = relu(conv(x)); x = bn(x)
        z = jnp.maximum(z, 0.0)
        z3 = z.reshape(bb, n, LANE)
        # BatchNorm1d training-mode stats per graph; independent sum / sum-sq reductions.
        s1 = jnp.sum(z3, axis=1, keepdims=True)                        # [BB, 1, LANE]
        s2 = jnp.sum(z3 * z3, axis=1, keepdims=True)
        mean = s1 * inv_n
        var = jnp.maximum(s2 * inv_n - mean * mean, 0.0)               # biased var, f32
        scale = gamma_ref[l] * jax.lax.rsqrt(var + BN_EPS)             # [BB, 1, LANE]
        shift = beta_ref[l] - mean * scale
        h = (z3 * scale + shift).astype(jnp.bfloat16)                  # bf16 for next A@h

    # head: global_add_pool (per graph) + fc1/relu/fc2 + log_softmax
    pooled = jnp.sum(h.astype(jnp.float32), axis=1)                    # [BB, LANE]
    t = jnp.dot(pooled.astype(jnp.bfloat16), wf1_ref[...],
                preferred_element_type=jnp.float32) + bf1_ref[...]
    t = jnp.maximum(t, 0.0)
    logits = jnp.dot(t.astype(jnp.bfloat16), wf2_ref[...],
                     preferred_element_type=jnp.float32) + bf2_ref[...]

    # log_softmax over the real classes only (padded lanes masked out)
    lane_id = jax.lax.broadcasted_iota(jnp.int32, logits.shape, 1)
    valid = lane_id < num_classes
    masked = jnp.where(valid, logits, jnp.full_like(logits, -1e30))
    m = jnp.max(masked, axis=-1, keepdims=True)
    zc = masked - m
    lse = jnp.log(jnp.sum(jnp.where(valid, jnp.exp(zc), 0.0), axis=-1, keepdims=True))
    out_ref[...] = jnp.where(valid, zc - lse, 0.0)


# --------------------------------- wrappers -------------------------------------- #

def _pad2(x, rows, cols):
    return jnp.pad(x, ((0, rows - x.shape[0]), (0, cols - x.shape[1])))


def pack_params(params):
    """Pad every weight to lane-dense [*, 128] shapes, stack per-layer tensors,
    and pre-cast matmul operands to bf16 (halves weight DMA bytes)."""
    w1s, b1s, w2s, b2s, gs, bs = [], [], [], [], [], []
    for layer in params["layers"]:
        w1s.append(_pad2(layer["w1"], LANE, LANE))
        b1s.append(_pad2(layer["b1"], 1, LANE))
        w2s.append(_pad2(layer["w2"], LANE, LANE))
        b2s.append(_pad2(layer["b2"], 1, LANE))
        gs.append(_pad2(layer["gamma"], 1, LANE))
        bs.append(_pad2(layer["beta"], 1, LANE))
    return {
        "w1s": jnp.stack(w1s).astype(jnp.bfloat16),      # [L, 128, 128] bf16
        "b1s": jnp.stack(b1s),                           # [L, 1, 128]  f32
        "w2s": jnp.stack(w2s).astype(jnp.bfloat16),
        "b2s": jnp.stack(b2s),
        "gammas": jnp.stack(gs),
        "betas": jnp.stack(bs),
        "wf1": _pad2(params["wf1"], LANE, LANE).astype(jnp.bfloat16),
        "bf1": _pad2(params["bf1"], 1, LANE),
        "wf2": _pad2(params["wf2"], LANE, LANE).astype(jnp.bfloat16),
        "bf2": _pad2(params["bf2"], 1, LANE),
        "num_classes": params["wf2"].shape[1],
    }


def gin_forward(packed, x, edge_index):
    """Batched GIN forward: x is [B, N, F]; the same edge_index is used for all
    graphs (each graph is an independent forward, matching the reference call)."""
    b, n, f = x.shape
    bb = GRAPHS_PER_BLOCK
    assert b % bb == 0, "batch must be a multiple of GRAPHS_PER_BLOCK"

    src, dst = edge_index[0], edge_index[1]
    # A[i, j] = #edges j -> i ; fold the GIN self-connection (eps=0) in as +I.
    adj = jnp.zeros((n, n), jnp.float32).at[dst, src].add(1.0) + jnp.eye(n, dtype=jnp.float32)
    a = jnp.broadcast_to(adj.astype(jnp.bfloat16), (b, n, n))          # exact integer counts

    x_pad = jnp.pad(x, ((0, 0), (0, 0), (0, LANE - f))).astype(jnp.bfloat16)  # [B, N, 128]

    num_classes = packed["num_classes"]
    L = NUM_LAYERS
    kernel = functools.partial(gin_fused_kernel, num_layers=L,
                               num_classes=num_classes, bb=bb, n=n)
    const3 = lambda i: (0, 0, 0)          # weights: same block every step -> DMA'd once
    const2 = lambda i: (0, 0)

    out_pad = pl.pallas_call(
        kernel,
        out_shape=jax.ShapeDtypeStruct((b, LANE), jnp.float32),        # lane-dense store
        grid=(b // bb,),
        in_specs=[
            pl.BlockSpec((bb, n, n), lambda i: (i, 0, 0)),             # A: 16-lane minor dim
            pl.BlockSpec((bb, n, LANE), lambda i: (i, 0, 0)),          # x
            pl.BlockSpec((L, LANE, LANE), const3),                     # w1s
            pl.BlockSpec((L, 1, LANE), const3),                        # b1s
            pl.BlockSpec((L, LANE, LANE), const3),                     # w2s
            pl.BlockSpec((L, 1, LANE), const3),                        # b2s
            pl.BlockSpec((L, 1, LANE), const3),                        # gammas
            pl.BlockSpec((L, 1, LANE), const3),                        # betas
            pl.BlockSpec((LANE, LANE), const2),                        # wf1
            pl.BlockSpec((1, LANE), const2),                           # bf1
            pl.BlockSpec((LANE, LANE), const2),                        # wf2
            pl.BlockSpec((1, LANE), const2),                           # bf2
        ],
        out_specs=pl.BlockSpec((bb, LANE), lambda i: (i, 0)),
        compiler_params=pltpu.CompilerParams(
            dimension_semantics=("parallel",),        # shard batch axis across v7x's 2 TCs
            vmem_limit_bytes=16 * 1024 * 1024),       # explicit; footprint is ~1 MiB
    )(a, x_pad,
      packed["w1s"], packed["b1s"], packed["w2s"], packed["b2s"],
      packed["gammas"], packed["betas"],
      packed["wf1"], packed["bf1"], packed["wf2"], packed["bf2"])
    return out_pad[:, :num_classes]


# ------------------------------ deterministic init ------------------------------- #

def init_params(key, num_features, num_classes, dim):
    params = {"layers": []}
    in_dims = [num_features] + [dim] * 4
    for i in range(NUM_LAYERS):
        key, k1, k2, k3, k4 = jax.random.split(key, 5)
        params["layers"].append({
            "w1": 0.1 * jax.random.normal(k1, (in_dims[i], dim), jnp.float32),
            "b1": 0.1 * jax.random.normal(k2, (1, dim), jnp.float32),
            "w2": 0.1 * jax.random.normal(k3, (dim, dim), jnp.float32),
            "b2": 0.1 * jax.random.normal(k4, (1, dim), jnp.float32),
            # BatchNorm1d affine params (PyTorch default init: weight=1, bias=0)
            "gamma": jnp.ones((1, dim), jnp.float32),
            "beta": jnp.zeros((1, dim), jnp.float32),
        })
    key, k1, k2, k3, k4 = jax.random.split(key, 5)
    params["wf1"] = 0.1 * jax.random.normal(k1, (dim, dim), jnp.float32)
    params["bf1"] = 0.1 * jax.random.normal(k2, (1, dim), jnp.float32)
    params["wf2"] = 0.1 * jax.random.normal(k3, (dim, num_classes), jnp.float32)
    params["bf2"] = 0.1 * jax.random.normal(k4, (1, num_classes), jnp.float32)
    return params


# ------------------------------------ main ---------------------------------------- #

if __name__ == "__main__":
    NUM_GRAPHS = 16           # batched into one gridded call (grid = 2 steps of 8 graphs)
    NUM_NODES = 16
    NUM_FEATURES = 4
    NUM_CLASSES = 3
    DIM = 32

    key = jax.random.PRNGKey(0)
    key, kx = jax.random.split(key)

    # Batch of node-feature matrices [B, N, F]
    x = jax.random.normal(kx, (NUM_GRAPHS, NUM_NODES, NUM_FEATURES), jnp.float32)

    # Bidirectional ring graph: edge_index is [2, E] with row0=src, row1=dst
    idx = jnp.arange(NUM_NODES, dtype=jnp.int32)
    nxt = (idx + 1) % NUM_NODES
    edge_index = jnp.stack([jnp.concatenate([idx, nxt]),
                            jnp.concatenate([nxt, idx])], axis=0)   # [2, 2N]

    params = init_params(key, NUM_FEATURES, NUM_CLASSES, DIM)
    packed = pack_params(params)

    out = gin_forward(packed, x, edge_index)   # [B, NUM_CLASSES] log-probabilities
    out = jax.block_until_ready(out)

    assert out.shape == (NUM_GRAPHS, NUM_CLASSES)
    assert bool(jnp.all(jnp.isfinite(out)))
    # log_softmax rows must (approximately) sum to 1 in probability space
    assert bool(jnp.allclose(jnp.sum(jnp.exp(out), axis=-1), 1.0, atol=1e-3))

    print("KERNEL_OK")
</pallas_src>

<mosaic_0001>
module attributes {stable_mosaic.version = 11 : i64} {
  func.func @gin_fused_kernel(%arg0: i32, %arg1: memref<8x16x16xbf16, #tpu.memory_space<vmem>>, %arg2: memref<8x16x128xbf16, #tpu.memory_space<vmem>>, %arg3: memref<5x128x128xbf16, #tpu.memory_space<vmem>>, %arg4: memref<5x1x128xf32, #tpu.memory_space<vmem>>, %arg5: memref<5x128x128xbf16, #tpu.memory_space<vmem>>, %arg6: memref<5x1x128xf32, #tpu.memory_space<vmem>>, %arg7: memref<5x1x128xf32, #tpu.memory_space<vmem>>, %arg8: memref<5x1x128xf32, #tpu.memory_space<vmem>>, %arg9: memref<128x128xbf16, #tpu.memory_space<vmem>>, %arg10: memref<1x128xf32, #tpu.memory_space<vmem>>, %arg11: memref<128x128xbf16, #tpu.memory_space<vmem>>, %arg12: memref<1x128xf32, #tpu.memory_space<vmem>>, %arg13: memref<8x128xf32, #tpu.memory_space<vmem>>) attributes {dimension_semantics = [#tpu.dimension_semantics<parallel>], iteration_bounds = array<i64: 2>, scalar_prefetch = 0 : i64, scratch_operands = 0 : i64, tpu.core_type = #tpu.core_type<tc>, window_params = [{transform_indices = @transform_0, window_bounds = array<i64: 8, 16, 16>}, {transform_indices = @transform_1, window_bounds = array<i64: 8, 16, 128>}, {pipeline_mode = #tpu.pipeline_mode<synchronous>, transform_indices = @transform_2, window_bounds = array<i64: 5, 128, 128>}, {pipeline_mode = #tpu.pipeline_mode<synchronous>, transform_indices = @transform_3, window_bounds = array<i64: 5, 1, 128>}, {pipeline_mode = #tpu.pipeline_mode<synchronous>, transform_indices = @transform_4, window_bounds = array<i64: 5, 128, 128>}, {pipeline_mode = #tpu.pipeline_mode<synchronous>, transform_indices = @transform_5, window_bounds = array<i64: 5, 1, 128>}, {pipeline_mode = #tpu.pipeline_mode<synchronous>, transform_indices = @transform_6, window_bounds = array<i64: 5, 1, 128>}, {pipeline_mode = #tpu.pipeline_mode<synchronous>, transform_indices = @transform_7, window_bounds = array<i64: 5, 1, 128>}, {pipeline_mode = #tpu.pipeline_mode<synchronous>, transform_indices = @transform_8, window_bounds = array<i64: 128, 128>}, {pipeline_mode = #tpu.pipeline_mode<synchronous>, transform_indices = @transform_9, window_bounds = array<i64: 1, 128>}, {pipeline_mode = #tpu.pipeline_mode<synchronous>, transform_indices = @transform_10, window_bounds = array<i64: 128, 128>}, {pipeline_mode = #tpu.pipeline_mode<synchronous>, transform_indices = @transform_11, window_bounds = array<i64: 1, 128>}, {transform_indices = @transform_12, window_bounds = array<i64: 8, 128>}]} {
    %c0 = arith.constant 0 : index
    %c0_0 = arith.constant 0 : index
    %c0_1 = arith.constant 0 : index
    %0 = vector.load %arg1[%c0, %c0_0, %c0_1] : memref<8x16x16xbf16, #tpu.memory_space<vmem>>, vector<8x16x16xbf16>
    %c0_2 = arith.constant 0 : index
    %c0_3 = arith.constant 0 : index
    %c0_4 = arith.constant 0 : index
    %1 = vector.load %arg2[%c0_2, %c0_3, %c0_4] : memref<8x16x128xbf16, #tpu.memory_space<vmem>>, vector<8x16x128xbf16>
    "tpu.trace_start"() <{level = 10 : i32, message = "bij,bjd->bid"}> : () -> ()
    %cst = arith.constant dense<0.000000e+00> : vector<8x16x128xf32>
    %2 = tpu.matmul %0, %1, %cst {dimension_numbers = #tpu.dot_dimension_numbers<[2], [1], [1], [2], [0, 0, 0, 1, 1, 2], [0], [0]>} : vector<8x16x16xbf16>, vector<8x16x128xbf16>, vector<8x16x128xf32> -> vector<8x16x128xf32>
    "tpu.trace_stop"() : () -> ()
    %3 = vector.shape_cast %2 : vector<8x16x128xf32> to vector<128x128xf32>
    %4 = arith.truncf %3 : vector<128x128xf32> to vector<128x128xbf16>
    %c0_5 = arith.constant 0 : index
    %c0_6 = arith.constant 0 : index
    %c0_7 = arith.constant 0 : index
    %5 = vector.load %arg3[%c0_5, %c0_6, %c0_7] : memref<5x128x128xbf16, #tpu.memory_space<vmem>>, vector<1x128x128xbf16>
    %6 = vector.shape_cast %5 : vector<1x128x128xbf16> to vector<128x128xbf16>
    %cst_8 = arith.constant dense<0.000000e+00> : vector<128x128xf32>
    %7 = tpu.matmul %4, %6, %cst_8 {dimension_numbers = #tpu.dot_dimension_numbers<[1], [0], [0], [1], [0, 0, 1, 1], [], []>} : vector<128x128xbf16>, vector<128x128xbf16>, vector<128x128xf32> -> vector<128x128xf32>
    %c0_9 = arith.constant 0 : index
    %c0_10 = arith.constant 0 : index
    %c0_11 = arith.constant 0 : index
    %8 = vector.load %arg4[%c0_9, %c0_10, %c0_11] : memref<5x1x128xf32, #tpu.memory_space<vmem>>, vector<1x1x128xf32>
    %9 = vector.shape_cast %8 : vector<1x1x128xf32> to vector<1x128xf32>
    %10 = vector.broadcast %9 : vector<1x128xf32> to vector<128x128xf32>
    %11 = arith.addf %7, %10 : vector<128x128xf32>
    %cst_12 = arith.constant 0.000000e+00 : f32
    %12 = vector.broadcast %cst_12 : f32 to vector<128x128xf32>
    %13 = arith.maximumf %11, %12 : vector<128x128xf32>
    %14 = arith.truncf %13 : vector<128x128xf32> to vector<128x128xbf16>
    %c0_13 = arith.constant 0 : index
    %c0_14 = arith.constant 0 : index
    %c0_15 = arith.constant 0 : index
    %15 = vector.load %arg5[%c0_13, %c0_14, %c0_15] : memref<5x128x128xbf16, #tpu.memory_space<vmem>>, vector<1x128x128xbf16>
    %16 = vector.shape_cast %15 : vector<1x128x128xbf16> to vector<128x128xbf16>
    %cst_16 = arith.constant dense<0.000000e+00> : vector<128x128xf32>
    %17 = tpu.matmul %14, %16, %cst_16 {dimension_numbers = #tpu.dot_dimension_numbers<[1], [0], [0], [1], [0, 0, 1, 1], [], []>} : vector<128x128xbf16>, vector<128x128xbf16>, vector<128x128xf32> -> vector<128x128xf32>
    %c0_17 = arith.constant 0 : index
    %c0_18 = arith.constant 0 : index
    %c0_19 = arith.constant 0 : index
    %18 = vector.load %arg6[%c0_17, %c0_18, %c0_19] : memref<5x1x128xf32, #tpu.memory_space<vmem>>, vector<1x1x128xf32>
    %19 = vector.shape_cast %18 : vector<1x1x128xf32> to vector<1x128xf32>
    %20 = vector.broadcast %19 : vector<1x128xf32> to vector<128x128xf32>
    %21 = arith.addf %17, %20 : vector<128x128xf32>
    %cst_20 = arith.constant 0.000000e+00 : f32
    %22 = vector.broadcast %cst_20 : f32 to vector<128x128xf32>
    %23 = arith.maximumf %21, %22 : vector<128x128xf32>
    %24 = vector.shape_cast %23 : vector<128x128xf32> to vector<8x16x128xf32>
    %cst_21 = arith.constant dense<0.000000e+00> : vector<8x128xf32>
    %25 = vector.multi_reduction <add>, %24, %cst_21 [1] : vector<8x16x128xf32> to vector<8x128xf32>
    %26 = vector.shape_cast %25 : vector<8x128xf32> to vector<8x1x128xf32>
    %27 = arith.mulf %24, %24 : vector<8x16x128xf32>
    %cst_22 = arith.constant dense<0.000000e+00> : vector<8x128xf32>
    %28 = vector.multi_reduction <add>, %27, %cst_22 [1] : vector<8x16x128xf32> to vector<8x128xf32>
    %29 = vector.shape_cast %28 : vector<8x128xf32> to vector<8x1x128xf32>
    %cst_23 = arith.constant 6.250000e-02 : f32
    %30 = vector.broadcast %cst_23 : f32 to vector<8x1x128xf32>
    %31 = arith.mulf %26, %30 : vector<8x1x128xf32>
    %cst_24 = arith.constant 6.250000e-02 : f32
    %32 = vector.broadcast %cst_24 : f32 to vector<8x1x128xf32>
    %33 = arith.mulf %29, %32 : vector<8x1x128xf32>
    %34 = arith.mulf %31, %31 : vector<8x1x128xf32>
    %35 = arith.subf %33, %34 : vector<8x1x128xf32>
    %cst_25 = arith.constant 0.000000e+00 : f32
    %36 = vector.broadcast %cst_25 : f32 to vector<8x1x128xf32>
    %37 = arith.maximumf %35, %36 : vector<8x1x128xf32>
    %c0_26 = arith.constant 0 : index
    %c0_27 = arith.constant 0 : index
    %c0_28 = arith.constant 0 : index
    %38 = vector.load %arg7[%c0_26, %c0_27, %c0_28] : memref<5x1x128xf32, #tpu.memory_space<vmem>>, vector<1x1x128xf32>
    %39 = vector.shape_cast %38 : vector<1x1x128xf32> to vector<1x128xf32>
    %cst_29 = arith.constant 9.99999974E-6 : f32
    %40 = vector.broadcast %cst_29 : f32 to vector<8x1x128xf32>
    %41 = arith.addf %37, %40 : vector<8x1x128xf32>
    %42 = math.rsqrt %41 : vector<8x1x128xf32>
    %43 = vector.shape_cast %39 : vector<1x128xf32> to vector<1x1x128xf32>
    %44 = vector.broadcast %43 : vector<1x1x128xf32> to vector<8x1x128xf32>
    %45 = arith.mulf %44, %42 : vector<8x1x128xf32>
    %c0_30 = arith.constant 0 : index
    %c0_31 = arith.constant 0 : index
    %c0_32 = arith.constant 0 : index
    %46 = vector.load %arg8[%c0_30, %c0_31, %c0_32] : memref<5x1x128xf32, #tpu.memory_space<vmem>>, vector<1x1x128xf32>
    %47 = vector.shape_cast %46 : vector<1x1x128xf32> to vector<1x128xf32>
    %48 = arith.mulf %31, %45 : vector<8x1x128xf32>
    %49 = vector.shape_cast %47 : vector<1x128xf32> to vector<1x1x128xf32>
    %50 = vector.broadcast %49 : vector<1x1x128xf32> to vector<8x1x128xf32>
    %51 = arith.subf %50, %48 : vector<8x1x128xf32>
    %52 = vector.broadcast %45 : vector<8x1x128xf32> to vector<8x16x128xf32>
    %53 = arith.mulf %24, %52 : vector<8x16x128xf32>
    %54 = vector.broadcast %51 : vector<8x1x128xf32> to vector<8x16x128xf32>
    %55 = arith.addf %53, %54 : vector<8x16x128xf32>
    %56 = arith.truncf %55 : vector<8x16x128xf32> to vector<8x16x128xbf16>
    "tpu.trace_start"() <{level = 10 : i32, message = "bij,bjd->bid"}> : () -> ()
    %cst_33 = arith.constant dense<0.000000e+00> : vector<8x16x128xf32>
    %57 = tpu.matmul %0, %56, %cst_33 {dimension_numbers = #tpu.dot_dimension_numbers<[2], [1], [1], [2], [0, 0, 0, 1, 1, 2], [0], [0]>} : vector<8x16x16xbf16>, vector<8x16x128xbf16>, vector<8x16x128xf32> -> vector<8x16x128xf32>
    "tpu.trace_stop"() : () -> ()
    %58 = vector.shape_cast %57 : vector<8x16x128xf32> to vector<128x128xf32>
    %59 = arith.truncf %58 : vector<128x128xf32> to vector<128x128xbf16>
    %c1 = arith.constant 1 : index
    %c0_34 = arith.constant 0 : index
    %c0_35 = arith.constant 0 : index
    %60 = vector.load %arg3[%c1, %c0_34, %c0_35] : memref<5x128x128xbf16, #tpu.memory_space<vmem>>, vector<1x128x128xbf16>
    %61 = vector.shape_cast %60 : vector<1x128x128xbf16> to vector<128x128xbf16>
    %cst_36 = arith.constant dense<0.000000e+00> : vector<128x128xf32>
    %62 = tpu.matmul %59, %61, %cst_36 {dimension_numbers = #tpu.dot_dimension_numbers<[1], [0], [0], [1], [0, 0, 1, 1], [], []>} : vector<128x128xbf16>, vector<128x128xbf16>, vector<128x128xf32> -> vector<128x128xf32>
    %c1_37 = arith.constant 1 : index
    %c0_38 = arith.constant 0 : index
    %c0_39 = arith.constant 0 : index
    %63 = vector.load %arg4[%c1_37, %c0_38, %c0_39] : memref<5x1x128xf32, #tpu.memory_space<vmem>>, vector<1x1x128xf32>
    %64 = vector.shape_cast %63 : vector<1x1x128xf32> to vector<1x128xf32>
    %65 = vector.broadcast %64 : vector<1x128xf32> to vector<128x128xf32>
    %66 = arith.addf %62, %65 : vector<128x128xf32>
    %cst_40 = arith.constant 0.000000e+00 : f32
    %67 = vector.broadcast %cst_40 : f32 to vector<128x128xf32>
    %68 = arith.maximumf %66, %67 : vector<128x128xf32>
    %69 = arith.truncf %68 : vector<128x128xf32> to vector<128x128xbf16>
    %c1_41 = arith.constant 1 : index
    %c0_42 = arith.constant 0 : index
    %c0_43 = arith.constant 0 : index
    %70 = vector.load %arg5[%c1_41, %c0_42, %c0_43] : memref<5x128x128xbf16, #tpu.memory_space<vmem>>, vector<1x128x128xbf16>
    %71 = vector.shape_cast %70 : vector<1x128x128xbf16> to vector<128x128xbf16>
    %cst_44 = arith.constant dense<0.000000e+00> : vector<128x128xf32>
    %72 = tpu.matmul %69, %71, %cst_44 {dimension_numbers = #tpu.dot_dimension_numbers<[1], [0], [0], [1], [0, 0, 1, 1], [], []>} : vector<128x128xbf16>, vector<128x128xbf16>, vector<128x128xf32> -> vector<128x128xf32>
    %c1_45 = arith.constant 1 : index
    %c0_46 = arith.constant 0 : index
    %c0_47 = arith.constant 0 : index
    %73 = vector.load %arg6[%c1_45, %c0_46, %c0_47] : memref<5x1x128xf32, #tpu.memory_space<vmem>>, vector<1x1x128xf32>
    %74 = vector.shape_cast %73 : vector<1x1x128xf32> to vector<1x128xf32>
    %75 = vector.broadcast %74 : vector<1x128xf32> to vector<128x128xf32>
    %76 = arith.addf %72, %75 : vector<128x128xf32>
    %cst_48 = arith.constant 0.000000e+00 : f32
    %77 = vector.broadcast %cst_48 : f32 to vector<128x128xf32>
    %78 = arith.maximumf %76, %77 : vector<128x128xf32>
    %79 = vector.shape_cast %78 : vector<128x128xf32> to vector<8x16x128xf32>
    %cst_49 = arith.constant dense<0.000000e+00> : vector<8x128xf32>
    %80 = vector.multi_reduction <add>, %79, %cst_49 [1] : vector<8x16x128xf32> to vector<8x128xf32>
    %81 = vector.shape_cast %80 : vector<8x128xf32> to vector<8x1x128xf32>
    %82 = arith.mulf %79, %79 : vector<8x16x128xf32>
    %cst_50 = arith.constant dense<0.000000e+00> : vector<8x128xf32>
    %83 = vector.multi_reduction <add>, %82, %cst_50 [1] : vector<8x16x128xf32> to vector<8x128xf32>
    %84 = vector.shape_cast %83 : vector<8x128xf32> to vector<8x1x128xf32>
    %cst_51 = arith.constant 6.250000e-02 : f32
    %85 = vector.broadcast %cst_51 : f32 to vector<8x1x128xf32>
    %86 = arith.mulf %81, %85 : vector<8x1x128xf32>
    %cst_52 = arith.constant 6.250000e-02 : f32
    %87 = vector.broadcast %cst_52 : f32 to vector<8x1x128xf32>
    %88 = arith.mulf %84, %87 : vector<8x1x128xf32>
    %89 = arith.mulf %86, %86 : vector<8x1x128xf32>
    %90 = arith.subf %88, %89 : vector<8x1x128xf32>
    %cst_53 = arith.constant 0.000000e+00 : f32
    %91 = vector.broadcast %cst_53 : f32 to vector<8x1x128xf32>
    %92 = arith.maximumf %90, %91 : vector<8x1x128xf32>
    %c1_54 = arith.constant 1 : index
    %c0_55 = arith.constant 0 : index
    %c0_56 = arith.constant 0 : index
    %93 = vector.load %arg7[%c1_54, %c0_55, %c0_56] : memref<5x1x128xf32, #tpu.memory_space<vmem>>, vector<1x1x128xf32>
    %94 = vector.shape_cast %93 : vector<1x1x128xf32> to vector<1x128xf32>
    %cst_57 = arith.constant 9.99999974E-6 : f32
    %95 = vector.broadcast %cst_57 : f32 to vector<8x1x128xf32>
    %96 = arith.addf %92, %95 : vector<8x1x128xf32>
    %97 = math.rsqrt %96 : vector<8x1x128xf32>
    %98 = vector.shape_cast %94 : vector<1x128xf32> to vector<1x1x128xf32>
    %99 = vector.broadcast %98 : vector<1x1x128xf32> to vector<8x1x128xf32>
    %100 = arith.mulf %99, %97 : vector<8x1x128xf32>
    %c1_58 = arith.constant 1 : index
    %c0_59 = arith.constant 0 : index
    %c0_60 = arith.constant 0 : index
    %101 = vector.load %arg8[%c1_58, %c0_59, %c0_60] : memref<5x1x128xf32, #tpu.memory_space<vmem>>, vector<1x1x128xf32>
    %102 = vector.shape_cast %101 : vector<1x1x128xf32> to vector<1x128xf32>
    %103 = arith.mulf %86, %100 : vector<8x1x128xf32>
    %104 = vector.shape_cast %102 : vector<1x128xf32> to vector<1x1x128xf32>
    %105 = vector.broadcast %104 : vector<1x1x128xf32> to vector<8x1x128xf32>
    %106 = arith.subf %105, %103 : vector<8x1x128xf32>
    %107 = vector.broadcast %100 : vector<8x1x128xf32> to vector<8x16x128xf32>
    %108 = arith.mulf %79, %107 : vector<8x16x128xf32>
    %109 = vector.broadcast %106 : vector<8x1x128xf32> to vector<8x16x128xf32>
    %110 = arith.addf %108, %109 : vector<8x16x128xf32>
    %111 = arith.truncf %110 : vector<8x16x128xf32> to vector<8x16x128xbf16>
    "tpu.trace_start"() <{level = 10 : i32, message = "bij,bjd->bid"}> : () -> ()
    %cst_61 = arith.constant dense<0.000000e+00> : vector<8x16x128xf32>
    %112 = tpu.matmul %0, %111, %cst_61 {dimension_numbers = #tpu.dot_dimension_numbers<[2], [1], [1], [2], [0, 0, 0, 1, 1, 2], [0], [0]>} : vector<8x16x16xbf16>, vector<8x16x128xbf16>, vector<8x16x128xf32> -> vector<8x16x128xf32>
    "tpu.trace_stop"() : () -> ()
    %113 = vector.shape_cast %112 : vector<8x16x128xf32> to vector<128x128xf32>
    %114 = arith.truncf %113 : vector<128x128xf32> to vector<128x128xbf16>
    %c2 = arith.constant 2 : index
    %c0_62 = arith.constant 0 : index
    %c0_63 = arith.constant 0 : index
    %115 = vector.load %arg3[%c2, %c0_62, %c0_63] : memref<5x128x128xbf16, #tpu.memory_space<vmem>>, vector<1x128x128xbf16>
    %116 = vector.shape_cast %115 : vector<1x128x128xbf16> to vector<128x128xbf16>
    %cst_64 = arith.constant dense<0.000000e+00> : vector<128x128xf32>
    %117 = tpu.matmul %114, %116, %cst_64 {dimension_numbers = #tpu.dot_dimension_numbers<[1], [0], [0], [1], [0, 0, 1, 1], [], []>} : vector<128x128xbf16>, vector<128x128xbf16>, vector<128x128xf32> -> vector<128x128xf32>
    %c2_65 = arith.constant 2 : index
    %c0_66 = arith.constant 0 : index
    %c0_67 = arith.constant 0 : index
    %118 = vector.load %arg4[%c2_65, %c0_66, %c0_67] : memref<5x1x128xf32, #tpu.memory_space<vmem>>, vector<1x1x128xf32>
    %119 = vector.shape_cast %118 : vector<1x1x128xf32> to vector<1x128xf32>
    %120 = vector.broadcast %119 : vector<1x128xf32> to vector<128x128xf32>
    %121 = arith.addf %117, %120 : vector<128x128xf32>
    %cst_68 = arith.constant 0.000000e+00 : f32
    %122 = vector.broadcast %cst_68 : f32 to vector<128x128xf32>
    %123 = arith.maximumf %121, %122 : vector<128x128xf32>
    %124 = arith.truncf %123 : vector<128x128xf32> to vector<128x128xbf16>
    %c2_69 = arith.constant 2 : index
    %c0_70 = arith.constant 0 : index
    %c0_71 = arith.constant 0 : index
    %125 = vector.load %arg5[%c2_69, %c0_70, %c0_71] : memref<5x128x128xbf16, #tpu.memory_space<vmem>>, vector<1x128x128xbf16>
    %126 = vector.shape_cast %125 : vector<1x128x128xbf16> to vector<128x128xbf16>
    %cst_72 = arith.constant dense<0.000000e+00> : vector<128x128xf32>
    %127 = tpu.matmul %124, %126, %cst_72 {dimension_numbers = #tpu.dot_dimension_numbers<[1], [0], [0], [1], [0, 0, 1, 1], [], []>} : vector<128x128xbf16>, vector<128x128xbf16>, vector<128x128xf32> -> vector<128x128xf32>
    %c2_73 = arith.constant 2 : index
    %c0_74 = arith.constant 0 : index
    %c0_75 = arith.constant 0 : index
    %128 = vector.load %arg6[%c2_73, %c0_74, %c0_75] : memref<5x1x128xf32, #tpu.memory_space<vmem>>, vector<1x1x128xf32>
    %129 = vector.shape_cast %128 : vector<1x1x128xf32> to vector<1x128xf32>
    %130 = vector.broadcast %129 : vector<1x128xf32> to vector<128x128xf32>
    %131 = arith.addf %127, %130 : vector<128x128xf32>
    %cst_76 = arith.constant 0.000000e+00 : f32
    %132 = vector.broadcast %cst_76 : f32 to vector<128x128xf32>
    %133 = arith.maximumf %131, %132 : vector<128x128xf32>
    %134 = vector.shape_cast %133 : vector<128x128xf32> to vector<8x16x128xf32>
    %cst_77 = arith.constant dense<0.000000e+00> : vector<8x128xf32>
    %135 = vector.multi_reduction <add>, %134, %cst_77 [1] : vector<8x16x128xf32> to vector<8x128xf32>
    %136 = vector.shape_cast %135 : vector<8x128xf32> to vector<8x1x128xf32>
    %137 = arith.mulf %134, %134 : vector<8x16x128xf32>
    %cst_78 = arith.constant dense<0.000000e+00> : vector<8x128xf32>
    %138 = vector.multi_reduction <add>, %137, %cst_78 [1] : vector<8x16x128xf32> to vector<8x128xf32>
    %139 = vector.shape_cast %138 : vector<8x128xf32> to vector<8x1x128xf32>
    %cst_79 = arith.constant 6.250000e-02 : f32
    %140 = vector.broadcast %cst_79 : f32 to vector<8x1x128xf32>
    %141 = arith.mulf %136, %140 : vector<8x1x128xf32>
    %cst_80 = arith.constant 6.250000e-02 : f32
    %142 = vector.broadcast %cst_80 : f32 to vector<8x1x128xf32>
    %143 = arith.mulf %139, %142 : vector<8x1x128xf32>
    %144 = arith.mulf %141, %141 : vector<8x1x128xf32>
    %145 = arith.subf %143, %144 : vector<8x1x128xf32>
    %cst_81 = arith.constant 0.000000e+00 : f32
    %146 = vector.broadcast %cst_81 : f32 to vector<8x1x128xf32>
    %147 = arith.maximumf %145, %146 : vector<8x1x128xf32>
    %c2_82 = arith.constant 2 : index
    %c0_83 = arith.constant 0 : index
    %c0_84 = arith.constant 0 : index
    %148 = vector.load %arg7[%c2_82, %c0_83, %c0_84] : memref<5x1x128xf32, #tpu.memory_space<vmem>>, vector<1x1x128xf32>
    %149 = vector.shape_cast %148 : vector<1x1x128xf32> to vector<1x128xf32>
    %cst_85 = arith.constant 9.99999974E-6 : f32
    %150 = vector.broadcast %cst_85 : f32 to vector<8x1x128xf32>
    %151 = arith.addf %147, %150 : vector<8x1x128xf32>
    %152 = math.rsqrt %151 : vector<8x1x128xf32>
    %153 = vector.shape_cast %149 : vector<1x128xf32> to vector<1x1x128xf32>
    %154 = vector.broadcast %153 : vector<1x1x128xf32> to vector<8x1x128xf32>
    %155 = arith.mulf %154, %152 : vector<8x1x128xf32>
    %c2_86 = arith.constant 2 : index
    %c0_87 = arith.constant 0 : index
    %c0_88 = arith.constant 0 : index
    %156 = vector.load %arg8[%c2_86, %c0_87, %c0_88] : memref<5x1x128xf32, #tpu.memory_space<vmem>>, vector<1x1x128xf32>
    %157 = vector.shape_cast %156 : vector<1x1x128xf32> to vector<1x128xf32>
    %158 = arith.mulf %141, %155 : vector<8x1x128xf32>
    %159 = vector.shape_cast %157 : vector<1x128xf32> to vector<1x1x128xf32>
    %160 = vector.broadcast %159 : vector<1x1x128xf32> to vector<8x1x128xf32>
    %161 = arith.subf %160, %158 : vector<8x1x128xf32>
    %162 = vector.broadcast %155 : vector<8x1x128xf32> to vector<8x16x128xf32>
    %163 = arith.mulf %134, %162 : vector<8x16x128xf32>
    %164 = vector.broadcast %161 : vector<8x1x128xf32> to vector<8x16x128xf32>
    %165 = arith.addf %163, %164 : vector<8x16x128xf32>
    %166 = arith.truncf %165 : vector<8x16x128xf32> to vector<8x16x128xbf16>
    "tpu.trace_start"() <{level = 10 : i32, message = "bij,bjd->bid"}> : () -> ()
    %cst_89 = arith.constant dense<0.000000e+00> : vector<8x16x128xf32>
    %167 = tpu.matmul %0, %166, %cst_89 {dimension_numbers = #tpu.dot_dimension_numbers<[2], [1], [1], [2], [0, 0, 0, 1, 1, 2], [0], [0]>} : vector<8x16x16xbf16>, vector<8x16x128xbf16>, vector<8x16x128xf32> -> vector<8x16x128xf32>
    "tpu.trace_stop"() : () -> ()
    %168 = vector.shape_cast %167 : vector<8x16x128xf32> to vector<128x128xf32>
    %169 = arith.truncf %168 : vector<128x128xf32> to vector<128x128xbf16>
    %c3 = arith.constant 3 : index
    %c0_90 = arith.constant 0 : index
    %c0_91 = arith.constant 0 : index
    %170 = vector.load %arg3[%c3, %c0_90, %c0_91] : memref<5x128x128xbf16, #tpu.memory_space<vmem>>, vector<1x128x128xbf16>
    %171 = vector.shape_cast %170 : vector<1x128x128xbf16> to vector<128x128xbf16>
    %cst_92 = arith.constant dense<0.000000e+00> : vector<128x128xf32>
    %172 = tpu.matmul %169, %171, %cst_92 {dimension_numbers = #tpu.dot_dimension_numbers<[1], [0], [0], [1], [0, 0, 1, 1], [], []>} : vector<128x128xbf16>, vector<128x128xbf16>, vector<128x128xf32> -> vector<128x128xf32>
    %c3_93 = arith.constant 3 : index
    %c0_94 = arith.constant 0 : index
    %c0_95 = arith.constant 0 : index
    %173 = vector.load %arg4[%c3_93, %c0_94, %c0_95] : memref<5x1x128xf32, #tpu.memory_space<vmem>>, vector<1x1x128xf32>
    %174 = vector.shape_cast %173 : vector<1x1x128xf32> to vector<1x128xf32>
    %175 = vector.broadcast %174 : vector<1x128xf32> to vector<128x128xf32>
    %176 = arith.addf %172, %175 : vector<128x128xf32>
    %cst_96 = arith.constant 0.000000e+00 : f32
    %177 = vector.broadcast %cst_96 : f32 to vector<128x128xf32>
    %178 = arith.maximumf %176, %177 : vector<128x128xf32>
    %179 = arith.truncf %178 : vector<128x128xf32> to vector<128x128xbf16>
    %c3_97 = arith.constant 3 : index
    %c0_98 = arith.constant 0 : index
    %c0_99 = arith.constant 0 : index
    %180 = vector.load %arg5[%c3_97, %c0_98, %c0_99] : memref<5x128x128xbf16, #tpu.memory_space<vmem>>, vector<1x128x128xbf16>
    %181 = vector.shape_cast %180 : vector<1x128x128xbf16> to vector<128x128xbf16>
    %cst_100 = arith.constant dense<0.000000e+00> : vector<128x128xf32>
    %182 = tpu.matmul %179, %181, %cst_100 {dimension_numbers = #tpu.dot_dimension_numbers<[1], [0], [0], [1], [0, 0, 1, 1], [], []>} : vector<128x128xbf16>, vector<128x128xbf16>, vector<128x128xf32> -> vector<128x128xf32>
    %c3_101 = arith.constant 3 : index
    %c0_102 = arith.constant 0 : index
    %c0_103 = arith.constant 0 : index
    %183 = vector.load %arg6[%c3_101, %c0_102, %c0_103] : memref<5x1x128xf32, #tpu.memory_space<vmem>>, vector<1x1x128xf32>
    %184 = vector.shape_cast %183 : vector<1x1x128xf32> to vector<1x128xf32>
    %185 = vector.broadcast %184 : vector<1x128xf32> to vector<128x128xf32>
    %186 = arith.addf %182, %185 : vector<128x128xf32>
    %cst_104 = arith.constant 0.000000e+00 : f32
    %187 = vector.broadcast %cst_104 : f32 to vector<128x128xf32>
    %188 = arith.maximumf %186, %187 : vector<128x128xf32>
    %189 = vector.shape_cast %188 : vector<128x128xf32> to vector<8x16x128xf32>
    %cst_105 = arith.constant dense<0.000000e+00> : vector<8x128xf32>
    %190 = vector.multi_reduction <add>, %189, %cst_105 [1] : vector<8x16x128xf32> to vector<8x128xf32>
    %191 = vector.shape_cast %190 : vector<8x128xf32> to vector<8x1x128xf32>
    %192 = arith.mulf %189, %189 : vector<8x16x128xf32>
    %cst_106 = arith.constant dense<0.000000e+00> : vector<8x128xf32>
    %193 = vector.multi_reduction <add>, %192, %cst_106 [1] : vector<8x16x128xf32> to vector<8x128xf32>
    %194 = vector.shape_cast %193 : vector<8x128xf32> to vector<8x1x128xf32>
    %cst_107 = arith.constant 6.250000e-02 : f32
    %195 = vector.broadcast %cst_107 : f32 to vector<8x1x128xf32>
    %196 = arith.mulf %191, %195 : vector<8x1x128xf32>
    %cst_108 = arith.constant 6.250000e-02 : f32
    %197 = vector.broadcast %cst_108 : f32 to vector<8x1x128xf32>
    %198 = arith.mulf %194, %197 : vector<8x1x128xf32>
    %199 = arith.mulf %196, %196 : vector<8x1x128xf32>
    %200 = arith.subf %198, %199 : vector<8x1x128xf32>
    %cst_109 = arith.constant 0.000000e+00 : f32
    %201 = vector.broadcast %cst_109 : f32 to vector<8x1x128xf32>
    %202 = arith.maximumf %200, %201 : vector<8x1x128xf32>
    %c3_110 = arith.constant 3 : index
    %c0_111 = arith.constant 0 : index
    %c0_112 = arith.constant 0 : index
    %203 = vector.load %arg7[%c3_110, %c0_111, %c0_112] : memref<5x1x128xf32, #tpu.memory_space<vmem>>, vector<1x1x128xf32>
    %204 = vector.shape_cast %203 : vector<1x1x128xf32> to vector<1x128xf32>
    %cst_113 = arith.constant 9.99999974E-6 : f32
    %205 = vector.broadcast %cst_113 : f32 to vector<8x1x128xf32>
    %206 = arith.addf %202, %205 : vector<8x1x128xf32>
    %207 = math.rsqrt %206 : vector<8x1x128xf32>
    %208 = vector.shape_cast %204 : vector<1x128xf32> to vector<1x1x128xf32>
    %209 = vector.broadcast %208 : vector<1x1x128xf32> to vector<8x1x128xf32>
    %210 = arith.mulf %209, %207 : vector<8x1x128xf32>
    %c3_114 = arith.constant 3 : index
    %c0_115 = arith.constant 0 : index
    %c0_116 = arith.constant 0 : index
    %211 = vector.load %arg8[%c3_114, %c0_115, %c0_116] : memref<5x1x128xf32, #tpu.memory_space<vmem>>, vector<1x1x128xf32>
    %212 = vector.shape_cast %211 : vector<1x1x128xf32> to vector<1x128xf32>
    %213 = arith.mulf %196, %210 : vector<8x1x128xf32>
    %214 = vector.shape_cast %212 : vector<1x128xf32> to vector<1x1x128xf32>
    %215 = vector.broadcast %214 : vector<1x1x128xf32> to vector<8x1x128xf32>
    %216 = arith.subf %215, %213 : vector<8x1x128xf32>
    %217 = vector.broadcast %210 : vector<8x1x128xf32> to vector<8x16x128xf32>
    %218 = arith.mulf %189, %217 : vector<8x16x128xf32>
    %219 = vector.broadcast %216 : vector<8x1x128xf32> to vector<8x16x128xf32>
    %220 = arith.addf %218, %219 : vector<8x16x128xf32>
    %221 = arith.truncf %220 : vector<8x16x128xf32> to vector<8x16x128xbf16>
    "tpu.trace_start"() <{level = 10 : i32, message = "bij,bjd->bid"}> : () -> ()
    %cst_117 = arith.constant dense<0.000000e+00> : vector<8x16x128xf32>
    %222 = tpu.matmul %0, %221, %cst_117 {dimension_numbers = #tpu.dot_dimension_numbers<[2], [1], [1], [2], [0, 0, 0, 1, 1, 2], [0], [0]>} : vector<8x16x16xbf16>, vector<8x16x128xbf16>, vector<8x16x128xf32> -> vector<8x16x128xf32>
    "tpu.trace_stop"() : () -> ()
    %223 = vector.shape_cast %222 : vector<8x16x128xf32> to vector<128x128xf32>
    %224 = arith.truncf %223 : vector<128x128xf32> to vector<128x128xbf16>
    %c4 = arith.constant 4 : index
    %c0_118 = arith.constant 0 : index
    %c0_119 = arith.constant 0 : index
    %225 = vector.load %arg3[%c4, %c0_118, %c0_119] : memref<5x128x128xbf16, #tpu.memory_space<vmem>>, vector<1x128x128xbf16>
    %226 = vector.shape_cast %225 : vector<1x128x128xbf16> to vector<128x128xbf16>
    %cst_120 = arith.constant dense<0.000000e+00> : vector<128x128xf32>
    %227 = tpu.matmul %224, %226, %cst_120 {dimension_numbers = #tpu.dot_dimension_numbers<[1], [0], [0], [1], [0, 0, 1, 1], [], []>} : vector<128x128xbf16>, vector<128x128xbf16>, vector<128x128xf32> -> vector<128x128xf32>
    %c4_121 = arith.constant 4 : index
    %c0_122 = arith.constant 0 : index
    %c0_123 = arith.constant 0 : index
    %228 = vector.load %arg4[%c4_121, %c0_122, %c0_123] : memref<5x1x128xf32, #tpu.memory_space<vmem>>, vector<1x1x128xf32>
    %229 = vector.shape_cast %228 : vector<1x1x128xf32> to vector<1x128xf32>
    %230 = vector.broadcast %229 : vector<1x128xf32> to vector<128x128xf32>
    %231 = arith.addf %227, %230 : vector<128x128xf32>
    %cst_124 = arith.constant 0.000000e+00 : f32
    %232 = vector.broadcast %cst_124 : f32 to vector<128x128xf32>
    %233 = arith.maximumf %231, %232 : vector<128x128xf32>
    %234 = arith.truncf %233 : vector<128x128xf32> to vector<128x128xbf16>
    %c4_125 = arith.constant 4 : index
    %c0_126 = arith.constant 0 : index
    %c0_127 = arith.constant 0 : index
    %235 = vector.load %arg5[%c4_125, %c0_126, %c0_127] : memref<5x128x128xbf16, #tpu.memory_space<vmem>>, vector<1x128x128xbf16>
    %236 = vector.shape_cast %235 : vector<1x128x128xbf16> to vector<128x128xbf16>
    %cst_128 = arith.constant dense<0.000000e+00> : vector<128x128xf32>
    %237 = tpu.matmul %234, %236, %cst_128 {dimension_numbers = #tpu.dot_dimension_numbers<[1], [0], [0], [1], [0, 0, 1, 1], [], []>} : vector<128x128xbf16>, vector<128x128xbf16>, vector<128x128xf32> -> vector<128x128xf32>
    %c4_129 = arith.constant 4 : index
    %c0_130 = arith.constant 0 : index
    %c0_131 = arith.constant 0 : index
    %238 = vector.load %arg6[%c4_129, %c0_130, %c0_131] : memref<5x1x128xf32, #tpu.memory_space<vmem>>, vector<1x1x128xf32>
    %239 = vector.shape_cast %238 : vector<1x1x128xf32> to vector<1x128xf32>
    %240 = vector.broadcast %239 : vector<1x128xf32> to vector<128x128xf32>
    %241 = arith.addf %237, %240 : vector<128x128xf32>
    %cst_132 = arith.constant 0.000000e+00 : f32
    %242 = vector.broadcast %cst_132 : f32 to vector<128x128xf32>
    %243 = arith.maximumf %241, %242 : vector<128x128xf32>
    %244 = vector.shape_cast %243 : vector<128x128xf32> to vector<8x16x128xf32>
    %cst_133 = arith.constant dense<0.000000e+00> : vector<8x128xf32>
    %245 = vector.multi_reduction <add>, %244, %cst_133 [1] : vector<8x16x128xf32> to vector<8x128xf32>
    %246 = vector.shape_cast %245 : vector<8x128xf32> to vector<8x1x128xf32>
    %247 = arith.mulf %244, %244 : vector<8x16x128xf32>
    %cst_134 = arith.constant dense<0.000000e+00> : vector<8x128xf32>
    %248 = vector.multi_reduction <add>, %247, %cst_134 [1] : vector<8x16x128xf32> to vector<8x128xf32>
    %249 = vector.shape_cast %248 : vector<8x128xf32> to vector<8x1x128xf32>
    %cst_135 = arith.constant 6.250000e-02 : f32
    %250 = vector.broadcast %cst_135 : f32 to vector<8x1x128xf32>
    %251 = arith.mulf %246, %250 : vector<8x1x128xf32>
    %cst_136 = arith.constant 6.250000e-02 : f32
    %252 = vector.broadcast %cst_136 : f32 to vector<8x1x128xf32>
    %253 = arith.mulf %249, %252 : vector<8x1x128xf32>
    %254 = arith.mulf %251, %251 : vector<8x1x128xf32>
    %255 = arith.subf %253, %254 : vector<8x1x128xf32>
    %cst_137 = arith.constant 0.000000e+00 : f32
    %256 = vector.broadcast %cst_137 : f32 to vector<8x1x128xf32>
    %257 = arith.maximumf %255, %256 : vector<8x1x128xf32>
    %c4_138 = arith.constant 4 : index
    %c0_139 = arith.constant 0 : index
    %c0_140 = arith.constant 0 : index
    %258 = vector.load %arg7[%c4_138, %c0_139, %c0_140] : memref<5x1x128xf32, #tpu.memory_space<vmem>>, vector<1x1x128xf32>
    %259 = vector.shape_cast %258 : vector<1x1x128xf32> to vector<1x128xf32>
    %cst_141 = arith.constant 9.99999974E-6 : f32
    %260 = vector.broadcast %cst_141 : f32 to vector<8x1x128xf32>
    %261 = arith.addf %257, %260 : vector<8x1x128xf32>
    %262 = math.rsqrt %261 : vector<8x1x128xf32>
    %263 = vector.shape_cast %259 : vector<1x128xf32> to vector<1x1x128xf32>
    %264 = vector.broadcast %263 : vector<1x1x128xf32> to vector<8x1x128xf32>
    %265 = arith.mulf %264, %262 : vector<8x1x128xf32>
    %c4_142 = arith.constant 4 : index
    %c0_143 = arith.constant 0 : index
    %c0_144 = arith.constant 0 : index
    %266 = vector.load %arg8[%c4_142, %c0_143, %c0_144] : memref<5x1x128xf32, #tpu.memory_space<vmem>>, vector<1x1x128xf32>
    %267 = vector.shape_cast %266 : vector<1x1x128xf32> to vector<1x128xf32>
    %268 = arith.mulf %251, %265 : vector<8x1x128xf32>
    %269 = vector.shape_cast %267 : vector<1x128xf32> to vector<1x1x128xf32>
    %270 = vector.broadcast %269 : vector<1x1x128xf32> to vector<8x1x128xf32>
    %271 = arith.subf %270, %268 : vector<8x1x128xf32>
    %272 = vector.broadcast %265 : vector<8x1x128xf32> to vector<8x16x128xf32>
    %273 = arith.mulf %244, %272 : vector<8x16x128xf32>
    %274 = vector.broadcast %271 : vector<8x1x128xf32> to vector<8x16x128xf32>
    %275 = arith.addf %273, %274 : vector<8x16x128xf32>
    %276 = arith.truncf %275 : vector<8x16x128xf32> to vector<8x16x128xbf16>
    %277 = arith.extf %276 : vector<8x16x128xbf16> to vector<8x16x128xf32>
    %cst_145 = arith.constant dense<0.000000e+00> : vector<8x128xf32>
    %278 = vector.multi_reduction <add>, %277, %cst_145 [1] : vector<8x16x128xf32> to vector<8x128xf32>
    %279 = arith.truncf %278 : vector<8x128xf32> to vector<8x128xbf16>
    %c0_146 = arith.constant 0 : index
    %c0_147 = arith.constant 0 : index
    %280 = vector.load %arg9[%c0_146, %c0_147] : memref<128x128xbf16, #tpu.memory_space<vmem>>, vector<128x128xbf16>
    %cst_148 = arith.constant dense<0.000000e+00> : vector<8x128xf32>
    %281 = tpu.matmul %279, %280, %cst_148 {dimension_numbers = #tpu.dot_dimension_numbers<[1], [0], [0], [1], [0, 0, 1, 1], [], []>} : vector<8x128xbf16>, vector<128x128xbf16>, vector<8x128xf32> -> vector<8x128xf32>
    %c0_149 = arith.constant 0 : index
    %c0_150 = arith.constant 0 : index
    %282 = vector.load %arg10[%c0_149, %c0_150] : memref<1x128xf32, #tpu.memory_space<vmem>>, vector<1x128xf32>
    %283 = vector.broadcast %282 : vector<1x128xf32> to vector<8x128xf32>
    %284 = arith.addf %281, %283 : vector<8x128xf32>
    %cst_151 = arith.constant 0.000000e+00 : f32
    %285 = vector.broadcast %cst_151 : f32 to vector<8x128xf32>
    %286 = arith.maximumf %284, %285 : vector<8x128xf32>
    %287 = arith.truncf %286 : vector<8x128xf32> to vector<8x128xbf16>
    %c0_152 = arith.constant 0 : index
    %c0_153 = arith.constant 0 : index
    %288 = vector.load %arg11[%c0_152, %c0_153] : memref<128x128xbf16, #tpu.memory_space<vmem>>, vector<128x128xbf16>
    %cst_154 = arith.constant dense<0.000000e+00> : vector<8x128xf32>
    %289 = tpu.matmul %287, %288, %cst_154 {dimension_numbers = #tpu.dot_dimension_numbers<[1], [0], [0], [1], [0, 0, 1, 1], [], []>} : vector<8x128xbf16>, vector<128x128xbf16>, vector<8x128xf32> -> vector<8x128xf32>
    %c0_155 = arith.constant 0 : index
    %c0_156 = arith.constant 0 : index
    %290 = vector.load %arg12[%c0_155, %c0_156] : memref<1x128xf32, #tpu.memory_space<vmem>>, vector<1x128xf32>
    %291 = vector.broadcast %290 : vector<1x128xf32> to vector<8x128xf32>
    %292 = arith.addf %289, %291 : vector<8x128xf32>
    %293 = tpu.iota {dimensions = array<i32: 1>} : vector<8x128xi32>
    %c3_i32 = arith.constant 3 : i32
    %294 = vector.broadcast %c3_i32 : i32 to vector<8x128xi32>
    %295 = arith.cmpi slt, %293, %294 : vector<8x128xi32>
    %cst_157 = arith.constant -1.000000e+30 : f32
    %296 = vector.broadcast %cst_157 : f32 to vector<8x128xf32>
    %297 = arith.select %295, %292, %296 : vector<8x128xi1>, vector<8x128xf32>
    %cst_158 = arith.constant dense<0xFF800000> : vector<8xf32>
    %298 = vector.multi_reduction <maximumf>, %297, %cst_158 [1] : vector<8x128xf32> to vector<8xf32>
    %299 = vector.shape_cast %298 : vector<8xf32> to vector<8x1xf32>
    %300 = vector.broadcast %299 : vector<8x1xf32> to vector<8x128xf32>
    %301 = arith.subf %297, %300 : vector<8x128xf32>
    %302 = math.exp %301 : vector<8x128xf32>
    %cst_159 = arith.constant 0.000000e+00 : f32
    %303 = vector.broadcast %cst_159 : f32 to vector<8x128xf32>
    %304 = arith.select %295, %302, %303 : vector<8x128xi1>, vector<8x128xf32>
    %cst_160 = arith.constant dense<0.000000e+00> : vector<8xf32>
    %305 = vector.multi_reduction <add>, %304, %cst_160 [1] : vector<8x128xf32> to vector<8xf32>
    %306 = vector.shape_cast %305 : vector<8xf32> to vector<8x1xf32>
    %307 = math.log %306 : vector<8x1xf32>
    %308 = vector.broadcast %307 : vector<8x1xf32> to vector<8x128xf32>
    %309 = arith.subf %301, %308 : vector<8x128xf32>
    %cst_161 = arith.constant 0.000000e+00 : f32
    %310 = vector.broadcast %cst_161 : f32 to vector<8x128xf32>
    %311 = arith.select %295, %309, %310 : vector<8x128xi1>, vector<8x128xf32>
    %c0_162 = arith.constant 0 : index
    %c0_163 = arith.constant 0 : index
    %312 = vector.load %arg13[%c0_162, %c0_163] : memref<8x128xf32, #tpu.memory_space<vmem>>, vector<8x128xf32>
    tpu.vector_store %arg13[%c0_162, %c0_163], %311 {strides = array<i32>} : memref<8x128xf32, #tpu.memory_space<vmem>>, vector<8x128xf32>,
    return
  }
  func.func @transform_0(%arg0: i32) -> (i32, i32, i32) {
    %c0_i32 = arith.constant 0 : i32
    %c0_i32_0 = arith.constant 0 : i32
    %c0_i32_1 = arith.constant 0 : i32
    return %arg0, %c0_i32, %c0_i32_0 : i32, i32, i32
  }
  func.func @transform_1(%arg0: i32) -> (i32, i32, i32) {
    %c0_i32 = arith.constant 0 : i32
    %c0_i32_0 = arith.constant 0 : i32
    %c0_i32_1 = arith.constant 0 : i32
    return %arg0, %c0_i32, %c0_i32_0 : i32, i32, i32
  }
  func.func @transform_2(%arg0: i32) -> (i32, i32, i32) {
    %c0_i32 = arith.constant 0 : i32
    %c0_i32_0 = arith.constant 0 : i32
    %c0_i32_1 = arith.constant 0 : i32
    %c0_i32_2 = arith.constant 0 : i32
    return %c0_i32, %c0_i32_0, %c0_i32_1 : i32, i32, i32
  }
  func.func @transform_3(%arg0: i32) -> (i32, i32, i32) {
    %c0_i32 = arith.constant 0 : i32
    %c0_i32_0 = arith.constant 0 : i32
    %c0_i32_1 = arith.constant 0 : i32
    %c0_i32_2 = arith.constant 0 : i32
    return %c0_i32, %c0_i32_0, %c0_i32_1 : i32, i32, i32
  }
  func.func @transform_4(%arg0: i32) -> (i32, i32, i32) {
    %c0_i32 = arith.constant 0 : i32
    %c0_i32_0 = arith.constant 0 : i32
    %c0_i32_1 = arith.constant 0 : i32
    %c0_i32_2 = arith.constant 0 : i32
    return %c0_i32, %c0_i32_0, %c0_i32_1 : i32, i32, i32
  }
  func.func @transform_5(%arg0: i32) -> (i32, i32, i32) {
    %c0_i32 = arith.constant 0 : i32
    %c0_i32_0 = arith.constant 0 : i32
    %c0_i32_1 = arith.constant 0 : i32
    %c0_i32_2 = arith.constant 0 : i32
    return %c0_i32, %c0_i32_0, %c0_i32_1 : i32, i32, i32
  }
  func.func @transform_6(%arg0: i32) -> (i32, i32, i32) {
    %c0_i32 = arith.constant 0 : i32
    %c0_i32_0 = arith.constant 0 : i32
    %c0_i32_1 = arith.constant 0 : i32
    %c0_i32_2 = arith.constant 0 : i32
    return %c0_i32, %c0_i32_0, %c0_i32_1 : i32, i32, i32
  }
  func.func @transform_7(%arg0: i32) -> (i32, i32, i32) {
    %c0_i32 = arith.constant 0 : i32
    %c0_i32_0 = arith.constant 0 : i32
    %c0_i32_1 = arith.constant 0 : i32
    %c0_i32_2 = arith.constant 0 : i32
    return %c0_i32, %c0_i32_0, %c0_i32_1 : i32, i32, i32
  }
  func.func @transform_8(%arg0: i32) -> (i32, i32) {
    %c0_i32 = arith.constant 0 : i32
    %c0_i32_0 = arith.constant 0 : i32
    %c0_i32_1 = arith.constant 0 : i32
    return %c0_i32, %c0_i32_0 : i32, i32
  }
  func.func @transform_9(%arg0: i32) -> (i32, i32) {
    %c0_i32 = arith.constant 0 : i32
    %c0_i32_0 = arith.constant 0 : i32
    %c0_i32_1 = arith.constant 0 : i32
    return %c0_i32, %c0_i32_0 : i32, i32
  }
  func.func @transform_10(%arg0: i32) -> (i32, i32) {
    %c0_i32 = arith.constant 0 : i32
    %c0_i32_0 = arith.constant 0 : i32
    %c0_i32_1 = arith.constant 0 : i32
    return %c0_i32, %c0_i32_0 : i32, i32
  }
  func.func @transform_11(%arg0: i32) -> (i32, i32) {
    %c0_i32 = arith.constant 0 : i32
    %c0_i32_0 = arith.constant 0 : i32
    %c0_i32_1 = arith.constant 0 : i32
    return %c0_i32, %c0_i32_0 : i32, i32
  }
  func.func @transform_12(%arg0: i32) -> (i32, i32) {
    %c0_i32 = arith.constant 0 : i32
    %c0_i32_0 = arith.constant 0 : i32
    return %arg0, %c0_i32 : i32, i32
  }
}

</mosaic_0001>

<llo_original>
// kernel: tpu_custom_call.1
$region0: #{tpu_custom_call.1}
  #allocation0 [shape = 'u32[]', space=smem, size = 0x4, offset = 0x4, fixed_abs, tag = 'smem constant byte address 0x4 - core index']
  #allocation1 [shape = 'u32[72,128]{1,0:T(1,128)}', space=vmem, size = 0x9000, scoped, tag = 'internal scratch']
  %s0 = inlined_call_operand.hbm [shape: bf16[16,16,16], index: 0, kind: input, shape index: {}]
  %s1 = inlined_call_operand.hbm [shape: bf16[16,16,128], index: 1, kind: input, shape index: {}]
  %s2 = inlined_call_operand.hbm [shape: bf16[5,128,128], index: 2, kind: input, shape index: {}]
  %s3 = inlined_call_operand.hbm [shape: f32[5,1,128], index: 3, kind: input, shape index: {}]
  %s4 = inlined_call_operand.hbm [shape: bf16[5,128,128], index: 4, kind: input, shape index: {}]
  %s5 = inlined_call_operand.hbm [shape: f32[5,1,128], index: 5, kind: input, shape index: {}]
  %s6 = inlined_call_operand.vmem [shape: f32[5,1,128], index: 6, kind: input, shape index: {}]
  %s7 = inlined_call_operand.hbm [shape: f32[5,1,128], index: 7, kind: input, shape index: {}]
  %s8 = inlined_call_operand.hbm [shape: bf16[128,128], index: 8, kind: input, shape index: {}]
  %s9 = inlined_call_operand.vmem [shape: f32[1,128], index: 9, kind: input, shape index: {}]
  %s10 = inlined_call_operand.hbm [shape: bf16[128,128], index: 10, kind: input, shape index: {}]
  %s11 = inlined_call_operand.vmem [shape: f32[1,128], index: 11, kind: input, shape index: {}]
  %s12 = inlined_call_operand.hbm [shape: f32[16,128], index: 12, kind: output, shape index: {}]
  %s13 = sld [smem:[#allocation0]]
  $region117: #{tpu_custom_call.1} parent=0
    _
  %s15 = ssub.s32 1, %s13
  %s16 = scalar_select 0, %s15, %s13
  $region1: #{tpu_custom_call.1} parent=0
    #allocation2 [shape = 'u8[65536]{0}', space=vmem, size = 0x10000, scoped, tag = 'input window, operand 0']
    #allocation3 [shape = 's32[2]{0}', space=sflag, size = 0x8, scoped, tag = 'scoped memory for tpu_custom_call.1']
    #allocation4 [shape = 's32[2]{0}', space=sflag, size = 0x8, scoped, tag = 'scoped memory for tpu_custom_call.1']
    #allocation5 [shape = 'u8[65536]{0}', space=vmem, size = 0x10000, scoped, tag = 'input window, operand 1']
    #allocation6 [shape = 's32[2]{0}', space=sflag, size = 0x8, scoped, tag = 'scoped memory for tpu_custom_call.1']
    #allocation7 [shape = 'u8[163840]{0}', space=vmem, size = 0x28000, scoped, tag = 'input window, operand 2, single buffered']
    #allocation8 [shape = 'u8[2560]{0}', space=vmem, size = 0xc00, scoped, tag = 'input window, operand 3, single buffered']
    #allocation9 [shape = 's32[1]{0}', space=sflag, size = 0x4, scoped, tag = 'scoped memory for tpu_custom_call.1']
    #allocation10 [shape = 'u8[163840]{0}', space=vmem, size = 0x28000, scoped, tag = 'input window, operand 4, single buffered']
    #allocation11 [shape = 'u8[2560]{0}', space=vmem, size = 0xc00, scoped, tag = 'input window, operand 5, single buffered']
    #allocation12 [shape = 's32[1]{0}', space=sflag, size = 0x4, scoped, tag = 'scoped memory for tpu_custom_call.1']
    #allocation13 [shape = 'u8[2560]{0}', space=vmem, size = 0xc00, scoped, tag = 'input window, operand 7, single buffered']
    #allocation14 [shape = 'u8[32768]{0}', space=vmem, size = 0x8000, scoped, tag = 'input window, operand 8, single buffered']
    #allocation15 [shape = 's32[1]{0}', space=sflag, size = 0x4, scoped, tag = 'scoped memory for tpu_custom_call.1']
    #allocation16 [shape = 'u8[32768]{0}', space=vmem, size = 0x8000, scoped, tag = 'input window, operand 10, single buffered']
    #allocation17 [shape = 'u8[8192]{0}', space=vmem, size = 0x2000, scoped, tag = 'output window, operand 0']
    %17 = vsyncpa [#allocation3], 0
    %s18 = scalar_lea.sflag [#allocation3], 1
    %19 = vsyncpa %s18, 0
    %20 = vsyncpa [#allocation6], 0
    %s21 = scalar_lea.sflag [#allocation6], 1
    %22 = vsyncpa %s21, 0
    %23 = vsyncpa [#allocation9], 0
    %24 = vsyncpa [#allocation12], 0
    %25 = vsyncpa [#allocation15], 0
    %26 = vsyncpa [#allocation4], 0
    %s27 = scalar_lea.sflag [#allocation4], 1
    %28 = vsyncpa %s27, 0
    loop: start=0, step=1, limit=4
    $region2: #{tpu_custom_call.1} parent=1 // loop_pre_header
      _
    $region3: #{tpu_custom_call.1} parent=1 // loop_header
      %s30 = sphi 0, %s34
      %p31 = scmp.ge.s32.totalorder %s30, 4
      %s40 = sphi 0, %s42
      %s43 = sphi 0, %s40
      %s44 = sphi 0, %s43
      %s60 = sphi 0, %s44
      %s66 = sphi 0, %s68
      %s69 = sphi 0, %s66
      %s70 = sphi 0, %s69
      %s86 = sphi 0, %s70
      %s90 = sphi 0, %s90
      %s92 = sphi 0, %s90
      %s93 = sphi 0, %s92
      %s107 = sphi 0, %s93
      %s111 = sphi 0, %s111
      %s113 = sphi 0, %s111
      %s114 = sphi 0, %s113
      %s128 = sphi 0, %s114
      %s132 = sphi 0, %s132
      %s134 = sphi 0, %s132
      %s135 = sphi 0, %s134
      %s149 = sphi 0, %s135
      %s153 = sphi 0, %s153
      %s155 = sphi 0, %s153
      %s156 = sphi 0, %s155
      %s170 = sphi 0, %s156
      %s174 = sphi 0, %s174
      %s176 = sphi 0, %s174
      %s177 = sphi 0, %s176
      %s191 = sphi 0, %s177
      %s195 = sphi 0, %s195
      %s197 = sphi 0, %s195
      %s198 = sphi 0, %s197
      %s212 = sphi 0, %s198
      %s216 = sphi 0, %s216
      %s218 = sphi 0, %s216
      %s219 = sphi 0, %s218
      %s233 = sphi 0, %s219
      %s237 = sphi 0, %s237
      %s239 = sphi 0, %s237
      %s240 = sphi 0, %s239
      %s254 = sphi 0, %s240
      %s258 = sphi 0, %s258
      %s260 = sphi 0, %s258
      %s261 = sphi 0, %s260
      %s275 = sphi 0, %s261
      %s279 = sphi 0, %s279
      %s281 = sphi 0, %s279
      %s282 = sphi 0, %s281
      %s296 = sphi 0, %s282
      %s302 = sphi 0, %s304
      %s305 = sphi 0, %s302
      %s306 = sphi 0, %s305
      %s322 = sphi 0, %s306
    $region4: #{tpu_custom_call.1} parent=1 // loop_header_branch
      %33 = sbr.rel (%p31) target = $region8
    $region5: #{tpu_custom_call.1} parent=1 // loop_body
      %s35 = ssub.s32 %s30, 1
      %s36 = ssub.s32 %s30, 2
      %s37 = sadd.s32 %s30, 1
      %s38 = ssub.s32 %s30, %s37
      %p39 = scmp.eq.s32.totalorder %s38, 0
      %s41 = sadd.s32 %s40, 1
      %s42 = scalar_select %p39, %s40, %s41
      %p45 = pneg %p39
      %p46 = scmp.eq.s32.totalorder %s30, 1
      %p47 = por %p45, %p46
      %p48 = scmp.ne.s32.totalorder %s40, %s43
      %p49 = scmp.eq.s32.totalorder %s30, 0
      %p50 = por %p48, %p49
      %p51 = scmp.ne.s32.totalorder %s40, %s43
      %p52 = scmp.eq.s32.totalorder %s35, 1
      %p53 = por %p51, %p52
      %p54 = scmp.ne.s32.totalorder %s43, %s44
      %p55 = scmp.eq.s32.totalorder %s35, 0
      %p56 = por %p54, %p55
      %p57 = scmp.ne.s32.totalorder %s43, %s44
      %p58 = scmp.eq.s32.totalorder %s36, 1
      %p59 = por %p57, %p58
      %p61 = scmp.ne.s32.totalorder %s44, %s60
      %p62 = scmp.eq.s32.totalorder %s36, 0
      %p63 = por %p61, %p62
      %s64 = ssub.s32 %s30, %s37
      %p65 = scmp.eq.s32.totalorder %s64, 0
      %s67 = sadd.s32 %s66, 1
      %s68 = scalar_select %p65, %s66, %s67
      %p71 = pneg %p65
      %p72 = scmp.eq.s32.totalorder %s30, 1
      %p73 = por %p71, %p72
      %p74 = scmp.ne.s32.totalorder %s66, %s69
      %p75 = scmp.eq.s32.totalorder %s30, 0
      %p76 = por %p74, %p75
      %p77 = scmp.ne.s32.totalorder %s66, %s69
      %p78 = scmp.eq.s32.totalorder %s35, 1
      %p79 = por %p77, %p78
      %p80 = scmp.ne.s32.totalorder %s69, %s70
      %p81 = scmp.eq.s32.totalorder %s35, 0
      %p82 = por %p80, %p81
      %p83 = scmp.ne.s32.totalorder %s69, %s70
      %p84 = scmp.eq.s32.totalorder %s36, 1
      %p85 = por %p83, %p84
      %p87 = scmp.ne.s32.totalorder %s70, %s86
      %p88 = scmp.eq.s32.totalorder %s36, 0
      %p89 = por %p87, %p88
      %s91 = sadd.s32 %s90, 1
      %p94 = scmp.eq.s32.totalorder %s30, 1
      %p95 = scmp.ne.s32.totalorder %s90, %s92
      %p96 = scmp.eq.s32.totalorder %s30, 0
      %p97 = por %p95, %p96
      %p98 = scmp.ne.s32.totalorder %s90, %s92
      %p99 = scmp.eq.s32.totalorder %s35, 1
      %p100 = por %p98, %p99
      %p101 = scmp.ne.s32.totalorder %s92, %s93
      %p102 = scmp.eq.s32.totalorder %s35, 0
      %p103 = por %p101, %p102
      %p104 = scmp.ne.s32.totalorder %s92, %s93
      %p105 = scmp.eq.s32.totalorder %s36, 1
      %p106 = por %p104, %p105
      %p108 = scmp.ne.s32.totalorder %s93, %s107
      %p109 = scmp.eq.s32.totalorder %s36, 0
      %p110 = por %p108, %p109
      %s112 = sadd.s32 %s111, 1
      %p115 = scmp.eq.s32.totalorder %s30, 1
      %p116 = scmp.ne.s32.totalorder %s111, %s113
      %p117 = scmp.eq.s32.totalorder %s30, 0
      %p118 = por %p116, %p117
      %p119 = scmp.ne.s32.totalorder %s111, %s113
      %p120 = scmp.eq.s32.totalorder %s35, 1
      %p121 = por %p119, %p120
      %p122 = scmp.ne.s32.totalorder %s113, %s114
      %p123 = scmp.eq.s32.totalorder %s35, 0
      %p124 = por %p122, %p123
      %p125 = scmp.ne.s32.totalorder %s113, %s114
      %p126 = scmp.eq.s32.totalorder %s36, 1
      %p127 = por %p125, %p126
      %p129 = scmp.ne.s32.totalorder %s114, %s128
      %p130 = scmp.eq.s32.totalorder %s36, 0
      %p131 = por %p129, %p130
      %s133 = sadd.s32 %s132, 1
      %p136 = scmp.eq.s32.totalorder %s30, 1
      %p137 = scmp.ne.s32.totalorder %s132, %s134
      %p138 = scmp.eq.s32.totalorder %s30, 0
      %p139 = por %p137, %p138
      %p140 = scmp.ne.s32.totalorder %s132, %s134
      %p141 = scmp.eq.s32.totalorder %s35, 1
      %p142 = por %p140, %p141
      %p143 = scmp.ne.s32.totalorder %s134, %s135
      %p144 = scmp.eq.s32.totalorder %s35, 0
      %p145 = por %p143, %p144
      %p146 = scmp.ne.s32.totalorder %s134, %s135
      %p147 = scmp.eq.s32.totalorder %s36, 1
      %p148 = por %p146, %p147
      %p150 = scmp.ne.s32.totalorder %s135, %s149
      %p151 = scmp.eq.s32.totalorder %s36, 0
      %p152 = por %p150, %p151
      %s154 = sadd.s32 %s153, 1
      %p157 = scmp.eq.s32.totalorder %s30, 1
      %p158 = scmp.ne.s32.totalorder %s153, %s155
      %p159 = scmp.eq.s32.totalorder %s30, 0
      %p160 = por %p158, %p159
      %p161 = scmp.ne.s32.totalorder %s153, %s155
      %p162 = scmp.eq.s32.totalorder %s35, 1
      %p163 = por %p161, %p162
      %p164 = scmp.ne.s32.totalorder %s155, %s156
      %p165 = scmp.eq.s32.totalorder %s35, 0
      %p166 = por %p164, %p165
      %p167 = scmp.ne.s32.totalorder %s155, %s156
      %p168 = scmp.eq.s32.totalorder %s36, 1
      %p169 = por %p167, %p168
      %p171 = scmp.ne.s32.totalorder %s156, %s170
      %p172 = scmp.eq.s32.totalorder %s36, 0
      %p173 = por %p171, %p172
      %s175 = sadd.s32 %s174, 1
      %p178 = scmp.eq.s32.totalorder %s30, 1
      %p179 = scmp.ne.s32.totalorder %s174, %s176
      %p180 = scmp.eq.s32.totalorder %s30, 0
      %p181 = por %p179, %p180
      %p182 = scmp.ne.s32.totalorder %s174, %s176
      %p183 = scmp.eq.s32.totalorder %s35, 1
      %p184 = por %p182, %p183
      %p185 = scmp.ne.s32.totalorder %s176, %s177
      %p186 = scmp.eq.s32.totalorder %s35, 0
      %p187 = por %p185, %p186
      %p188 = scmp.ne.s32.totalorder %s176, %s177
      %p189 = scmp.eq.s32.totalorder %s36, 1
      %p190 = por %p188, %p189
      %p192 = scmp.ne.s32.totalorder %s177, %s191
      %p193 = scmp.eq.s32.totalorder %s36, 0
      %p194 = por %p192, %p193
      %s196 = sadd.s32 %s195, 1
      %p199 = scmp.eq.s32.totalorder %s30, 1
      %p200 = scmp.ne.s32.totalorder %s195, %s197
      %p201 = scmp.eq.s32.totalorder %s30, 0
      %p202 = por %p200, %p201
      %p203 = scmp.ne.s32.totalorder %s195, %s197
      %p204 = scmp.eq.s32.totalorder %s35, 1
      %p205 = por %p203, %p204
      %p206 = scmp.ne.s32.totalorder %s197, %s198
      %p207 = scmp.eq.s32.totalorder %s35, 0
      %p208 = por %p206, %p207
      %p209 = scmp.ne.s32.totalorder %s197, %s198
      %p210 = scmp.eq.s32.totalorder %s36, 1
      %p211 = por %p209, %p210
      %p213 = scmp.ne.s32.totalorder %s198, %s212
      %p214 = scmp.eq.s32.totalorder %s36, 0
      %p215 = por %p213, %p214
      %s217 = sadd.s32 %s216, 1
      %p220 = scmp.eq.s32.totalorder %s30, 1
      %p221 = scmp.ne.s32.totalorder %s216, %s218
      %p222 = scmp.eq.s32.totalorder %s30, 0
      %p223 = por %p221, %p222
      %p224 = scmp.ne.s32.totalorder %s216, %s218
      %p225 = scmp.eq.s32.totalorder %s35, 1
      %p226 = por %p224, %p225
      %p227 = scmp.ne.s32.totalorder %s218, %s219
      %p228 = scmp.eq.s32.totalorder %s35, 0
      %p229 = por %p227, %p228
      %p230 = scmp.ne.s32.totalorder %s218, %s219
      %p231 = scmp.eq.s32.totalorder %s36, 1
      %p232 = por %p230, %p231
      %p234 = scmp.ne.s32.totalorder %s219, %s233
      %p235 = scmp.eq.s32.totalorder %s36, 0
      %p236 = por %p234, %p235
      %s238 = sadd.s32 %s237, 1
      %p241 = scmp.eq.s32.totalorder %s30, 1
      %p242 = scmp.ne.s32.totalorder %s237, %s239
      %p243 = scmp.eq.s32.totalorder %s30, 0
      %p244 = por %p242, %p243
      %p245 = scmp.ne.s32.totalorder %s237, %s239
      %p246 = scmp.eq.s32.totalorder %s35, 1
      %p247 = por %p245, %p246
      %p248 = scmp.ne.s32.totalorder %s239, %s240
      %p249 = scmp.eq.s32.totalorder %s35, 0
      %p250 = por %p248, %p249
      %p251 = scmp.ne.s32.totalorder %s239, %s240
      %p252 = scmp.eq.s32.totalorder %s36, 1
      %p253 = por %p251, %p252
      %p255 = scmp.ne.s32.totalorder %s240, %s254
      %p256 = scmp.eq.s32.totalorder %s36, 0
      %p257 = por %p255, %p256
      %s259 = sadd.s32 %s258, 1
      %p262 = scmp.eq.s32.totalorder %s30, 1
      %p263 = scmp.ne.s32.totalorder %s258, %s260
      %p264 = scmp.eq.s32.totalorder %s30, 0
      %p265 = por %p263, %p264
      %p266 = scmp.ne.s32.totalorder %s258, %s260
      %p267 = scmp.eq.s32.totalorder %s35, 1
      %p268 = por %p266, %p267
      %p269 = scmp.ne.s32.totalorder %s260, %s261
      %p270 = scmp.eq.s32.totalorder %s35, 0
      %p271 = por %p269, %p270
      %p272 = scmp.ne.s32.totalorder %s260, %s261
      %p273 = scmp.eq.s32.totalorder %s36, 1
      %p274 = por %p272, %p273
      %p276 = scmp.ne.s32.totalorder %s261, %s275
      %p277 = scmp.eq.s32.totalorder %s36, 0
      %p278 = por %p276, %p277
      %s280 = sadd.s32 %s279, 1
      %p283 = scmp.eq.s32.totalorder %s30, 1
      %p284 = scmp.ne.s32.totalorder %s279, %s281
      %p285 = scmp.eq.s32.totalorder %s30, 0
      %p286 = por %p284, %p285
      %p287 = scmp.ne.s32.totalorder %s279, %s281
      %p288 = scmp.eq.s32.totalorder %s35, 1
      %p289 = por %p287, %p288
      %p290 = scmp.ne.s32.totalorder %s281, %s282
      %p291 = scmp.eq.s32.totalorder %s35, 0
      %p292 = por %p290, %p291
      %p293 = scmp.ne.s32.totalorder %s281, %s282
      %p294 = scmp.eq.s32.totalorder %s36, 1
      %p295 = por %p293, %p294
      %p297 = scmp.ne.s32.totalorder %s282, %s296
      %p298 = scmp.eq.s32.totalorder %s36, 0
      %p299 = por %p297, %p298
      %s300 = ssub.s32 %s30, %s37
      %p301 = scmp.eq.s32.totalorder %s300, 0
      %s303 = sadd.s32 %s302, 1
      %s304 = scalar_select %p301, %s302, %s303
      %p307 = pneg %p301
      %p308 = scmp.eq.s32.totalorder %s30, 1
      %p309 = por %p307, %p308
      %p310 = scmp.ne.s32.totalorder %s302, %s305
      %p311 = scmp.eq.s32.totalorder %s30, 0
      %p312 = por %p310, %p311
      %p313 = scmp.ne.s32.totalorder %s302, %s305
      %p314 = scmp.eq.s32.totalorder %s35, 1
      %p315 = por %p313, %p314
      %p316 = scmp.ne.s32.totalorder %s305, %s306
      %p317 = scmp.eq.s32.totalorder %s35, 0
      %p318 = por %p316, %p317
      %p319 = scmp.ne.s32.totalorder %s305, %s306
      %p320 = scmp.eq.s32.totalorder %s36, 1
      %p321 = por %p319, %p320
      %p323 = scmp.ne.s32.totalorder %s306, %s322
      %p324 = scmp.eq.s32.totalorder %s36, 0
      %p325 = por %p323, %p324
      %p326 = scmp.le.s32.totalorder 1, %s30
      %p327 = scmp.lt.s32.totalorder %s30, 3
      %p328 = pnand %p326, %p327
      %p329 = pneg %p328
      // Predicated region
      $region9: #{tpu_custom_call.1} parent=5 // pred_check
        _
      $region10: #{tpu_custom_call.1} parent=5 // pred_check_branch
        %331 = sbr.rel (%p328) target = $region12
      $region11: #{tpu_custom_call.1} parent=5 // pred_region
        %s332 = ssub.s32 %s30, 1
        // Predicated region
        $region13: #{tpu_custom_call.1} parent=11 // pred_check
          %p333 = pneg %p103
        $region14: #{tpu_custom_call.1} parent=11 // pred_check_branch
          %335 = sbr.rel (%p333) target = $region16
        $region15: #{tpu_custom_call.1} parent=11 // pred_region
          %337 = vsyncadd [#allocation6], 0
          %s338 = sshll.u32 %s2, 4
          %s339 = int_to_ptr.hbm [resolvable:$true] %s338
          %s340 = sshll.u32 [#allocation7], 4
          %s341 = int_to_ptr.vmem [resolvable:$true] %s340
          %346 = dma.hbm_to_vmem [thread:$0]  %s339, 5120, %s341, [#allocation6], 64, 64, 4
        $region16: #{tpu_custom_call.1} parent=11 // pred_fallthru
          _
        // Predicated region
        $region17: #{tpu_custom_call.1} parent=11 // pred_check
          %p347 = pneg %p124
        $region18: #{tpu_custom_call.1} parent=11 // pred_check_branch
          %349 = sbr.rel (%p347) target = $region20
        $region19: #{tpu_custom_call.1} parent=11 // pred_region
          %351 = vsyncadd [#allocation9], 0
          %s352 = sshll.u32 %s3, 4
          %s353 = int_to_ptr.hbm [resolvable:$true] %s352
          %s354 = sshll.u32 [#allocation8], 4
          %s355 = int_to_ptr.vmem [resolvable:$true] %s354
          %360 = dma.hbm_to_vmem [thread:$0]  %s353, 80, %s355, [#allocation9], 16, 16, 1
        $region20: #{tpu_custom_call.1} parent=11 // pred_fallthru
          _
        // Predicated region
        $region21: #{tpu_custom_call.1} parent=11 // pred_check
          %p361 = pneg %p145
        $region22: #{tpu_custom_call.1} parent=11 // pred_check_branch
          %363 = sbr.rel (%p361) target = $region24
        $region23: #{tpu_custom_call.1} parent=11 // pred_region
          %365 = vsyncadd [#allocation9], 0
          %s366 = sshll.u32 %s4, 4
          %s367 = int_to_ptr.hbm [resolvable:$true] %s366
          %s368 = sshll.u32 [#allocation10], 4
          %s369 = int_to_ptr.vmem [resolvable:$true] %s368
          %374 = dma.hbm_to_vmem [thread:$0]  %s367, 5120, %s369, [#allocation9], 64, 64, 4
        $region24: #{tpu_custom_call.1} parent=11 // pred_fallthru
          _
        // Predicated region
        $region25: #{tpu_custom_call.1} parent=11 // pred_check
          %p375 = pneg %p166
        $region26: #{tpu_custom_call.1} parent=11 // pred_check_branch
          %377 = sbr.rel (%p375) target = $region28
        $region27: #{tpu_custom_call.1} parent=11 // pred_region
          %379 = vsyncadd [#allocation12], 0
          %s380 = sshll.u32 %s5, 4
          %s381 = int_to_ptr.hbm [resolvable:$true] %s380
          %s382 = sshll.u32 [#allocation11], 4
          %s383 = int_to_ptr.vmem [resolvable:$true] %s382
          %388 = dma.hbm_to_vmem [thread:$0]  %s381, 80, %s383, [#allocation12], 16, 16, 1
        $region28: #{tpu_custom_call.1} parent=11 // pred_fallthru
          _
        // Predicated region
        $region29: #{tpu_custom_call.1} parent=11 // pred_check
          %p389 = pneg %p187
        $region30: #{tpu_custom_call.1} parent=11 // pred_check_branch
          %391 = sbr.rel (%p389) target = $region32
        $region31: #{tpu_custom_call.1} parent=11 // pred_region
          _
        $region32: #{tpu_custom_call.1} parent=11 // pred_fallthru
          _
        // Predicated region
        $region33: #{tpu_custom_call.1} parent=11 // pred_check
          %p392 = pneg %p208
        $region34: #{tpu_custom_call.1} parent=11 // pred_check_branch
          %394 = sbr.rel (%p392) target = $region36
        $region35: #{tpu_custom_call.1} parent=11 // pred_region
          %396 = vsyncadd [#allocation12], 0
          %s397 = sshll.u32 %s7, 4
          %s398 = int_to_ptr.hbm [resolvable:$true] %s397
          %s399 = sshll.u32 [#allocation13], 4
          %s400 = int_to_ptr.vmem [resolvable:$true] %s399
          %405 = dma.hbm_to_vmem [thread:$0]  %s398, 80, %s400, [#allocation12], 16, 16, 1
        $region36: #{tpu_custom_call.1} parent=11 // pred_fallthru
          _
        // Predicated region
        $region37: #{tpu_custom_call.1} parent=11 // pred_check
          %p406 = pneg %p229
        $region38: #{tpu_custom_call.1} parent=11 // pred_check_branch
          %408 = sbr.rel (%p406) target = $region40
        $region39: #{tpu_custom_call.1} parent=11 // pred_region
          %410 = vsyncadd [#allocation15], 0
          %s411 = sshll.u32 %s8, 4
          %s412 = int_to_ptr.hbm [resolvable:$true] %s411
          %s413 = sshll.u32 [#allocation14], 4
          %s414 = int_to_ptr.vmem [resolvable:$true] %s413
          %419 = dma.hbm_to_vmem [thread:$0]  %s412, 1024, %s414, [#allocation15], 64, 64, 4
        $region40: #{tpu_custom_call.1} parent=11 // pred_fallthru
          _
        // Predicated region
        $region41: #{tpu_custom_call.1} parent=11 // pred_check
          %p420 = pneg %p250
        $region42: #{tpu_custom_call.1} parent=11 // pred_check_branch
          %422 = sbr.rel (%p420) target = $region44
        $region43: #{tpu_custom_call.1} parent=11 // pred_region
          _
        $region44: #{tpu_custom_call.1} parent=11 // pred_fallthru
          _
        // Predicated region
        $region45: #{tpu_custom_call.1} parent=11 // pred_check
          %p423 = pneg %p271
        $region46: #{tpu_custom_call.1} parent=11 // pred_check_branch
          %425 = sbr.rel (%p423) target = $region48
        $region47: #{tpu_custom_call.1} parent=11 // pred_region
          %427 = vsyncadd [#allocation15], 0
          %s428 = sshll.u32 %s10, 4
          %s429 = int_to_ptr.hbm [resolvable:$true] %s428
          %s430 = sshll.u32 [#allocation16], 4
          %s431 = int_to_ptr.vmem [resolvable:$true] %s430
          %436 = dma.hbm_to_vmem [thread:$0]  %s429, 1024, %s431, [#allocation15], 64, 64, 4
        $region48: #{tpu_custom_call.1} parent=11 // pred_fallthru
          _
        // Predicated region
        $region49: #{tpu_custom_call.1} parent=11 // pred_check
          %p437 = pneg %p292
        $region50: #{tpu_custom_call.1} parent=11 // pred_check_branch
          %439 = sbr.rel (%p437) target = $region52
        $region51: #{tpu_custom_call.1} parent=11 // pred_region
          _
        $region52: #{tpu_custom_call.1} parent=11 // pred_fallthru
          _
      $region12: #{tpu_custom_call.1} parent=5 // pred_fallthru
        _
      %p440 = scmp.lt.s32.totalorder %s30, 2
      // Predicated region
      $region53: #{tpu_custom_call.1} parent=5 // pred_check
        %p441 = pneg %p440
      $region54: #{tpu_custom_call.1} parent=5 // pred_check_branch
        %443 = sbr.rel (%p441) target = $region56
      $region55: #{tpu_custom_call.1} parent=5 // pred_region
        // Predicated region
        $region57: #{tpu_custom_call.1} parent=55 // pred_check
          %p444 = pneg %p50
        $region58: #{tpu_custom_call.1} parent=55 // pred_check_branch
          %446 = sbr.rel (%p444) target = $region60
        $region59: #{tpu_custom_call.1} parent=55 // pred_region
          %s447 = sand.u32 %s40, 1
          %s448 = scalar_lea.sflag [#allocation3], %s447
          %s449 = sand.u32 %s40, 1
          %s450 = smul.addr %s449, 64
          %s451 = scalar_lea.vmem [#allocation2], %s450
          %s452 = smul.u32 8, %s30
          %454 = vsyncadd %s448, 0
          %s455 = smul.addr %s452, 2
          %s456 = smul.addr %s455, 4
          %s457 = scalar_lea.hbm %s0, %s456
          %s458 = sshll.u32 %s457, 4
          %s459 = int_to_ptr.hbm [resolvable:$true] %s458
          %s460 = sshll.u32 %s451, 4
          %s461 = int_to_ptr.vmem [resolvable:$true] %s460
          %466 = dma.hbm_to_vmem [thread:$0]  %s459, 1024, %s461, %s448, 64, 64, 4
        $region60: #{tpu_custom_call.1} parent=55 // pred_fallthru
          _
        // Predicated region
        $region61: #{tpu_custom_call.1} parent=55 // pred_check
          %p467 = pneg %p76
        $region62: #{tpu_custom_call.1} parent=55 // pred_check_branch
          %469 = sbr.rel (%p467) target = $region64
        $region63: #{tpu_custom_call.1} parent=55 // pred_region
          %s470 = sand.u32 %s30, 1
          %s471 = scalar_lea.sflag [#allocation6], %s470
          %s472 = sand.u32 %s66, 1
          %s473 = smul.addr %s472, 64
          %s474 = scalar_lea.vmem [#allocation5], %s473
          %s475 = smul.u32 8, %s30
          %477 = vsyncadd %s471, 0
          %s478 = smul.addr %s475, 2
          %s479 = smul.addr %s478, 4
          %s480 = scalar_lea.hbm %s1, %s479
          %s481 = sshll.u32 %s480, 4
          %s482 = int_to_ptr.hbm [resolvable:$true] %s481
          %s483 = sshll.u32 %s474, 4
          %s484 = int_to_ptr.vmem [resolvable:$true] %s483
          %489 = dma.hbm_to_vmem [thread:$0]  %s482, 1024, %s484, %s471, 64, 64, 4
        $region64: #{tpu_custom_call.1} parent=55 // pred_fallthru
          _
      $region56: #{tpu_custom_call.1} parent=5 // pred_fallthru
        _
      %p490 = scmp.le.s32.totalorder 1, %s30
      %p491 = scmp.lt.s32.totalorder %s30, 3
      %p492 = pnand %p490, %p491
      %p493 = pneg %p492
      // Predicated region
      $region65: #{tpu_custom_call.1} parent=5 // pred_check
        _
      $region66: #{tpu_custom_call.1} parent=5 // pred_check_branch
        %495 = sbr.rel (%p492) target = $region68
      $region67: #{tpu_custom_call.1} parent=5 // pred_region
        %s496 = ssub.s32 %s30, 1
        %s497 = sand.u32 %s43, 1
        %s498 = scalar_lea.sflag [#allocation3], %s497
        %s499 = sand.u32 %s43, 1
        %s500 = smul.addr %s499, 64
        %s501 = scalar_lea.vmem [#allocation2], %s500
        // Predicated region
        $region69: #{tpu_custom_call.1} parent=67 // pred_check
          %p502 = pneg %p56
        $region70: #{tpu_custom_call.1} parent=67 // pred_check_branch
          %504 = sbr.rel (%p502) target = $region72
        $region71: #{tpu_custom_call.1} parent=67 // pred_region
          %506 = dma.done %s498, 1024
        $region72: #{tpu_custom_call.1} parent=67 // pred_fallthru
          _
        %s507 = sand.u32 %s35, 1
        %s508 = scalar_lea.sflag [#allocation6], %s507
        %s509 = sand.u32 %s69, 1
        %s510 = smul.addr %s509, 64
        %s511 = scalar_lea.vmem [#allocation5], %s510
        // Predicated region
        $region73: #{tpu_custom_call.1} parent=67 // pred_check
          %p512 = pneg %p82
        $region74: #{tpu_custom_call.1} parent=67 // pred_check_branch
          %514 = sbr.rel (%p512) target = $region76
        $region75: #{tpu_custom_call.1} parent=67 // pred_region
          %516 = dma.done %s508, 1024
        $region76: #{tpu_custom_call.1} parent=67 // pred_fallthru
          _
        // Predicated region
        $region77: #{tpu_custom_call.1} parent=67 // pred_check
          %p517 = pneg %p103
        $region78: #{tpu_custom_call.1} parent=67 // pred_check_branch
          %519 = sbr.rel (%p517) target = $region80
        $region79: #{tpu_custom_call.1} parent=67 // pred_region
          %521 = dma.done [#allocation6], 5120
        $region80: #{tpu_custom_call.1} parent=67 // pred_fallthru
          _
        // Predicated region
        $region81: #{tpu_custom_call.1} parent=67 // pred_check
          %p522 = pneg %p124
        $region82: #{tpu_custom_call.1} parent=67 // pred_check_branch
          %524 = sbr.rel (%p522) target = $region84
        $region83: #{tpu_custom_call.1} parent=67 // pred_region
          %526 = dma.done [#allocation9], 80
        $region84: #{tpu_custom_call.1} parent=67 // pred_fallthru
          _
        // Predicated region
        $region85: #{tpu_custom_call.1} parent=67 // pred_check
          %p527 = pneg %p145
        $region86: #{tpu_custom_call.1} parent=67 // pred_check_branch
          %529 = sbr.rel (%p527) target = $region88
        $region87: #{tpu_custom_call.1} parent=67 // pred_region
          %531 = dma.done [#allocation9], 5120
        $region88: #{tpu_custom_call.1} parent=67 // pred_fallthru
          _
        // Predicated region
        $region89: #{tpu_custom_call.1} parent=67 // pred_check
          %p532 = pneg %p166
        $region90: #{tpu_custom_call.1} parent=67 // pred_check_branch
          %534 = sbr.rel (%p532) target = $region92
        $region91: #{tpu_custom_call.1} parent=67 // pred_region
          %536 = dma.done [#allocation12], 80
        $region92: #{tpu_custom_call.1} parent=67 // pred_fallthru
          _
        // Predicated region
        $region93: #{tpu_custom_call.1} parent=67 // pred_check
          %p537 = pneg %p208
        $region94: #{tpu_custom_call.1} parent=67 // pred_check_branch
          %539 = sbr.rel (%p537) target = $region96
        $region95: #{tpu_custom_call.1} parent=67 // pred_region
          %541 = dma.done [#allocation12], 80
        $region96: #{tpu_custom_call.1} parent=67 // pred_fallthru
          _
        // Predicated region
        $region97: #{tpu_custom_call.1} parent=67 // pred_check
          %p542 = pneg %p229
        $region98: #{tpu_custom_call.1} parent=67 // pred_check_branch
          %544 = sbr.rel (%p542) target = $region100
        $region99: #{tpu_custom_call.1} parent=67 // pred_region
          %546 = dma.done [#allocation15], 1024
        $region100: #{tpu_custom_call.1} parent=67 // pred_fallthru
          _
        // Predicated region
        $region101: #{tpu_custom_call.1} parent=67 // pred_check
          %p547 = pneg %p271
        $region102: #{tpu_custom_call.1} parent=67 // pred_check_branch
          %549 = sbr.rel (%p547) target = $region104
        $region103: #{tpu_custom_call.1} parent=67 // pred_region
          %551 = dma.done [#allocation15], 1024
        $region104: #{tpu_custom_call.1} parent=67 // pred_fallthru
          _
        %s552 = sand.u32 %s43, 1
        %s553 = scalar_lea.sflag [#allocation3], %s552
        %s554 = sand.u32 %s43, 1
        %s555 = smul.addr %s554, 64
        %s556 = scalar_lea.vmem [#allocation2], %s555
        %p557 = pneg %p56
        %p558 = pneg %p53
        %s559 = sand.u32 %s35, 1
        %s560 = scalar_lea.sflag [#allocation6], %s559
        %s561 = sand.u32 %s69, 1
        %s562 = smul.addr %s561, 64
        %s563 = scalar_lea.vmem [#allocation5], %s562
        %p564 = pneg %p82
        %p565 = pneg %p79
        %p566 = pneg %p103
        %p567 = pneg %p100
        %p568 = pneg %p124
        %p569 = pneg %p121
        %p570 = pneg %p145
        %p571 = pneg %p142
        %p572 = pneg %p166
        %p573 = pneg %p163
        %p574 = pneg %p187
        %p575 = pneg %p184
        %p576 = pneg %p208
        %p577 = pneg %p205
        %p578 = pneg %p229
        %p579 = pneg %p226
        %p580 = pneg %p250
        %p581 = pneg %p247
        %p582 = pneg %p271
        %p583 = pneg %p268
        %p584 = pneg %p292
        %p585 = pneg %p289
        %p586 = pneg %p318
        %p587 = pneg %p315
        %s588 = sand.u32 %s305, 1
        %s589 = scalar_lea.sflag [#allocation4], %s588
        %s590 = sand.u32 %s305, 1
        %s591 = smul.addr %s590, 8
        %s592 = scalar_lea.vmem [#allocation17], %s591
        %s593 = smul.u32 8, %s35
        %s594 = smul.u32 8, %s35
        %v596 = vld [vmem:[%s501] sm:$0xf]
        %v597 = vld [vmem:[%s501 + $0x4] sm:$0xf]
        %v598 = vld [vmem:[%s501 + $0x8] sm:$0xf]
        %v599 = vld [vmem:[%s501 + $0xc] sm:$0xf]
        %v600 = vld [vmem:[%s501 + $0x10] sm:$0xf]
        %v601 = vld [vmem:[%s501 + $0x14] sm:$0xf]
        %v602 = vld [vmem:[%s501 + $0x18] sm:$0xf]
        %v603 = vld [vmem:[%s501 + $0x1c] sm:$0xf]
        %v604 = vld [vmem:[%s501 + $0x20] sm:$0xf]
        %v605 = vld [vmem:[%s501 + $0x24] sm:$0xf]
        %v606 = vld [vmem:[%s501 + $0x28] sm:$0xf]
        %v607 = vld [vmem:[%s501 + $0x2c] sm:$0xf]
        %v608 = vld [vmem:[%s501 + $0x30] sm:$0xf]
        %v609 = vld [vmem:[%s501 + $0x34] sm:$0xf]
        %v610 = vld [vmem:[%s501 + $0x38] sm:$0xf]
        %v611 = vld [vmem:[%s501 + $0x3c] sm:$0xf]
        %v612 = vld [vmem:[%s511] sm:$0xf]
        %v613 = vld [vmem:[%s511 + $0x4] sm:$0xf]
        %v614 = vld [vmem:[%s511 + $0x8] sm:$0xf]
        %v615 = vld [vmem:[%s511 + $0xc] sm:$0xf]
        %v616 = vld [vmem:[%s511 + $0x10] sm:$0xf]
        %v617 = vld [vmem:[%s511 + $0x14] sm:$0xf]
        %v618 = vld [vmem:[%s511 + $0x18] sm:$0xf]
        %v619 = vld [vmem:[%s511 + $0x1c] sm:$0xf]
        %v620 = vld [vmem:[%s511 + $0x20] sm:$0xf]
        %v621 = vld [vmem:[%s511 + $0x24] sm:$0xf]
        %v622 = vld [vmem:[%s511 + $0x28] sm:$0xf]
        %v623 = vld [vmem:[%s511 + $0x2c] sm:$0xf]
        %v624 = vld [vmem:[%s511 + $0x30] sm:$0xf]
        %v625 = vld [vmem:[%s511 + $0x34] sm:$0xf]
        %v626 = vld [vmem:[%s511 + $0x38] sm:$0xf]
        %v627 = vld [vmem:[%s511 + $0x3c] sm:$0xf]
        %v630 = vunpack.c.l.b16 %v596
        %v631 = vunpack.c.l.b16 %v597
        %v632 = vpack.c.b16 %v631, %v630
        %v635 = vunpack.c.l.b16 %v612
        %v636 = vunpack.c.l.b16 %v613
        %v637 = vpack.c.b16 %v636, %v635
        %vm639 = vcmask 130048
        %v641 = vsel %vm639, %v632, 0
        %643 = vmatpush.bf16.msra.mxu0 0
        %644 = vmatpush.bf16.msra.mxu0 0
        %645 = vmatpush.bf16.msra.mxu0 0
        %646 = vmatpush.bf16.msra.mxu0 0
        %647 = vmatpush.bf16.msra.mxu0 0
        %648 = vmatpush.bf16.msra.mxu0 0
        %649 = vmatpush.bf16.msra.mxu0 0
        %650 = vmatpush.bf16.msra.mxu0 %v637
        %651 = vmatmul.bf16.gmra.mxu0 %v641
        %v652 = vpop.f32.mrf.mxu0
        %v653 = vadd.f32 0.0, %v652
        %v654 = vpop.f32.mrf.mxu0
        %v655 = vadd.f32 0.0, %v654
        %656 = vdwg.mxu0
        %v659 = vunpack.c.l.b16 %v598
        %v660 = vunpack.c.l.b16 %v599
        %v661 = vpack.c.b16 %v660, %v659
        %v664 = vunpack.c.l.b16 %v614
        %v665 = vunpack.c.l.b16 %v615
        %v666 = vpack.c.b16 %v665, %v664
        %v669 = vsel %vm639, %v661, 0
        %671 = vmatpush.bf16.msra.mxu0 0
        %672 = vmatpush.bf16.msra.mxu0 0
        %673 = vmatpush.bf16.msra.mxu0 0
        %674 = vmatpush.bf16.msra.mxu0 0
        %675 = vmatpush.bf16.msra.mxu0 0
        %676 = vmatpush.bf16.msra.mxu0 0
        %677 = vmatpush.bf16.msra.mxu0 0
        %678 = vmatpush.bf16.msra.mxu0 %v666
        %679 = vmatmul.bf16.gmra.mxu0 %v669
        %v680 = vpop.f32.mrf.mxu0
        %v681 = vadd.f32 0.0, %v680
        %v682 = vpop.f32.mrf.mxu0
        %v683 = vadd.f32 0.0, %v682
        %684 = vdwg.mxu0
        %v687 = vunpack.c.l.b16 %v600
        %v688 = vunpack.c.l.b16 %v601
        %v689 = vpack.c.b16 %v688, %v687
        %v692 = vunpack.c.l.b16 %v616
        %v693 = vunpack.c.l.b16 %v617
        %v694 = vpack.c.b16 %v693, %v692
        %v697 = vsel %vm639, %v689, 0
        %699 = vmatpush.bf16.msra.mxu0 0
        %700 = vmatpush.bf16.msra.mxu0 0
        %701 = vmatpush.bf16.msra.mxu0 0
        %702 = vmatpush.bf16.msra.mxu0 0
        %703 = vmatpush.bf16.msra.mxu0 0
        %704 = vmatpush.bf16.msra.mxu0 0
        %705 = vmatpush.bf16.msra.mxu0 0
        %706 = vmatpush.bf16.msra.mxu0 %v694
        %707 = vmatmul.bf16.gmra.mxu0 %v697
        %v708 = vpop.f32.mrf.mxu0
        %v709 = vadd.f32 0.0, %v708
        %v710 = vpop.f32.mrf.mxu0
        %v711 = vadd.f32 0.0, %v710
        %712 = vdwg.mxu0
        %v715 = vunpack.c.l.b16 %v602
        %v716 = vunpack.c.l.b16 %v603
        %v717 = vpack.c.b16 %v716, %v715
        %v720 = vunpack.c.l.b16 %v618
        %v721 = vunpack.c.l.b16 %v619
        %v722 = vpack.c.b16 %v721, %v720
        %v725 = vsel %vm639, %v717, 0
        %727 = vmatpush.bf16.msra.mxu0 0
        %728 = vmatpush.bf16.msra.mxu0 0
        %729 = vmatpush.bf16.msra.mxu0 0
        %730 = vmatpush.bf16.msra.mxu0 0
        %731 = vmatpush.bf16.msra.mxu0 0
        %732 = vmatpush.bf16.msra.mxu0 0
        %733 = vmatpush.bf16.msra.mxu0 0
        %734 = vmatpush.bf16.msra.mxu0 %v722
        %735 = vmatmul.bf16.gmra.mxu0 %v725
        %v736 = vpop.f32.mrf.mxu0
        %v737 = vadd.f32 0.0, %v736
        %v738 = vpop.f32.mrf.mxu0
        %v739 = vadd.f32 0.0, %v738
        %740 = vdwg.mxu0
        %v743 = vunpack.c.l.b16 %v604
        %v744 = vunpack.c.l.b16 %v605
        %v745 = vpack.c.b16 %v744, %v743
        %v748 = vunpack.c.l.b16 %v620
        %v749 = vunpack.c.l.b16 %v621
        %v750 = vpack.c.b16 %v749, %v748
        %v753 = vsel %vm639, %v745, 0
        %755 = vmatpush.bf16.msra.mxu0 0
        %756 = vmatpush.bf16.msra.mxu0 0
        %757 = vmatpush.bf16.msra.mxu0 0
        %758 = vmatpush.bf16.msra.mxu0 0
        %759 = vmatpush.bf16.msra.mxu0 0
        %760 = vmatpush.bf16.msra.mxu0 0
        %761 = vmatpush.bf16.msra.mxu0 0
        %762 = vmatpush.bf16.msra.mxu0 %v750
        %763 = vmatmul.bf16.gmra.mxu0 %v753
        %v764 = vpop.f32.mrf.mxu0
        %v765 = vadd.f32 0.0, %v764
        %v766 = vpop.f32.mrf.mxu0
        %v767 = vadd.f32 0.0, %v766
        %768 = vdwg.mxu0
        %v771 = vunpack.c.l.b16 %v606
        %v772 = vunpack.c.l.b16 %v607
        %v773 = vpack.c.b16 %v772, %v771
        %v776 = vunpack.c.l.b16 %v622
        %v777 = vunpack.c.l.b16 %v623
        %v778 = vpack.c.b16 %v777, %v776
        %v781 = vsel %vm639, %v773, 0
        %783 = vmatpush.bf16.msra.mxu0 0
        %784 = vmatpush.bf16.msra.mxu0 0
        %785 = vmatpush.bf16.msra.mxu0 0
        %786 = vmatpush.bf16.msra.mxu0 0
        %787 = vmatpush.bf16.msra.mxu0 0
        %788 = vmatpush.bf16.msra.mxu0 0
        %789 = vmatpush.bf16.msra.mxu0 0
        %790 = vmatpush.bf16.msra.mxu0 %v778
        %791 = vmatmul.bf16.gmra.mxu0 %v781
        %v792 = vpop.f32.mrf.mxu0
        %v793 = vadd.f32 0.0, %v792
        %v794 = vpop.f32.mrf.mxu0
        %v795 = vadd.f32 0.0, %v794
        %796 = vdwg.mxu0
        %v799 = vunpack.c.l.b16 %v608
        %v800 = vunpack.c.l.b16 %v609
        %v801 = vpack.c.b16 %v800, %v799
        %v804 = vunpack.c.l.b16 %v624
        %v805 = vunpack.c.l.b16 %v625
        %v806 = vpack.c.b16 %v805, %v804
        %v809 = vsel %vm639, %v801, 0
        %811 = vmatpush.bf16.msra.mxu0 0
        %812 = vmatpush.bf16.msra.mxu0 0
        %813 = vmatpush.bf16.msra.mxu0 0
        %814 = vmatpush.bf16.msra.mxu0 0
        %815 = vmatpush.bf16.msra.mxu0 0
        %816 = vmatpush.bf16.msra.mxu0 0
        %817 = vmatpush.bf16.msra.mxu0 0
        %818 = vmatpush.bf16.msra.mxu0 %v806
        %819 = vmatmul.bf16.gmra.mxu0 %v809
        %v820 = vpop.f32.mrf.mxu0
        %v821 = vadd.f32 0.0, %v820
        %v822 = vpop.f32.mrf.mxu0
        %v823 = vadd.f32 0.0, %v822
        %824 = vdwg.mxu0
        %v827 = vunpack.c.l.b16 %v610
        %v828 = vunpack.c.l.b16 %v611
        %v829 = vpack.c.b16 %v828, %v827
        %v832 = vunpack.c.l.b16 %v626
        %v833 = vunpack.c.l.b16 %v627
        %v834 = vpack.c.b16 %v833, %v832
        %v837 = vsel %vm639, %v829, 0
        %839 = vmatpush.bf16.msra.mxu0 0
        %840 = vmatpush.bf16.msra.mxu0 0
        %841 = vmatpush.bf16.msra.mxu0 0
        %842 = vmatpush.bf16.msra.mxu0 0
        %843 = vmatpush.bf16.msra.mxu0 0
        %844 = vmatpush.bf16.msra.mxu0 0
        %845 = vmatpush.bf16.msra.mxu0 0
        %846 = vmatpush.bf16.msra.mxu0 %v834
        %847 = vmatmul.bf16.gmra.mxu0 %v837
        %v848 = vpop.f32.mrf.mxu0
        %v849 = vadd.f32 0.0, %v848
        %v850 = vpop.f32.mrf.mxu0
        %v851 = vadd.f32 0.0, %v850
        %852 = vdwg.mxu0
        %v853 = vpack.c.bf16 %v655, %v653
        %v854 = vpack.c.bf16 %v683, %v681
        %v855 = vpack.c.bf16 %v711, %v709
        %v856 = vpack.c.bf16 %v739, %v737
        %v857 = vpack.c.bf16 %v767, %v765
        %v858 = vpack.c.bf16 %v795, %v793
        %v859 = vpack.c.bf16 %v823, %v821
        %v860 = vpack.c.bf16 %v851, %v849
        %v861 = vld [vmem:[#allocation7] sm:$0xf]
        %v862 = vld [vmem:[#allocation7 + $0x4] sm:$0xf]
        %v863 = vld [vmem:[#allocation7 + $0x8] sm:$0xf]
        %v864 = vld [vmem:[#allocation7 + $0xc] sm:$0xf]
        %v865 = vld [vmem:[#allocation7 + $0x10] sm:$0xf]
        %v866 = vld [vmem:[#allocation7 + $0x14] sm:$0xf]
        %v867 = vld [vmem:[#allocation7 + $0x18] sm:$0xf]
        %v868 = vld [vmem:[#allocation7 + $0x1c] sm:$0xf]
        %v869 = vld [vmem:[#allocation7 + $0x20] sm:$0xf]
        %v870 = vld [vmem:[#allocation7 + $0x24] sm:$0xf]
        %v871 = vld [vmem:[#allocation7 + $0x28] sm:$0xf]
        %v872 = vld [vmem:[#allocation7 + $0x2c] sm:$0xf]
        %v873 = vld [vmem:[#allocation7 + $0x30] sm:$0xf]
        %v874 = vld [vmem:[#allocation7 + $0x34] sm:$0xf]
        %v875 = vld [vmem:[#allocation7 + $0x38] sm:$0xf]
        %v876 = vld [vmem:[#allocation7 + $0x3c] sm:$0xf]
        %v877 = vld [vmem:[#allocation8] sm:$0x1]
        %v879 = vperm.slane %v877, 0
        %v897 = vunpack.c.l.b16 %v861
        %v898 = vunpack.c.l.b16 %v862
        %v899 = vunpack.c.l.b16 %v863
        %v900 = vunpack.c.l.b16 %v864
        %v901 = vunpack.c.l.b16 %v865
        %v902 = vunpack.c.l.b16 %v866
        %v903 = vunpack.c.l.b16 %v867
        %v904 = vunpack.c.l.b16 %v868
        %v905 = vunpack.c.l.b16 %v869
        %v906 = vunpack.c.l.b16 %v870
        %v907 = vunpack.c.l.b16 %v871
        %v908 = vunpack.c.l.b16 %v872
        %v909 = vunpack.c.l.b16 %v873
        %v910 = vunpack.c.l.b16 %v874
        %v911 = vunpack.c.l.b16 %v875
        %v912 = vunpack.c.l.b16 %v876
        %v913 = vpack.c.b16 %v898, %v897
        %v914 = vpack.c.b16 %v900, %v899
        %v915 = vpack.c.b16 %v902, %v901
        %v916 = vpack.c.b16 %v904, %v903
        %v917 = vpack.c.b16 %v906, %v905
        %v918 = vpack.c.b16 %v908, %v907
        %v919 = vpack.c.b16 %v910, %v909
        %v920 = vpack.c.b16 %v912, %v911
        %929 = vmatpush.bf16.msra.mxu0 %v920
        %930 = vmatpush.bf16.msra.mxu0 %v919
        %931 = vmatpush.bf16.msra.mxu0 %v918
        %932 = vmatpush.bf16.msra.mxu0 %v917
        %933 = vmatpush.bf16.msra.mxu0 %v916
        %934 = vmatpush.bf16.msra.mxu0 %v915
        %935 = vmatpush.bf16.msra.mxu0 %v914
        %936 = vmatpush.bf16.msra.mxu0 %v913
        %937 = vmatmul.bf16.gmra.mxu0 %v853
        %v938 = vpop.f32.mrf.mxu0
        %v939 = vadd.f32 %v879, %v938
        %v940 = vpop.f32.mrf.mxu0
        %v941 = vadd.f32 %v879, %v940
        %942 = vmatmul.bf16.gmra.mxu0 %v854
        %v943 = vpop.f32.mrf.mxu0
        %v944 = vadd.f32 %v879, %v943
        %v945 = vpop.f32.mrf.mxu0
        %v946 = vadd.f32 %v879, %v945
        %947 = vmatmul.bf16.gmra.mxu0 %v855
        %v948 = vpop.f32.mrf.mxu0
        %v949 = vadd.f32 %v879, %v948
        %v950 = vpop.f32.mrf.mxu0
        %v951 = vadd.f32 %v879, %v950
        %952 = vmatmul.bf16.gmra.mxu0 %v856
        %v953 = vpop.f32.mrf.mxu0
        %v954 = vadd.f32 %v879, %v953
        %v955 = vpop.f32.mrf.mxu0
        %v956 = vadd.f32 %v879, %v955
        %957 = vmatmul.bf16.gmra.mxu0 %v857
        %v958 = vpop.f32.mrf.mxu0
        %v959 = vadd.f32 %v879, %v958
        %v960 = vpop.f32.mrf.mxu0
        %v961 = vadd.f32 %v879, %v960
        %962 = vmatmul.bf16.gmra.mxu0 %v858
        %v963 = vpop.f32.mrf.mxu0
        %v964 = vadd.f32 %v879, %v963
        %v965 = vpop.f32.mrf.mxu0
        %v966 = vadd.f32 %v879, %v965
        %967 = vmatmul.bf16.gmra.mxu0 %v859
        %v968 = vpop.f32.mrf.mxu0
        %v969 = vadd.f32 %v879, %v968
        %v970 = vpop.f32.mrf.mxu0
        %v971 = vadd.f32 %v879, %v970
        %972 = vmatmul.bf16.gmra.mxu0 %v860
        %v973 = vpop.f32.mrf.mxu0
        %v974 = vadd.f32 %v879, %v973
        %v975 = vpop.f32.mrf.mxu0
        %v976 = vadd.f32 %v879, %v975
        %977 = vdwg.mxu0
        %v978 = vmax.f32 %v939, 0.0
        %v979 = vmax.f32 %v941, 0.0
        %v980 = vmax.f32 %v944, 0.0
        %v981 = vmax.f32 %v946, 0.0
        %v982 = vmax.f32 %v949, 0.0
        %v983 = vmax.f32 %v951, 0.0
        %v984 = vmax.f32 %v954, 0.0
        %v985 = vmax.f32 %v956, 0.0
        %v986 = vmax.f32 %v959, 0.0
        %v987 = vmax.f32 %v961, 0.0
        %v988 = vmax.f32 %v964, 0.0
        %v989 = vmax.f32 %v966, 0.0
        %v990 = vmax.f32 %v969, 0.0
        %v991 = vmax.f32 %v971, 0.0
        %v992 = vmax.f32 %v974, 0.0
        %v993 = vmax.f32 %v976, 0.0
        %v994 = vpack.c.bf16 %v979, %v978
        %v995 = vpack.c.bf16 %v981, %v980
        %v996 = vpack.c.bf16 %v983, %v982
        %v997 = vpack.c.bf16 %v985, %v984
        %v998 = vpack.c.bf16 %v987, %v986
        %v999 = vpack.c.bf16 %v989, %v988
        %v1000 = vpack.c.bf16 %v991, %v990
        %v1001 = vpack.c.bf16 %v993, %v992
        %v1002 = vld [vmem:[#allocation10] sm:$0xf]
        %v1003 = vld [vmem:[#allocation10 + $0x4] sm:$0xf]
        %v1004 = vld [vmem:[#allocation10 + $0x8] sm:$0xf]
        %v1005 = vld [vmem:[#allocation10 + $0xc] sm:$0xf]
        %v1006 = vld [vmem:[#allocation10 + $0x10] sm:$0xf]
        %v1007 = vld [vmem:[#allocation10 + $0x14] sm:$0xf]
        %v1008 = vld [vmem:[#allocation10 + $0x18] sm:$0xf]
        %v1009 = vld [vmem:[#allocation10 + $0x1c] sm:$0xf]
        %v1010 = vld [vmem:[#allocation10 + $0x20] sm:$0xf]
        %v1011 = vld [vmem:[#allocation10 + $0x24] sm:$0xf]
        %v1012 = vld [vmem:[#allocation10 + $0x28] sm:$0xf]
        %v1013 = vld [vmem:[#allocation10 + $0x2c] sm:$0xf]
        %v1014 = vld [vmem:[#allocation10 + $0x30] sm:$0xf]
        %v1015 = vld [vmem:[#allocation10 + $0x34] sm:$0xf]
        %v1016 = vld [vmem:[#allocation10 + $0x38] sm:$0xf]
        %v1017 = vld [vmem:[#allocation10 + $0x3c] sm:$0xf]
        %v1018 = vld [vmem:[#allocation11] sm:$0x1]
        %v1020 = vperm.slane %v1018, 0
        %v1038 = vunpack.c.l.b16 %v1002
        %v1039 = vunpack.c.l.b16 %v1003
        %v1040 = vunpack.c.l.b16 %v1004
        %v1041 = vunpack.c.l.b16 %v1005
        %v1042 = vunpack.c.l.b16 %v1006
        %v1043 = vunpack.c.l.b16 %v1007
        %v1044 = vunpack.c.l.b16 %v1008
        %v1045 = vunpack.c.l.b16 %v1009
        %v1046 = vunpack.c.l.b16 %v1010
        %v1047 = vunpack.c.l.b16 %v1011
        %v1048 = vunpack.c.l.b16 %v1012
        %v1049 = vunpack.c.l.b16 %v1013
        %v1050 = vunpack.c.l.b16 %v1014
        %v1051 = vunpack.c.l.b16 %v1015
        %v1052 = vunpack.c.l.b16 %v1016
        %v1053 = vunpack.c.l.b16 %v1017
        %v1054 = vpack.c.b16 %v1039, %v1038
        %v1055 = vpack.c.b16 %v1041, %v1040
        %v1056 = vpack.c.b16 %v1043, %v1042
        %v1057 = vpack.c.b16 %v1045, %v1044
        %v1058 = vpack.c.b16 %v1047, %v1046
        %v1059 = vpack.c.b16 %v1049, %v1048
        %v1060 = vpack.c.b16 %v1051, %v1050
        %v1061 = vpack.c.b16 %v1053, %v1052
        %1070 = vmatpush.bf16.msra.mxu0 %v1061
        %1071 = vmatpush.bf16.msra.mxu0 %v1060
        %1072 = vmatpush.bf16.msra.mxu0 %v1059
        %1073 = vmatpush.bf16.msra.mxu0 %v1058
        %1074 = vmatpush.bf16.msra.mxu0 %v1057
        %1075 = vmatpush.bf16.msra.mxu0 %v1056
        %1076 = vmatpush.bf16.msra.mxu0 %v1055
        %1077 = vmatpush.bf16.msra.mxu0 %v1054
        %1078 = vmatmul.bf16.gmra.mxu0 %v994
        %v1079 = vpop.f32.mrf.mxu0
        %v1080 = vadd.f32 %v1020, %v1079
        %v1081 = vpop.f32.mrf.mxu0
        %v1082 = vadd.f32 %v1020, %v1081
        %1083 = vmatmul.bf16.gmra.mxu0 %v995
        %v1084 = vpop.f32.mrf.mxu0
        %v1085 = vadd.f32 %v1020, %v1084
        %v1086 = vpop.f32.mrf.mxu0
        %v1087 = vadd.f32 %v1020, %v1086
        %1088 = vmatmul.bf16.gmra.mxu0 %v996
        %v1089 = vpop.f32.mrf.mxu0
        %v1090 = vadd.f32 %v1020, %v1089
        %v1091 = vpop.f32.mrf.mxu0
        %v1092 = vadd.f32 %v1020, %v1091
        %1093 = vmatmul.bf16.gmra.mxu0 %v997
        %v1094 = vpop.f32.mrf.mxu0
        %v1095 = vadd.f32 %v1020, %v1094
        %v1096 = vpop.f32.mrf.mxu0
        %v1097 = vadd.f32 %v1020, %v1096
        %1098 = vmatmul.bf16.gmra.mxu0 %v998
        %v1099 = vpop.f32.mrf.mxu0
        %v1100 = vadd.f32 %v1020, %v1099
        %v1101 = vpop.f32.mrf.mxu0
        %v1102 = vadd.f32 %v1020, %v1101
        %1103 = vmatmul.bf16.gmra.mxu0 %v999
        %v1104 = vpop.f32.mrf.mxu0
        %v1105 = vadd.f32 %v1020, %v1104
        %v1106 = vpop.f32.mrf.mxu0
        %v1107 = vadd.f32 %v1020, %v1106
        %1108 = vmatmul.bf16.gmra.mxu0 %v1000
        %v1109 = vpop.f32.mrf.mxu0
        %v1110 = vadd.f32 %v1020, %v1109
        %v1111 = vpop.f32.mrf.mxu0
        %v1112 = vadd.f32 %v1020, %v1111
        %1113 = vmatmul.bf16.gmra.mxu0 %v1001
        %v1114 = vpop.f32.mrf.mxu0
        %v1115 = vadd.f32 %v1020, %v1114
        %v1116 = vpop.f32.mrf.mxu0
        %v1117 = vadd.f32 %v1020, %v1116
        %1118 = vdwg.mxu0
        %v1119 = vmax.f32 %v1080, 0.0
        %v1120 = vmax.f32 %v1082, 0.0
        %v1121 = vmax.f32 %v1085, 0.0
        %v1122 = vmax.f32 %v1087, 0.0
        %v1123 = vmax.f32 %v1090, 0.0
        %v1124 = vmax.f32 %v1092, 0.0
        %v1125 = vmax.f32 %v1095, 0.0
        %v1126 = vmax.f32 %v1097, 0.0
        %v1127 = vmax.f32 %v1100, 0.0
        %v1128 = vmax.f32 %v1102, 0.0
        %v1129 = vmax.f32 %v1105, 0.0
        %v1130 = vmax.f32 %v1107, 0.0
        %v1131 = vmax.f32 %v1110, 0.0
        %v1132 = vmax.f32 %v1112, 0.0
        %v1133 = vmax.f32 %v1115, 0.0
        %v1134 = vmax.f32 %v1117, 0.0
        %v1135 = vadd.f32 %v1119, %v1120
        %v1136 = vrot.slane %v1135, 4
        %v1137 = vadd.f32 %v1135, %v1136
        %v1138 = vrot.slane %v1137, 2
        %v1139 = vadd.f32 %v1137, %v1138
        %v1140 = vrot.slane %v1139, 1
        %v1141 = vadd.f32 %v1139, %v1140
        %v1142 = vadd.f32 %v1121, %v1122
        %v1143 = vrot.slane %v1142, 4
        %v1144 = vadd.f32 %v1142, %v1143
        %v1145 = vrot.slane %v1144, 2
        %v1146 = vadd.f32 %v1144, %v1145
        %v1147 = vrot.slane %v1146, 1
        %v1148 = vadd.f32 %v1146, %v1147
        %v1149 = vadd.f32 %v1123, %v1124
        %v1150 = vrot.slane %v1149, 4
        %v1151 = vadd.f32 %v1149, %v1150
        %v1152 = vrot.slane %v1151, 2
        %v1153 = vadd.f32 %v1151, %v1152
        %v1154 = vrot.slane %v1153, 1
        %v1155 = vadd.f32 %v1153, %v1154
        %v1156 = vadd.f32 %v1125, %v1126
        %v1157 = vrot.slane %v1156, 4
        %v1158 = vadd.f32 %v1156, %v1157
        %v1159 = vrot.slane %v1158, 2
        %v1160 = vadd.f32 %v1158, %v1159
        %v1161 = vrot.slane %v1160, 1
        %v1162 = vadd.f32 %v1160, %v1161
        %v1163 = vadd.f32 %v1127, %v1128
        %v1164 = vrot.slane %v1163, 4
        %v1165 = vadd.f32 %v1163, %v1164
        %v1166 = vrot.slane %v1165, 2
        %v1167 = vadd.f32 %v1165, %v1166
        %v1168 = vrot.slane %v1167, 1
        %v1169 = vadd.f32 %v1167, %v1168
        %v1170 = vadd.f32 %v1129, %v1130
        %v1171 = vrot.slane %v1170, 4
        %v1172 = vadd.f32 %v1170, %v1171
        %v1173 = vrot.slane %v1172, 2
        %v1174 = vadd.f32 %v1172, %v1173
        %v1175 = vrot.slane %v1174, 1
        %v1176 = vadd.f32 %v1174, %v1175
        %v1177 = vadd.f32 %v1131, %v1132
        %v1178 = vrot.slane %v1177, 4
        %v1179 = vadd.f32 %v1177, %v1178
        %v1180 = vrot.slane %v1179, 2
        %v1181 = vadd.f32 %v1179, %v1180
        %v1182 = vrot.slane %v1181, 1
        %v1183 = vadd.f32 %v1181, %v1182
        %v1184 = vadd.f32 %v1133, %v1134
        %v1185 = vrot.slane %v1184, 4
        %v1186 = vadd.f32 %v1184, %v1185
        %v1187 = vrot.slane %v1186, 2
        %v1188 = vadd.f32 %v1186, %v1187
        %v1189 = vrot.slane %v1188, 1
        %v1190 = vadd.f32 %v1188, %v1189
        %v1191 = vmul.f32 %v1119, %v1119
        %v1192 = vmul.f32 %v1120, %v1120
        %v1193 = vmul.f32 %v1121, %v1121
        %v1194 = vmul.f32 %v1122, %v1122
        %v1195 = vmul.f32 %v1123, %v1123
        %v1196 = vmul.f32 %v1124, %v1124
        %v1197 = vmul.f32 %v1125, %v1125
        %v1198 = vmul.f32 %v1126, %v1126
        %v1199 = vmul.f32 %v1127, %v1127
        %v1200 = vmul.f32 %v1128, %v1128
        %v1201 = vmul.f32 %v1129, %v1129
        %v1202 = vmul.f32 %v1130, %v1130
        %v1203 = vmul.f32 %v1131, %v1131
        %v1204 = vmul.f32 %v1132, %v1132
        %v1205 = vmul.f32 %v1133, %v1133
        %v1206 = vmul.f32 %v1134, %v1134
        %v1207 = vadd.f32 %v1191, %v1192
        %v1208 = vrot.slane %v1207, 4
        %v1209 = vadd.f32 %v1207, %v1208
        %v1210 = vrot.slane %v1209, 2
        %v1211 = vadd.f32 %v1209, %v1210
        %v1212 = vrot.slane %v1211, 1
        %v1213 = vadd.f32 %v1211, %v1212
        %v1214 = vadd.f32 %v1193, %v1194
        %v1215 = vrot.slane %v1214, 4
        %v1216 = vadd.f32 %v1214, %v1215
        %v1217 = vrot.slane %v1216, 2
        %v1218 = vadd.f32 %v1216, %v1217
        %v1219 = vrot.slane %v1218, 1
        %v1220 = vadd.f32 %v1218, %v1219
        %v1221 = vadd.f32 %v1195, %v1196
        %v1222 = vrot.slane %v1221, 4
        %v1223 = vadd.f32 %v1221, %v1222
        %v1224 = vrot.slane %v1223, 2
        %v1225 = vadd.f32 %v1223, %v1224
        %v1226 = vrot.slane %v1225, 1
        %v1227 = vadd.f32 %v1225, %v1226
        %v1228 = vadd.f32 %v1197, %v1198
        %v1229 = vrot.slane %v1228, 4
        %v1230 = vadd.f32 %v1228, %v1229
        %v1231 = vrot.slane %v1230, 2
        %v1232 = vadd.f32 %v1230, %v1231
        %v1233 = vrot.slane %v1232, 1
        %v1234 = vadd.f32 %v1232, %v1233
        %v1235 = vadd.f32 %v1199, %v1200
        %v1236 = vrot.slane %v1235, 4
        %v1237 = vadd.f32 %v1235, %v1236
        %v1238 = vrot.slane %v1237, 2
        %v1239 = vadd.f32 %v1237, %v1238
        %v1240 = vrot.slane %v1239, 1
        %v1241 = vadd.f32 %v1239, %v1240
        %v1242 = vadd.f32 %v1201, %v1202
        %v1243 = vrot.slane %v1242, 4
        %v1244 = vadd.f32 %v1242, %v1243
        %v1245 = vrot.slane %v1244, 2
        %v1246 = vadd.f32 %v1244, %v1245
        %v1247 = vrot.slane %v1246, 1
        %v1248 = vadd.f32 %v1246, %v1247
        %v1249 = vadd.f32 %v1203, %v1204
        %v1250 = vrot.slane %v1249, 4
        %v1251 = vadd.f32 %v1249, %v1250
        %v1252 = vrot.slane %v1251, 2
        %v1253 = vadd.f32 %v1251, %v1252
        %v1254 = vrot.slane %v1253, 1
        %v1255 = vadd.f32 %v1253, %v1254
        %v1256 = vadd.f32 %v1205, %v1206
        %v1257 = vrot.slane %v1256, 4
        %v1258 = vadd.f32 %v1256, %v1257
        %v1259 = vrot.slane %v1258, 2
        %v1260 = vadd.f32 %v1258, %v1259
        %v1261 = vrot.slane %v1260, 1
        %v1262 = vadd.f32 %v1260, %v1261
        %v1263 = vmul.f32 %v1141, 0.0625
        %v1264 = vmul.f32 %v1148, 0.0625
        %v1265 = vmul.f32 %v1155, 0.0625
        %v1266 = vmul.f32 %v1162, 0.0625
        %v1267 = vmul.f32 %v1169, 0.0625
        %v1268 = vmul.f32 %v1176, 0.0625
        %v1269 = vmul.f32 %v1183, 0.0625
        %v1270 = vmul.f32 %v1190, 0.0625
        %v1271 = vmul.f32 %v1213, 0.0625
        %v1272 = vmul.f32 %v1220, 0.0625
        %v1273 = vmul.f32 %v1227, 0.0625
        %v1274 = vmul.f32 %v1234, 0.0625
        %v1275 = vmul.f32 %v1241, 0.0625
        %v1276 = vmul.f32 %v1248, 0.0625
        %v1277 = vmul.f32 %v1255, 0.0625
        %v1278 = vmul.f32 %v1262, 0.0625
        %v1279 = vmul.f32 %v1263, %v1263
        %v1280 = vmul.f32 %v1264, %v1264
        %v1281 = vmul.f32 %v1265, %v1265
        %v1282 = vmul.f32 %v1266, %v1266
        %v1283 = vmul.f32 %v1267, %v1267
        %v1284 = vmul.f32 %v1268, %v1268
        %v1285 = vmul.f32 %v1269, %v1269
        %v1286 = vmul.f32 %v1270, %v1270
        %v1287 = vsub.f32 %v1271, %v1279
        %v1288 = vsub.f32 %v1272, %v1280
        %v1289 = vsub.f32 %v1273, %v1281
        %v1290 = vsub.f32 %v1274, %v1282
        %v1291 = vsub.f32 %v1275, %v1283
        %v1292 = vsub.f32 %v1276, %v1284
        %v1293 = vsub.f32 %v1277, %v1285
        %v1294 = vsub.f32 %v1278, %v1286
        %v1295 = vmax.f32 %v1287, 0.0
        %v1296 = vmax.f32 %v1288, 0.0
        %v1297 = vmax.f32 %v1289, 0.0
        %v1298 = vmax.f32 %v1290, 0.0
        %v1299 = vmax.f32 %v1291, 0.0
        %v1300 = vmax.f32 %v1292, 0.0
        %v1301 = vmax.f32 %v1293, 0.0
        %v1302 = vmax.f32 %v1294, 0.0
        %v1303 = vld [vmem:[%s6] sm:$0x1]
        %v1304 = vadd.f32 %v1295, 1e-05
        %v1305 = vadd.f32 %v1296, 1e-05
        %v1306 = vadd.f32 %v1297, 1e-05
        %v1307 = vadd.f32 %v1298, 1e-05
        %v1308 = vadd.f32 %v1299, 1e-05
        %v1309 = vadd.f32 %v1300, 1e-05
        %v1310 = vadd.f32 %v1301, 1e-05
        %v1311 = vadd.f32 %v1302, 1e-05
        %v1312 = vrsqrt.pop %v1304
        %v1313 = vmul.f32 %v1312, %v1304
        %v1314 = vmul.f32 %v1313, %v1312
        %v1315 = vmul.f32 0.5, %v1314
        %v1316 = vsub.f32 1.5, %v1315
        %v1317 = vmul.f32 %v1312, %v1316
        %vm1318 = vweird.f32 %v1304
        %vm1319 = vweird.f32 %v1312
        %vm1320 = vmor %vm1318, %vm1319
        %v1321 = vsel %vm1320, %v1312, %v1317
        %v1322 = vrsqrt.pop %v1305
        %v1323 = vmul.f32 %v1322, %v1305
        %v1324 = vmul.f32 %v1323, %v1322
        %v1325 = vmul.f32 0.5, %v1324
        %v1326 = vsub.f32 1.5, %v1325
        %v1327 = vmul.f32 %v1322, %v1326
        %vm1328 = vweird.f32 %v1305
        %vm1329 = vweird.f32 %v1322
        %vm1330 = vmor %vm1328, %vm1329
        %v1331 = vsel %vm1330, %v1322, %v1327
        %v1332 = vrsqrt.pop %v1306
        %v1333 = vmul.f32 %v1332, %v1306
        %v1334 = vmul.f32 %v1333, %v1332
        %v1335 = vmul.f32 0.5, %v1334
        %v1336 = vsub.f32 1.5, %v1335
        %v1337 = vmul.f32 %v1332, %v1336
        %vm1338 = vweird.f32 %v1306
        %vm1339 = vweird.f32 %v1332
        %vm1340 = vmor %vm1338, %vm1339
        %v1341 = vsel %vm1340, %v1332, %v1337
        %v1342 = vrsqrt.pop %v1307
        %v1343 = vmul.f32 %v1342, %v1307
        %v1344 = vmul.f32 %v1343, %v1342
        %v1345 = vmul.f32 0.5, %v1344
        %v1346 = vsub.f32 1.5, %v1345
        %v1347 = vmul.f32 %v1342, %v1346
        %vm1348 = vweird.f32 %v1307
        %vm1349 = vweird.f32 %v1342
        %vm1350 = vmor %vm1348, %vm1349
        %v1351 = vsel %vm1350, %v1342, %v1347
        %v1352 = vrsqrt.pop %v1308
        %v1353 = vmul.f32 %v1352, %v1308
        %v1354 = vmul.f32 %v1353, %v1352
        %v1355 = vmul.f32 0.5, %v1354
        %v1356 = vsub.f32 1.5, %v1355
        %v1357 = vmul.f32 %v1352, %v1356
        %vm1358 = vweird.f32 %v1308
        %vm1359 = vweird.f32 %v1352
        %vm1360 = vmor %vm1358, %vm1359
        %v1361 = vsel %vm1360, %v1352, %v1357
        %v1362 = vrsqrt.pop %v1309
        %v1363 = vmul.f32 %v1362, %v1309
        %v1364 = vmul.f32 %v1363, %v1362
        %v1365 = vmul.f32 0.5, %v1364
        %v1366 = vsub.f32 1.5, %v1365
        %v1367 = vmul.f32 %v1362, %v1366
        %vm1368 = vweird.f32 %v1309
        %vm1369 = vweird.f32 %v1362
        %vm1370 = vmor %vm1368, %vm1369
        %v1371 = vsel %vm1370, %v1362, %v1367
        %v1372 = vrsqrt.pop %v1310
        %v1373 = vmul.f32 %v1372, %v1310
        %v1374 = vmul.f32 %v1373, %v1372
        %v1375 = vmul.f32 0.5, %v1374
        %v1376 = vsub.f32 1.5, %v1375
        %v1377 = vmul.f32 %v1372, %v1376
        %vm1378 = vweird.f32 %v1310
        %vm1379 = vweird.f32 %v1372
        %vm1380 = vmor %vm1378, %vm1379
        %v1381 = vsel %vm1380, %v1372, %v1377
        %v1382 = vrsqrt.pop %v1311
        %v1383 = vmul.f32 %v1382, %v1311
        %v1384 = vmul.f32 %v1383, %v1382
        %v1385 = vmul.f32 0.5, %v1384
        %v1386 = vsub.f32 1.5, %v1385
        %v1387 = vmul.f32 %v1382, %v1386
        %vm1388 = vweird.f32 %v1311
        %vm1389 = vweird.f32 %v1382
        %vm1390 = vmor %vm1388, %vm1389
        %v1391 = vsel %vm1390, %v1382, %v1387
        %v1392 = vmul.f32 %v1303, %v1321
        %v1393 = vmul.f32 %v1303, %v1331
        %v1394 = vmul.f32 %v1303, %v1341
        %v1395 = vmul.f32 %v1303, %v1351
        %v1396 = vmul.f32 %v1303, %v1361
        %v1397 = vmul.f32 %v1303, %v1371
        %v1398 = vmul.f32 %v1303, %v1381
        %v1399 = vmul.f32 %v1303, %v1391
        %v1400 = vld [vmem:[#allocation13] sm:$0x1]
        %v1401 = vmul.f32 %v1263, %v1392
        %v1402 = vmul.f32 %v1264, %v1393
        %v1403 = vmul.f32 %v1265, %v1394
        %v1404 = vmul.f32 %v1266, %v1395
        %v1405 = vmul.f32 %v1267, %v1396
        %v1406 = vmul.f32 %v1268, %v1397
        %v1407 = vmul.f32 %v1269, %v1398
        %v1408 = vmul.f32 %v1270, %v1399
        %v1409 = vsub.f32 %v1400, %v1401
        %v1410 = vsub.f32 %v1400, %v1402
        %v1411 = vsub.f32 %v1400, %v1403
        %v1412 = vsub.f32 %v1400, %v1404
        %v1413 = vsub.f32 %v1400, %v1405
        %v1414 = vsub.f32 %v1400, %v1406
        %v1415 = vsub.f32 %v1400, %v1407
        %v1416 = vsub.f32 %v1400, %v1408
        %v1425 = vperm.slane %v1392, 0
        %v1426 = vperm.slane %v1393, 0
        %v1427 = vperm.slane %v1394, 0
        %v1428 = vperm.slane %v1395, 0
        %v1429 = vperm.slane %v1396, 0
        %v1430 = vperm.slane %v1397, 0
        %v1431 = vperm.slane %v1398, 0
        %v1432 = vperm.slane %v1399, 0
        %v1441 = vmul.f32 %v1119, %v1425
        %v1442 = vmul.f32 %v1120, %v1425
        %v1443 = vmul.f32 %v1121, %v1426
        %v1444 = vmul.f32 %v1122, %v1426
        %v1445 = vmul.f32 %v1123, %v1427
        %v1446 = vmul.f32 %v1124, %v1427
        %v1447 = vmul.f32 %v1125, %v1428
        %v1448 = vmul.f32 %v1126, %v1428
        %v1449 = vmul.f32 %v1127, %v1429
        %v1450 = vmul.f32 %v1128, %v1429
        %v1451 = vmul.f32 %v1129, %v1430
        %v1452 = vmul.f32 %v1130, %v1430
        %v1453 = vmul.f32 %v1131, %v1431
        %v1454 = vmul.f32 %v1132, %v1431
        %v1455 = vmul.f32 %v1133, %v1432
        %v1456 = vmul.f32 %v1134, %v1432
        %v1465 = vperm.slane %v1409, 0
        %v1466 = vperm.slane %v1410, 0
        %v1467 = vperm.slane %v1411, 0
        %v1468 = vperm.slane %v1412, 0
        %v1469 = vperm.slane %v1413, 0
        %v1470 = vperm.slane %v1414, 0
        %v1471 = vperm.slane %v1415, 0
        %v1472 = vperm.slane %v1416, 0
        %v1481 = vadd.f32 %v1441, %v1465
        %v1482 = vadd.f32 %v1442, %v1465
        %v1483 = vadd.f32 %v1443, %v1466
        %v1484 = vadd.f32 %v1444, %v1466
        %v1485 = vadd.f32 %v1445, %v1467
        %v1486 = vadd.f32 %v1446, %v1467
        %v1487 = vadd.f32 %v1447, %v1468
        %v1488 = vadd.f32 %v1448, %v1468
        %v1489 = vadd.f32 %v1449, %v1469
        %v1490 = vadd.f32 %v1450, %v1469
        %v1491 = vadd.f32 %v1451, %v1470
        %v1492 = vadd.f32 %v1452, %v1470
        %v1493 = vadd.f32 %v1453, %v1471
        %v1494 = vadd.f32 %v1454, %v1471
        %v1495 = vadd.f32 %v1455, %v1472
        %v1496 = vadd.f32 %v1456, %v1472
        %v1497 = vpack.c.bf16 %v1481, %v1481
        %v1498 = vpack.c.bf16 %v1482, %v1482
        %v1499 = vpack.c.bf16 %v1483, %v1483
        %v1500 = vpack.c.bf16 %v1484, %v1484
        %v1501 = vpack.c.bf16 %v1485, %v1485
        %v1502 = vpack.c.bf16 %v1486, %v1486
        %v1503 = vpack.c.bf16 %v1487, %v1487
        %v1504 = vpack.c.bf16 %v1488, %v1488
        %v1505 = vpack.c.bf16 %v1489, %v1489
        %v1506 = vpack.c.bf16 %v1490, %v1490
        %v1507 = vpack.c.bf16 %v1491, %v1491
        %v1508 = vpack.c.bf16 %v1492, %v1492
        %v1509 = vpack.c.bf16 %v1493, %v1493
        %v1510 = vpack.c.bf16 %v1494, %v1494
        %v1511 = vpack.c.bf16 %v1495, %v1495
        %v1512 = vpack.c.bf16 %v1496, %v1496
        %v1515 = vunpack.c.l.b16 %v1497
        %v1516 = vunpack.c.l.b16 %v1498
        %v1517 = vpack.c.b16 %v1516, %v1515
        %1519 = vmatpush.bf16.msra.mxu0 0
        %1520 = vmatpush.bf16.msra.mxu0 0
        %1521 = vmatpush.bf16.msra.mxu0 0
        %1522 = vmatpush.bf16.msra.mxu0 0
        %1523 = vmatpush.bf16.msra.mxu0 0
        %1524 = vmatpush.bf16.msra.mxu0 0
        %1525 = vmatpush.bf16.msra.mxu0 0
        %1526 = vmatpush.bf16.msra.mxu0 %v1517
        %1527 = vmatmul.bf16.gmra.mxu0 %v641
        %v1528 = vpop.f32.mrf.mxu0
        %v1529 = vadd.f32 0.0, %v1528
        %v1530 = vpop.f32.mrf.mxu0
        %v1531 = vadd.f32 0.0, %v1530
        %1532 = vdwg.mxu0
        %v1535 = vunpack.c.l.b16 %v1499
        %v1536 = vunpack.c.l.b16 %v1500
        %v1537 = vpack.c.b16 %v1536, %v1535
        %1539 = vmatpush.bf16.msra.mxu0 0
        %1540 = vmatpush.bf16.msra.mxu0 0
        %1541 = vmatpush.bf16.msra.mxu0 0
        %1542 = vmatpush.bf16.msra.mxu0 0
        %1543 = vmatpush.bf16.msra.mxu0 0
        %1544 = vmatpush.bf16.msra.mxu0 0
        %1545 = vmatpush.bf16.msra.mxu0 0
        %1546 = vmatpush.bf16.msra.mxu0 %v1537
        %1547 = vmatmul.bf16.gmra.mxu0 %v669
        %v1548 = vpop.f32.mrf.mxu0
        %v1549 = vadd.f32 0.0, %v1548
        %v1550 = vpop.f32.mrf.mxu0
        %v1551 = vadd.f32 0.0, %v1550
        %1552 = vdwg.mxu0
        %v1555 = vunpack.c.l.b16 %v1501
        %v1556 = vunpack.c.l.b16 %v1502
        %v1557 = vpack.c.b16 %v1556, %v1555
        %1559 = vmatpush.bf16.msra.mxu0 0
        %1560 = vmatpush.bf16.msra.mxu0 0
        %1561 = vmatpush.bf16.msra.mxu0 0
        %1562 = vmatpush.bf16.msra.mxu0 0
        %1563 = vmatpush.bf16.msra.mxu0 0
        %1564 = vmatpush.bf16.msra.mxu0 0
        %1565 = vmatpush.bf16.msra.mxu0 0
        %1566 = vmatpush.bf16.msra.mxu0 %v1557
        %1567 = vmatmul.bf16.gmra.mxu0 %v697
        %v1568 = vpop.f32.mrf.mxu0
        %v1569 = vadd.f32 0.0, %v1568
        %v1570 = vpop.f32.mrf.mxu0
        %v1571 = vadd.f32 0.0, %v1570
        %1572 = vdwg.mxu0
        %v1575 = vunpack.c.l.b16 %v1503
        %v1576 = vunpack.c.l.b16 %v1504
        %v1577 = vpack.c.b16 %v1576, %v1575
        %1579 = vmatpush.bf16.msra.mxu0 0
        %1580 = vmatpush.bf16.msra.mxu0 0
        %1581 = vmatpush.bf16.msra.mxu0 0
        %1582 = vmatpush.bf16.msra.mxu0 0
        %1583 = vmatpush.bf16.msra.mxu0 0
        %1584 = vmatpush.bf16.msra.mxu0 0
        %1585 = vmatpush.bf16.msra.mxu0 0
        %1586 = vmatpush.bf16.msra.mxu0 %v1577
        %1587 = vmatmul.bf16.gmra.mxu0 %v725
        %v1588 = vpop.f32.mrf.mxu0
        %v1589 = vadd.f32 0.0, %v1588
        %v1590 = vpop.f32.mrf.mxu0
        %v1591 = vadd.f32 0.0, %v1590
        %1592 = vdwg.mxu0
        %v1595 = vunpack.c.l.b16 %v1505
        %v1596 = vunpack.c.l.b16 %v1506
        %v1597 = vpack.c.b16 %v1596, %v1595
        %1599 = vmatpush.bf16.msra.mxu0 0
        %1600 = vmatpush.bf16.msra.mxu0 0
        %1601 = vmatpush.bf16.msra.mxu0 0
        %1602 = vmatpush.bf16.msra.mxu0 0
        %1603 = vmatpush.bf16.msra.mxu0 0
        %1604 = vmatpush.bf16.msra.mxu0 0
        %1605 = vmatpush.bf16.msra.mxu0 0
        %1606 = vmatpush.bf16.msra.mxu0 %v1597
        %1607 = vmatmul.bf16.gmra.mxu0 %v753
        %v1608 = vpop.f32.mrf.mxu0
        %v1609 = vadd.f32 0.0, %v1608
        %v1610 = vpop.f32.mrf.mxu0
        %v1611 = vadd.f32 0.0, %v1610
        %1612 = vdwg.mxu0
        %v1615 = vunpack.c.l.b16 %v1507
        %v1616 = vunpack.c.l.b16 %v1508
        %v1617 = vpack.c.b16 %v1616, %v1615
        %1619 = vmatpush.bf16.msra.mxu0 0
        %1620 = vmatpush.bf16.msra.mxu0 0
        %1621 = vmatpush.bf16.msra.mxu0 0
        %1622 = vmatpush.bf16.msra.mxu0 0
        %1623 = vmatpush.bf16.msra.mxu0 0
        %1624 = vmatpush.bf16.msra.mxu0 0
        %1625 = vmatpush.bf16.msra.mxu0 0
        %1626 = vmatpush.bf16.msra.mxu0 %v1617
        %1627 = vmatmul.bf16.gmra.mxu0 %v781
        %v1628 = vpop.f32.mrf.mxu0
        %v1629 = vadd.f32 0.0, %v1628
        %v1630 = vpop.f32.mrf.mxu0
        %v1631 = vadd.f32 0.0, %v1630
        %1632 = vdwg.mxu0
        %v1635 = vunpack.c.l.b16 %v1509
        %v1636 = vunpack.c.l.b16 %v1510
        %v1637 = vpack.c.b16 %v1636, %v1635
        %1639 = vmatpush.bf16.msra.mxu0 0
        %1640 = vmatpush.bf16.msra.mxu0 0
        %1641 = vmatpush.bf16.msra.mxu0 0
        %1642 = vmatpush.bf16.msra.mxu0 0
        %1643 = vmatpush.bf16.msra.mxu0 0
        %1644 = vmatpush.bf16.msra.mxu0 0
        %1645 = vmatpush.bf16.msra.mxu0 0
        %1646 = vmatpush.bf16.msra.mxu0 %v1637
        %1647 = vmatmul.bf16.gmra.mxu0 %v809
        %v1648 = vpop.f32.mrf.mxu0
        %v1649 = vadd.f32 0.0, %v1648
        %v1650 = vpop.f32.mrf.mxu0
        %v1651 = vadd.f32 0.0, %v1650
        %1652 = vdwg.mxu0
        %v1655 = vunpack.c.l.b16 %v1511
        %v1656 = vunpack.c.l.b16 %v1512
        %v1657 = vpack.c.b16 %v1656, %v1655
        %1659 = vmatpush.bf16.msra.mxu0 0
        %1660 = vmatpush.bf16.msra.mxu0 0
        %1661 = vmatpush.bf16.msra.mxu0 0
        %1662 = vmatpush.bf16.msra.mxu0 0
        %1663 = vmatpush.bf16.msra.mxu0 0
        %1664 = vmatpush.bf16.msra.mxu0 0
        %1665 = vmatpush.bf16.msra.mxu0 0
        %1666 = vmatpush.bf16.msra.mxu0 %v1657
        %1667 = vmatmul.bf16.gmra.mxu0 %v837
        %v1668 = vpop.f32.mrf.mxu0
        %v1669 = vadd.f32 0.0, %v1668
        %v1670 = vpop.f32.mrf.mxu0
        %v1671 = vadd.f32 0.0, %v1670
        %1672 = vdwg.mxu0
        %v1673 = vpack.c.bf16 %v1531, %v1529
        %v1674 = vpack.c.bf16 %v1551, %v1549
        %v1675 = vpack.c.bf16 %v1571, %v1569
        %v1676 = vpack.c.bf16 %v1591, %v1589
        %v1677 = vpack.c.bf16 %v1611, %v1609
        %v1678 = vpack.c.bf16 %v1631, %v1629
        %v1679 = vpack.c.bf16 %v1651, %v1649
        %v1680 = vpack.c.bf16 %v1671, %v1669
        %s1681 = scalar_lea.vmem [#allocation7], 64
        %v1682 = vld [vmem:[%s1681] sm:$0xf]
        %v1683 = vld [vmem:[%s1681 + $0x4] sm:$0xf]
        %v1684 = vld [vmem:[%s1681 + $0x8] sm:$0xf]
        %v1685 = vld [vmem:[%s1681 + $0xc] sm:$0xf]
        %v1686 = vld [vmem:[%s1681 + $0x10] sm:$0xf]
        %v1687 = vld [vmem:[%s1681 + $0x14] sm:$0xf]
        %v1688 = vld [vmem:[%s1681 + $0x18] sm:$0xf]
        %v1689 = vld [vmem:[%s1681 + $0x1c] sm:$0xf]
        %v1690 = vld [vmem:[%s1681 + $0x20] sm:$0xf]
        %v1691 = vld [vmem:[%s1681 + $0x24] sm:$0xf]
        %v1692 = vld [vmem:[%s1681 + $0x28] sm:$0xf]
        %v1693 = vld [vmem:[%s1681 + $0x2c] sm:$0xf]
        %v1694 = vld [vmem:[%s1681 + $0x30] sm:$0xf]
        %v1695 = vld [vmem:[%s1681 + $0x34] sm:$0xf]
        %v1696 = vld [vmem:[%s1681 + $0x38] sm:$0xf]
        %v1697 = vld [vmem:[%s1681 + $0x3c] sm:$0xf]
        %s1698 = scalar_lea.vmem [#allocation8], 1
        %v1699 = vld [vmem:[%s1698] sm:$0x1]
        %v1701 = vperm.slane %v1699, 0
        %v1719 = vunpack.c.l.b16 %v1682
        %v1720 = vunpack.c.l.b16 %v1683
        %v1721 = vunpack.c.l.b16 %v1684
        %v1722 = vunpack.c.l.b16 %v1685
        %v1723 = vunpack.c.l.b16 %v1686
        %v1724 = vunpack.c.l.b16 %v1687
        %v1725 = vunpack.c.l.b16 %v1688
        %v1726 = vunpack.c.l.b16 %v1689
        %v1727 = vunpack.c.l.b16 %v1690
        %v1728 = vunpack.c.l.b16 %v1691
        %v1729 = vunpack.c.l.b16 %v1692
        %v1730 = vunpack.c.l.b16 %v1693
        %v1731 = vunpack.c.l.b16 %v1694
        %v1732 = vunpack.c.l.b16 %v1695
        %v1733 = vunpack.c.l.b16 %v1696
        %v1734 = vunpack.c.l.b16 %v1697
        %v1735 = vpack.c.b16 %v1720, %v1719
        %v1736 = vpack.c.b16 %v1722, %v1721
        %v1737 = vpack.c.b16 %v1724, %v1723
        %v1738 = vpack.c.b16 %v1726, %v1725
        %v1739 = vpack.c.b16 %v1728, %v1727
        %v1740 = vpack.c.b16 %v1730, %v1729
        %v1741 = vpack.c.b16 %v1732, %v1731
        %v1742 = vpack.c.b16 %v1734, %v1733
        %1751 = vmatpush.bf16.msra.mxu0 %v1742
        %1752 = vmatpush.bf16.msra.mxu0 %v1741
        %1753 = vmatpush.bf16.msra.mxu0 %v1740
        %1754 = vmatpush.bf16.msra.mxu0 %v1739
        %1755 = vmatpush.bf16.msra.mxu0 %v1738
        %1756 = vmatpush.bf16.msra.mxu0 %v1737
        %1757 = vmatpush.bf16.msra.mxu0 %v1736
        %1758 = vmatpush.bf16.msra.mxu0 %v1735
        %1759 = vmatmul.bf16.gmra.mxu0 %v1673
        %v1760 = vpop.f32.mrf.mxu0
        %v1761 = vadd.f32 %v1701, %v1760
        %v1762 = vpop.f32.mrf.mxu0
        %v1763 = vadd.f32 %v1701, %v1762
        %1764 = vmatmul.bf16.gmra.mxu0 %v1674
        %v1765 = vpop.f32.mrf.mxu0
        %v1766 = vadd.f32 %v1701, %v1765
        %v1767 = vpop.f32.mrf.mxu0
        %v1768 = vadd.f32 %v1701, %v1767
        %1769 = vmatmul.bf16.gmra.mxu0 %v1675
        %v1770 = vpop.f32.mrf.mxu0
        %v1771 = vadd.f32 %v1701, %v1770
        %v1772 = vpop.f32.mrf.mxu0
        %v1773 = vadd.f32 %v1701, %v1772
        %1774 = vmatmul.bf16.gmra.mxu0 %v1676
        %v1775 = vpop.f32.mrf.mxu0
        %v1776 = vadd.f32 %v1701, %v1775
        %v1777 = vpop.f32.mrf.mxu0
        %v1778 = vadd.f32 %v1701, %v1777
        %1779 = vmatmul.bf16.gmra.mxu0 %v1677
        %v1780 = vpop.f32.mrf.mxu0
        %v1781 = vadd.f32 %v1701, %v1780
        %v1782 = vpop.f32.mrf.mxu0
        %v1783 = vadd.f32 %v1701, %v1782
        %1784 = vmatmul.bf16.gmra.mxu0 %v1678
        %v1785 = vpop.f32.mrf.mxu0
        %v1786 = vadd.f32 %v1701, %v1785
        %v1787 = vpop.f32.mrf.mxu0
        %v1788 = vadd.f32 %v1701, %v1787
        %1789 = vmatmul.bf16.gmra.mxu0 %v1679
        %v1790 = vpop.f32.mrf.mxu0
        %v1791 = vadd.f32 %v1701, %v1790
        %v1792 = vpop.f32.mrf.mxu0
        %v1793 = vadd.f32 %v1701, %v1792
        %1794 = vmatmul.bf16.gmra.mxu0 %v1680
        %v1795 = vpop.f32.mrf.mxu0
        %v1796 = vadd.f32 %v1701, %v1795
        %v1797 = vpop.f32.mrf.mxu0
        %v1798 = vadd.f32 %v1701, %v1797
        %1799 = vdwg.mxu0
        %v1800 = vmax.f32 %v1761, 0.0
        %v1801 = vmax.f32 %v1763, 0.0
        %v1802 = vmax.f32 %v1766, 0.0
        %v1803 = vmax.f32 %v1768, 0.0
        %v1804 = vmax.f32 %v1771, 0.0
        %v1805 = vmax.f32 %v1773, 0.0
        %v1806 = vmax.f32 %v1776, 0.0
        %v1807 = vmax.f32 %v1778, 0.0
        %v1808 = vmax.f32 %v1781, 0.0
        %v1809 = vmax.f32 %v1783, 0.0
        %v1810 = vmax.f32 %v1786, 0.0
        %v1811 = vmax.f32 %v1788, 0.0
        %v1812 = vmax.f32 %v1791, 0.0
        %v1813 = vmax.f32 %v1793, 0.0
        %v1814 = vmax.f32 %v1796, 0.0
        %v1815 = vmax.f32 %v1798, 0.0
        %v1816 = vpack.c.bf16 %v1801, %v1800
        %v1817 = vpack.c.bf16 %v1803, %v1802
        %v1818 = vpack.c.bf16 %v1805, %v1804
        %v1819 = vpack.c.bf16 %v1807, %v1806
        %v1820 = vpack.c.bf16 %v1809, %v1808
        %v1821 = vpack.c.bf16 %v1811, %v1810
        %v1822 = vpack.c.bf16 %v1813, %v1812
        %v1823 = vpack.c.bf16 %v1815, %v1814
        %s1824 = scalar_lea.vmem [#allocation10], 64
        %v1825 = vld [vmem:[%s1824] sm:$0xf]
        %v1826 = vld [vmem:[%s1824 + $0x4] sm:$0xf]
        %v1827 = vld [vmem:[%s1824 + $0x8] sm:$0xf]
        %v1828 = vld [vmem:[%s1824 + $0xc] sm:$0xf]
        %v1829 = vld [vmem:[%s1824 + $0x10] sm:$0xf]
        %v1830 = vld [vmem:[%s1824 + $0x14] sm:$0xf]
        %v1831 = vld [vmem:[%s1824 + $0x18] sm:$0xf]
        %v1832 = vld [vmem:[%s1824 + $0x1c] sm:$0xf]
        %v1833 = vld [vmem:[%s1824 + $0x20] sm:$0xf]
        %v1834 = vld [vmem:[%s1824 + $0x24] sm:$0xf]
        %v1835 = vld [vmem:[%s1824 + $0x28] sm:$0xf]
        %v1836 = vld [vmem:[%s1824 + $0x2c] sm:$0xf]
        %v1837 = vld [vmem:[%s1824 + $0x30] sm:$0xf]
        %v1838 = vld [vmem:[%s1824 + $0x34] sm:$0xf]
        %v1839 = vld [vmem:[%s1824 + $0x38] sm:$0xf]
        %v1840 = vld [vmem:[%s1824 + $0x3c] sm:$0xf]
        %s1841 = scalar_lea.vmem [#allocation11], 1
        %v1842 = vld [vmem:[%s1841] sm:$0x1]
        %v1844 = vperm.slane %v1842, 0
        %v1862 = vunpack.c.l.b16 %v1825
        %v1863 = vunpack.c.l.b16 %v1826
        %v1864 = vunpack.c.l.b16 %v1827
        %v1865 = vunpack.c.l.b16 %v1828
        %v1866 = vunpack.c.l.b16 %v1829
        %v1867 = vunpack.c.l.b16 %v1830
        %v1868 = vunpack.c.l.b16 %v1831
        %v1869 = vunpack.c.l.b16 %v1832
        %v1870 = vunpack.c.l.b16 %v1833
        %v1871 = vunpack.c.l.b16 %v1834
        %v1872 = vunpack.c.l.b16 %v1835
        %v1873 = vunpack.c.l.b16 %v1836
        %v1874 = vunpack.c.l.b16 %v1837
        %v1875 = vunpack.c.l.b16 %v1838
        %v1876 = vunpack.c.l.b16 %v1839
        %v1877 = vunpack.c.l.b16 %v1840
        %v1878 = vpack.c.b16 %v1863, %v1862
        %v1879 = vpack.c.b16 %v1865, %v1864
        %v1880 = vpack.c.b16 %v1867, %v1866
        %v1881 = vpack.c.b16 %v1869, %v1868
        %v1882 = vpack.c.b16 %v1871, %v1870
        %v1883 = vpack.c.b16 %v1873, %v1872
        %v1884 = vpack.c.b16 %v1875, %v1874
        %v1885 = vpack.c.b16 %v1877, %v1876
        %1894 = vmatpush.bf16.msra.mxu0 %v1885
        %1895 = vmatpush.bf16.msra.mxu0 %v1884
        %1896 = vmatpush.bf16.msra.mxu0 %v1883
        %1897 = vmatpush.bf16.msra.mxu0 %v1882
        %1898 = vmatpush.bf16.msra.mxu0 %v1881
        %1899 = vmatpush.bf16.msra.mxu0 %v1880
        %1900 = vmatpush.bf16.msra.mxu0 %v1879
        %1901 = vmatpush.bf16.msra.mxu0 %v1878
        %1902 = vmatmul.bf16.gmra.mxu0 %v1816
        %v1903 = vpop.f32.mrf.mxu0
        %v1904 = vadd.f32 %v1844, %v1903
        %v1905 = vpop.f32.mrf.mxu0
        %v1906 = vadd.f32 %v1844, %v1905
        %1907 = vmatmul.bf16.gmra.mxu0 %v1817
        %v1908 = vpop.f32.mrf.mxu0
        %v1909 = vadd.f32 %v1844, %v1908
        %v1910 = vpop.f32.mrf.mxu0
        %v1911 = vadd.f32 %v1844, %v1910
        %1912 = vmatmul.bf16.gmra.mxu0 %v1818
        %v1913 = vpop.f32.mrf.mxu0
        %v1914 = vadd.f32 %v1844, %v1913
        %v1915 = vpop.f32.mrf.mxu0
        %v1916 = vadd.f32 %v1844, %v1915
        %1917 = vmatmul.bf16.gmra.mxu0 %v1819
        %v1918 = vpop.f32.mrf.mxu0
        %v1919 = vadd.f32 %v1844, %v1918
        %v1920 = vpop.f32.mrf.mxu0
        %v1921 = vadd.f32 %v1844, %v1920
        %1922 = vmatmul.bf16.gmra.mxu0 %v1820
        %v1923 = vpop.f32.mrf.mxu0
        %v1924 = vadd.f32 %v1844, %v1923
        %v1925 = vpop.f32.mrf.mxu0
        %v1926 = vadd.f32 %v1844, %v1925
        %1927 = vmatmul.bf16.gmra.mxu0 %v1821
        %v1928 = vpop.f32.mrf.mxu0
        %v1929 = vadd.f32 %v1844, %v1928
        %v1930 = vpop.f32.mrf.mxu0
        %v1931 = vadd.f32 %v1844, %v1930
        %1932 = vmatmul.bf16.gmra.mxu0 %v1822
        %v1933 = vpop.f32.mrf.mxu0
        %v1934 = vadd.f32 %v1844, %v1933
        %v1935 = vpop.f32.mrf.mxu0
        %v1936 = vadd.f32 %v1844, %v1935
        %1937 = vmatmul.bf16.gmra.mxu0 %v1823
        %v1938 = vpop.f32.mrf.mxu0
        %v1939 = vadd.f32 %v1844, %v1938
        %v1940 = vpop.f32.mrf.mxu0
        %v1941 = vadd.f32 %v1844, %v1940
        %1942 = vdwg.mxu0
        %v1943 = vmax.f32 %v1904, 0.0
        %v1944 = vmax.f32 %v1906, 0.0
        %v1945 = vmax.f32 %v1909, 0.0
        %v1946 = vmax.f32 %v1911, 0.0
        %v1947 = vmax.f32 %v1914, 0.0
        %v1948 = vmax.f32 %v1916, 0.0
        %v1949 = vmax.f32 %v1919, 0.0
        %v1950 = vmax.f32 %v1921, 0.0
        %v1951 = vmax.f32 %v1924, 0.0
        %v1952 = vmax.f32 %v1926, 0.0
        %v1953 = vmax.f32 %v1929, 0.0
        %v1954 = vmax.f32 %v1931, 0.0
        %v1955 = vmax.f32 %v1934, 0.0
        %v1956 = vmax.f32 %v1936, 0.0
        %v1957 = vmax.f32 %v1939, 0.0
        %v1958 = vmax.f32 %v1941, 0.0
        %v1959 = vadd.f32 %v1943, %v1944
        %v1960 = vrot.slane %v1959, 4
        %v1961 = vadd.f32 %v1959, %v1960
        %v1962 = vrot.slane %v1961, 2
        %v1963 = vadd.f32 %v1961, %v1962
        %v1964 = vrot.slane %v1963, 1
        %v1965 = vadd.f32 %v1963, %v1964
        %v1966 = vadd.f32 %v1945, %v1946
        %v1967 = vrot.slane %v1966, 4
        %v1968 = vadd.f32 %v1966, %v1967
        %v1969 = vrot.slane %v1968, 2
        %v1970 = vadd.f32 %v1968, %v1969
        %v1971 = vrot.slane %v1970, 1
        %v1972 = vadd.f32 %v1970, %v1971
        %v1973 = vadd.f32 %v1947, %v1948
        %v1974 = vrot.slane %v1973, 4
        %v1975 = vadd.f32 %v1973, %v1974
        %v1976 = vrot.slane %v1975, 2
        %v1977 = vadd.f32 %v1975, %v1976
        %v1978 = vrot.slane %v1977, 1
        %v1979 = vadd.f32 %v1977, %v1978
        %v1980 = vadd.f32 %v1949, %v1950
        %v1981 = vrot.slane %v1980, 4
        %v1982 = vadd.f32 %v1980, %v1981
        %v1983 = vrot.slane %v1982, 2
        %v1984 = vadd.f32 %v1982, %v1983
        %v1985 = vrot.slane %v1984, 1
        %v1986 = vadd.f32 %v1984, %v1985
        %v1987 = vadd.f32 %v1951, %v1952
        %v1988 = vrot.slane %v1987, 4
        %v1989 = vadd.f32 %v1987, %v1988
        %v1990 = vrot.slane %v1989, 2
        %v1991 = vadd.f32 %v1989, %v1990
        %v1992 = vrot.slane %v1991, 1
        %v1993 = vadd.f32 %v1991, %v1992
        %v1994 = vadd.f32 %v1953, %v1954
        %v1995 = vrot.slane %v1994, 4
        %v1996 = vadd.f32 %v1994, %v1995
        %v1997 = vrot.slane %v1996, 2
        %v1998 = vadd.f32 %v1996, %v1997
        %v1999 = vrot.slane %v1998, 1
        %v2000 = vadd.f32 %v1998, %v1999
        %v2001 = vadd.f32 %v1955, %v1956
        %v2002 = vrot.slane %v2001, 4
        %v2003 = vadd.f32 %v2001, %v2002
        %v2004 = vrot.slane %v2003, 2
        %v2005 = vadd.f32 %v2003, %v2004
        %v2006 = vrot.slane %v2005, 1
        %v2007 = vadd.f32 %v2005, %v2006
        %v2008 = vadd.f32 %v1957, %v1958
        %v2009 = vrot.slane %v2008, 4
        %v2010 = vadd.f32 %v2008, %v2009
        %v2011 = vrot.slane %v2010, 2
        %v2012 = vadd.f32 %v2010, %v2011
        %v2013 = vrot.slane %v2012, 1
        %v2014 = vadd.f32 %v2012, %v2013
        %v2015 = vmul.f32 %v1943, %v1943
        %v2016 = vmul.f32 %v1944, %v1944
        %v2017 = vmul.f32 %v1945, %v1945
        %v2018 = vmul.f32 %v1946, %v1946
        %v2019 = vmul.f32 %v1947, %v1947
        %v2020 = vmul.f32 %v1948, %v1948
        %v2021 = vmul.f32 %v1949, %v1949
        %v2022 = vmul.f32 %v1950, %v1950
        %v2023 = vmul.f32 %v1951, %v1951
        %v2024 = vmul.f32 %v1952, %v1952
        %v2025 = vmul.f32 %v1953, %v1953
        %v2026 = vmul.f32 %v1954, %v1954
        %v2027 = vmul.f32 %v1955, %v1955
        %v2028 = vmul.f32 %v1956, %v1956
        %v2029 = vmul.f32 %v1957, %v1957
        %v2030 = vmul.f32 %v1958, %v1958
        %v2031 = vadd.f32 %v2015, %v2016
        %v2032 = vrot.slane %v2031, 4
        %v2033 = vadd.f32 %v2031, %v2032
        %v2034 = vrot.slane %v2033, 2
        %v2035 = vadd.f32 %v2033, %v2034
        %v2036 = vrot.slane %v2035, 1
        %v2037 = vadd.f32 %v2035, %v2036
        %v2038 = vadd.f32 %v2017, %v2018
        %v2039 = vrot.slane %v2038, 4
        %v2040 = vadd.f32 %v2038, %v2039
        %v2041 = vrot.slane %v2040, 2
        %v2042 = vadd.f32 %v2040, %v2041
        %v2043 = vrot.slane %v2042, 1
        %v2044 = vadd.f32 %v2042, %v2043
        %v2045 = vadd.f32 %v2019, %v2020
        %v2046 = vrot.slane %v2045, 4
        %v2047 = vadd.f32 %v2045, %v2046
        %v2048 = vrot.slane %v2047, 2
        %v2049 = vadd.f32 %v2047, %v2048
        %v2050 = vrot.slane %v2049, 1
        %v2051 = vadd.f32 %v2049, %v2050
        %v2052 = vadd.f32 %v2021, %v2022
        %v2053 = vrot.slane %v2052, 4
        %v2054 = vadd.f32 %v2052, %v2053
        %v2055 = vrot.slane %v2054, 2
        %v2056 = vadd.f32 %v2054, %v2055
        %v2057 = vrot.slane %v2056, 1
        %v2058 = vadd.f32 %v2056, %v2057
        %v2059 = vadd.f32 %v2023, %v2024
        %v2060 = vrot.slane %v2059, 4
        %v2061 = vadd.f32 %v2059, %v2060
        %v2062 = vrot.slane %v2061, 2
        %v2063 = vadd.f32 %v2061, %v2062
        %v2064 = vrot.slane %v2063, 1
        %v2065 = vadd.f32 %v2063, %v2064
        %v2066 = vadd.f32 %v2025, %v2026
        %v2067 = vrot.slane %v2066, 4
        %v2068 = vadd.f32 %v2066, %v2067
        %v2069 = vrot.slane %v2068, 2
        %v2070 = vadd.f32 %v2068, %v2069
        %v2071 = vrot.slane %v2070, 1
        %v2072 = vadd.f32 %v2070, %v2071
        %v2073 = vadd.f32 %v2027, %v2028
        %v2074 = vrot.slane %v2073, 4
        %v2075 = vadd.f32 %v2073, %v2074
        %v2076 = vrot.slane %v2075, 2
        %v2077 = vadd.f32 %v2075, %v2076
        %v2078 = vrot.slane %v2077, 1
        %v2079 = vadd.f32 %v2077, %v2078
        %v2080 = vadd.f32 %v2029, %v2030
        %v2081 = vrot.slane %v2080, 4
        %v2082 = vadd.f32 %v2080, %v2081
        %v2083 = vrot.slane %v2082, 2
        %v2084 = vadd.f32 %v2082, %v2083
        %v2085 = vrot.slane %v2084, 1
        %v2086 = vadd.f32 %v2084, %v2085
        %v2087 = vmul.f32 %v1965, 0.0625
        %v2088 = vmul.f32 %v1972, 0.0625
        %v2089 = vmul.f32 %v1979, 0.0625
        %v2090 = vmul.f32 %v1986, 0.0625
        %v2091 = vmul.f32 %v1993, 0.0625
        %v2092 = vmul.f32 %v2000, 0.0625
        %v2093 = vmul.f32 %v2007, 0.0625
        %v2094 = vmul.f32 %v2014, 0.0625
        %v2095 = vmul.f32 %v2037, 0.0625
        %v2096 = vmul.f32 %v2044, 0.0625
        %v2097 = vmul.f32 %v2051, 0.0625
        %v2098 = vmul.f32 %v2058, 0.0625
        %v2099 = vmul.f32 %v2065, 0.0625
        %v2100 = vmul.f32 %v2072, 0.0625
        %v2101 = vmul.f32 %v2079, 0.0625
        %v2102 = vmul.f32 %v2086, 0.0625
        %v2103 = vmul.f32 %v2087, %v2087
        %v2104 = vmul.f32 %v2088, %v2088
        %v2105 = vmul.f32 %v2089, %v2089
        %v2106 = vmul.f32 %v2090, %v2090
        %v2107 = vmul.f32 %v2091, %v2091
        %v2108 = vmul.f32 %v2092, %v2092
        %v2109 = vmul.f32 %v2093, %v2093
        %v2110 = vmul.f32 %v2094, %v2094
        %v2111 = vsub.f32 %v2095, %v2103
        %v2112 = vsub.f32 %v2096, %v2104
        %v2113 = vsub.f32 %v2097, %v2105
        %v2114 = vsub.f32 %v2098, %v2106
        %v2115 = vsub.f32 %v2099, %v2107
        %v2116 = vsub.f32 %v2100, %v2108
        %v2117 = vsub.f32 %v2101, %v2109
        %v2118 = vsub.f32 %v2102, %v2110
        %v2119 = vmax.f32 %v2111, 0.0
        %v2120 = vmax.f32 %v2112, 0.0
        %v2121 = vmax.f32 %v2113, 0.0
        %v2122 = vmax.f32 %v2114, 0.0
        %v2123 = vmax.f32 %v2115, 0.0
        %v2124 = vmax.f32 %v2116, 0.0
        %v2125 = vmax.f32 %v2117, 0.0
        %v2126 = vmax.f32 %v2118, 0.0
        %s2127 = scalar_lea.vmem %s6, 1
        %v2128 = vld [vmem:[%s2127] sm:$0x1]
        %v2129 = vadd.f32 %v2119, 1e-05
        %v2130 = vadd.f32 %v2120, 1e-05
        %v2131 = vadd.f32 %v2121, 1e-05
        %v2132 = vadd.f32 %v2122, 1e-05
        %v2133 = vadd.f32 %v2123, 1e-05
        %v2134 = vadd.f32 %v2124, 1e-05
        %v2135 = vadd.f32 %v2125, 1e-05
        %v2136 = vadd.f32 %v2126, 1e-05
        %v2137 = vrsqrt.pop %v2129
        %v2138 = vmul.f32 %v2137, %v2129
        %v2139 = vmul.f32 %v2138, %v2137
        %v2140 = vmul.f32 0.5, %v2139
        %v2141 = vsub.f32 1.5, %v2140
        %v2142 = vmul.f32 %v2137, %v2141
        %vm2143 = vweird.f32 %v2129
        %vm2144 = vweird.f32 %v2137
        %vm2145 = vmor %vm2143, %vm2144
        %v2146 = vsel %vm2145, %v2137, %v2142
        %v2147 = vrsqrt.pop %v2130
        %v2148 = vmul.f32 %v2147, %v2130
        %v2149 = vmul.f32 %v2148, %v2147
        %v2150 = vmul.f32 0.5, %v2149
        %v2151 = vsub.f32 1.5, %v2150
        %v2152 = vmul.f32 %v2147, %v2151
        %vm2153 = vweird.f32 %v2130
        %vm2154 = vweird.f32 %v2147
        %vm2155 = vmor %vm2153, %vm2154
        %v2156 = vsel %vm2155, %v2147, %v2152
        %v2157 = vrsqrt.pop %v2131
        %v2158 = vmul.f32 %v2157, %v2131
        %v2159 = vmul.f32 %v2158, %v2157
        %v2160 = vmul.f32 0.5, %v2159
        %v2161 = vsub.f32 1.5, %v2160
        %v2162 = vmul.f32 %v2157, %v2161
        %vm2163 = vweird.f32 %v2131
        %vm2164 = vweird.f32 %v2157
        %vm2165 = vmor %vm2163, %vm2164
        %v2166 = vsel %vm2165, %v2157, %v2162
        %v2167 = vrsqrt.pop %v2132
        %v2168 = vmul.f32 %v2167, %v2132
        %v2169 = vmul.f32 %v2168, %v2167
        %v2170 = vmul.f32 0.5, %v2169
        %v2171 = vsub.f32 1.5, %v2170
        %v2172 = vmul.f32 %v2167, %v2171
        %vm2173 = vweird.f32 %v2132
        %vm2174 = vweird.f32 %v2167
        %vm2175 = vmor %vm2173, %vm2174
        %v2176 = vsel %vm2175, %v2167, %v2172
        %v2177 = vrsqrt.pop %v2133
        %v2178 = vmul.f32 %v2177, %v2133
        %v2179 = vmul.f32 %v2178, %v2177
        %v2180 = vmul.f32 0.5, %v2179
        %v2181 = vsub.f32 1.5, %v2180
        %v2182 = vmul.f32 %v2177, %v2181
        %vm2183 = vweird.f32 %v2133
        %vm2184 = vweird.f32 %v2177
        %vm2185 = vmor %vm2183, %vm2184
        %v2186 = vsel %vm2185, %v2177, %v2182
        %v2187 = vrsqrt.pop %v2134
        %v2188 = vmul.f32 %v2187, %v2134
        %v2189 = vmul.f32 %v2188, %v2187
        %v2190 = vmul.f32 0.5, %v2189
        %v2191 = vsub.f32 1.5, %v2190
        %v2192 = vmul.f32 %v2187, %v2191
        %vm2193 = vweird.f32 %v2134
        %vm2194 = vweird.f32 %v2187
        %vm2195 = vmor %vm2193, %vm2194
        %v2196 = vsel %vm2195, %v2187, %v2192
        %v2197 = vrsqrt.pop %v2135
        %v2198 = vmul.f32 %v2197, %v2135
        %v2199 = vmul.f32 %v2198, %v2197
        %v2200 = vmul.f32 0.5, %v2199
        %v2201 = vsub.f32 1.5, %v2200
        %v2202 = vmul.f32 %v2197, %v2201
        %vm2203 = vweird.f32 %v2135
        %vm2204 = vweird.f32 %v2197
        %vm2205 = vmor %vm2203, %vm2204
        %v2206 = vsel %vm2205, %v2197, %v2202
        %v2207 = vrsqrt.pop %v2136
        %v2208 = vmul.f32 %v2207, %v2136
        %v2209 = vmul.f32 %v2208, %v2207
        %v2210 = vmul.f32 0.5, %v2209
        %v2211 = vsub.f32 1.5, %v2210
        %v2212 = vmul.f32 %v2207, %v2211
        %vm2213 = vweird.f32 %v2136
        %vm2214 = vweird.f32 %v2207
        %vm2215 = vmor %vm2213, %vm2214
        %v2216 = vsel %vm2215, %v2207, %v2212
        %v2217 = vmul.f32 %v2128, %v2146
        %v2218 = vmul.f32 %v2128, %v2156
        %v2219 = vmul.f32 %v2128, %v2166
        %v2220 = vmul.f32 %v2128, %v2176
        %v2221 = vmul.f32 %v2128, %v2186
        %v2222 = vmul.f32 %v2128, %v2196
        %v2223 = vmul.f32 %v2128, %v2206
        %v2224 = vmul.f32 %v2128, %v2216
        %s2225 = scalar_lea.vmem [#allocation13], 1
        %v2226 = vld [vmem:[%s2225] sm:$0x1]
        %v2227 = vmul.f32 %v2087, %v2217
        %v2228 = vmul.f32 %v2088, %v2218
        %v2229 = vmul.f32 %v2089, %v2219
        %v2230 = vmul.f32 %v2090, %v2220
        %v2231 = vmul.f32 %v2091, %v2221
        %v2232 = vmul.f32 %v2092, %v2222
        %v2233 = vmul.f32 %v2093, %v2223
        %v2234 = vmul.f32 %v2094, %v2224
        %v2235 = vsub.f32 %v2226, %v2227
        %v2236 = vsub.f32 %v2226, %v2228
        %v2237 = vsub.f32 %v2226, %v2229
        %v2238 = vsub.f32 %v2226, %v2230
        %v2239 = vsub.f32 %v2226, %v2231
        %v2240 = vsub.f32 %v2226, %v2232
        %v2241 = vsub.f32 %v2226, %v2233
        %v2242 = vsub.f32 %v2226, %v2234
        %v2251 = vperm.slane %v2217, 0
        %v2252 = vperm.slane %v2218, 0
        %v2253 = vperm.slane %v2219, 0
        %v2254 = vperm.slane %v2220, 0
        %v2255 = vperm.slane %v2221, 0
        %v2256 = vperm.slane %v2222, 0
        %v2257 = vperm.slane %v2223, 0
        %v2258 = vperm.slane %v2224, 0
        %v2267 = vmul.f32 %v1943, %v2251
        %v2268 = vmul.f32 %v1944, %v2251
        %v2269 = vmul.f32 %v1945, %v2252
        %v2270 = vmul.f32 %v1946, %v2252
        %v2271 = vmul.f32 %v1947, %v2253
        %v2272 = vmul.f32 %v1948, %v2253
        %v2273 = vmul.f32 %v1949, %v2254
        %v2274 = vmul.f32 %v1950, %v2254
        %v2275 = vmul.f32 %v1951, %v2255
        %v2276 = vmul.f32 %v1952, %v2255
        %v2277 = vmul.f32 %v1953, %v2256
        %v2278 = vmul.f32 %v1954, %v2256
        %v2279 = vmul.f32 %v1955, %v2257
        %v2280 = vmul.f32 %v1956, %v2257
        %v2281 = vmul.f32 %v1957, %v2258
        %v2282 = vmul.f32 %v1958, %v2258
        %v2291 = vperm.slane %v2235, 0
        %v2292 = vperm.slane %v2236, 0
        %v2293 = vperm.slane %v2237, 0
        %v2294 = vperm.slane %v2238, 0
        %v2295 = vperm.slane %v2239, 0
        %v2296 = vperm.slane %v2240, 0
        %v2297 = vperm.slane %v2241, 0
        %v2298 = vperm.slane %v2242, 0
        %v2307 = vadd.f32 %v2267, %v2291
        %v2308 = vadd.f32 %v2268, %v2291
        %v2309 = vadd.f32 %v2269, %v2292
        %v2310 = vadd.f32 %v2270, %v2292
        %v2311 = vadd.f32 %v2271, %v2293
        %v2312 = vadd.f32 %v2272, %v2293
        %v2313 = vadd.f32 %v2273, %v2294
        %v2314 = vadd.f32 %v2274, %v2294
        %v2315 = vadd.f32 %v2275, %v2295
        %v2316 = vadd.f32 %v2276, %v2295
        %v2317 = vadd.f32 %v2277, %v2296
        %v2318 = vadd.f32 %v2278, %v2296
        %v2319 = vadd.f32 %v2279, %v2297
        %v2320 = vadd.f32 %v2280, %v2297
        %v2321 = vadd.f32 %v2281, %v2298
        %v2322 = vadd.f32 %v2282, %v2298
        %v2323 = vpack.c.bf16 %v2307, %v2307
        %v2324 = vpack.c.bf16 %v2308, %v2308
        %v2325 = vpack.c.bf16 %v2309, %v2309
        %v2326 = vpack.c.bf16 %v2310, %v2310
        %v2327 = vpack.c.bf16 %v2311, %v2311
        %v2328 = vpack.c.bf16 %v2312, %v2312
        %v2329 = vpack.c.bf16 %v2313, %v2313
        %v2330 = vpack.c.bf16 %v2314, %v2314
        %v2331 = vpack.c.bf16 %v2315, %v2315
        %v2332 = vpack.c.bf16 %v2316, %v2316
        %v2333 = vpack.c.bf16 %v2317, %v2317
        %v2334 = vpack.c.bf16 %v2318, %v2318
        %v2335 = vpack.c.bf16 %v2319, %v2319
        %v2336 = vpack.c.bf16 %v2320, %v2320
        %v2337 = vpack.c.bf16 %v2321, %v2321
        %v2338 = vpack.c.bf16 %v2322, %v2322
        %v2341 = vunpack.c.l.b16 %v2323
        %v2342 = vunpack.c.l.b16 %v2324
        %v2343 = vpack.c.b16 %v2342, %v2341
        %2345 = vmatpush.bf16.msra.mxu0 0
        %2346 = vmatpush.bf16.msra.mxu0 0
        %2347 = vmatpush.bf16.msra.mxu0 0
        %2348 = vmatpush.bf16.msra.mxu0 0
        %2349 = vmatpush.bf16.msra.mxu0 0
        %2350 = vmatpush.bf16.msra.mxu0 0
        %2351 = vmatpush.bf16.msra.mxu0 0
        %2352 = vmatpush.bf16.msra.mxu0 %v2343
        %2353 = vmatmul.bf16.gmra.mxu0 %v641
        %v2354 = vpop.f32.mrf.mxu0
        %v2355 = vadd.f32 0.0, %v2354
        %v2356 = vpop.f32.mrf.mxu0
        %v2357 = vadd.f32 0.0, %v2356
        %2358 = vdwg.mxu0
        %v2361 = vunpack.c.l.b16 %v2325
        %v2362 = vunpack.c.l.b16 %v2326
        %v2363 = vpack.c.b16 %v2362, %v2361
        %2365 = vmatpush.bf16.msra.mxu0 0
        %2366 = vmatpush.bf16.msra.mxu0 0
        %2367 = vmatpush.bf16.msra.mxu0 0
        %2368 = vmatpush.bf16.msra.mxu0 0
        %2369 = vmatpush.bf16.msra.mxu0 0
        %2370 = vmatpush.bf16.msra.mxu0 0
        %2371 = vmatpush.bf16.msra.mxu0 0
        %2372 = vmatpush.bf16.msra.mxu0 %v2363
        %2373 = vmatmul.bf16.gmra.mxu0 %v669
        %v2374 = vpop.f32.mrf.mxu0
        %v2375 = vadd.f32 0.0, %v2374
        %v2376 = vpop.f32.mrf.mxu0
        %v2377 = vadd.f32 0.0, %v2376
        %2378 = vdwg.mxu0
        %v2381 = vunpack.c.l.b16 %v2327
        %v2382 = vunpack.c.l.b16 %v2328
        %v2383 = vpack.c.b16 %v2382, %v2381
        %2385 = vmatpush.bf16.msra.mxu0 0
        %2386 = vmatpush.bf16.msra.mxu0 0
        %2387 = vmatpush.bf16.msra.mxu0 0
        %2388 = vmatpush.bf16.msra.mxu0 0
        %2389 = vmatpush.bf16.msra.mxu0 0
        %2390 = vmatpush.bf16.msra.mxu0 0
        %2391 = vmatpush.bf16.msra.mxu0 0
        %2392 = vmatpush.bf16.msra.mxu0 %v2383
        %2393 = vmatmul.bf16.gmra.mxu0 %v697
        %v2394 = vpop.f32.mrf.mxu0
        %v2395 = vadd.f32 0.0, %v2394
        %v2396 = vpop.f32.mrf.mxu0
        %v2397 = vadd.f32 0.0, %v2396
        %2398 = vdwg.mxu0
        %v2401 = vunpack.c.l.b16 %v2329
        %v2402 = vunpack.c.l.b16 %v2330
        %v2403 = vpack.c.b16 %v2402, %v2401
        %2405 = vmatpush.bf16.msra.mxu0 0
        %2406 = vmatpush.bf16.msra.mxu0 0
        %2407 = vmatpush.bf16.msra.mxu0 0
        %2408 = vmatpush.bf16.msra.mxu0 0
        %2409 = vmatpush.bf16.msra.mxu0 0
        %2410 = vmatpush.bf16.msra.mxu0 0
        %2411 = vmatpush.bf16.msra.mxu0 0
        %2412 = vmatpush.bf16.msra.mxu0 %v2403
        %2413 = vmatmul.bf16.gmra.mxu0 %v725
        %v2414 = vpop.f32.mrf.mxu0
        %v2415 = vadd.f32 0.0, %v2414
        %v2416 = vpop.f32.mrf.mxu0
        %v2417 = vadd.f32 0.0, %v2416
        %2418 = vdwg.mxu0
        %v2421 = vunpack.c.l.b16 %v2331
        %v2422 = vunpack.c.l.b16 %v2332
        %v2423 = vpack.c.b16 %v2422, %v2421
        %2425 = vmatpush.bf16.msra.mxu0 0
        %2426 = vmatpush.bf16.msra.mxu0 0
        %2427 = vmatpush.bf16.msra.mxu0 0
        %2428 = vmatpush.bf16.msra.mxu0 0
        %2429 = vmatpush.bf16.msra.mxu0 0
        %2430 = vmatpush.bf16.msra.mxu0 0
        %2431 = vmatpush.bf16.msra.mxu0 0
        %2432 = vmatpush.bf16.msra.mxu0 %v2423
        %2433 = vmatmul.bf16.gmra.mxu0 %v753
        %v2434 = vpop.f32.mrf.mxu0
        %v2435 = vadd.f32 0.0, %v2434
        %v2436 = vpop.f32.mrf.mxu0
        %v2437 = vadd.f32 0.0, %v2436
        %2438 = vdwg.mxu0
        %v2441 = vunpack.c.l.b16 %v2333
        %v2442 = vunpack.c.l.b16 %v2334
        %v2443 = vpack.c.b16 %v2442, %v2441
        %2445 = vmatpush.bf16.msra.mxu0 0
        %2446 = vmatpush.bf16.msra.mxu0 0
        %2447 = vmatpush.bf16.msra.mxu0 0
        %2448 = vmatpush.bf16.msra.mxu0 0
        %2449 = vmatpush.bf16.msra.mxu0 0
        %2450 = vmatpush.bf16.msra.mxu0 0
        %2451 = vmatpush.bf16.msra.mxu0 0
        %2452 = vmatpush.bf16.msra.mxu0 %v2443
        %2453 = vmatmul.bf16.gmra.mxu0 %v781
        %v2454 = vpop.f32.mrf.mxu0
        %v2455 = vadd.f32 0.0, %v2454
        %v2456 = vpop.f32.mrf.mxu0
        %v2457 = vadd.f32 0.0, %v2456
        %2458 = vdwg.mxu0
        %v2461 = vunpack.c.l.b16 %v2335
        %v2462 = vunpack.c.l.b16 %v2336
        %v2463 = vpack.c.b16 %v2462, %v2461
        %2465 = vmatpush.bf16.msra.mxu0 0
        %2466 = vmatpush.bf16.msra.mxu0 0
        %2467 = vmatpush.bf16.msra.mxu0 0
        %2468 = vmatpush.bf16.msra.mxu0 0
        %2469 = vmatpush.bf16.msra.mxu0 0
        %2470 = vmatpush.bf16.msra.mxu0 0
        %2471 = vmatpush.bf16.msra.mxu0 0
        %2472 = vmatpush.bf16.msra.mxu0 %v2463
        %2473 = vmatmul.bf16.gmra.mxu0 %v809
        %v2474 = vpop.f32.mrf.mxu0
        %v2475 = vadd.f32 0.0, %v2474
        %v2476 = vpop.f32.mrf.mxu0
        %v2477 = vadd.f32 0.0, %v2476
        %2478 = vdwg.mxu0
        %v2481 = vunpack.c.l.b16 %v2337
        %v2482 = vunpack.c.l.b16 %v2338
        %v2483 = vpack.c.b16 %v2482, %v2481
        %2485 = vmatpush.bf16.msra.mxu0 0
        %2486 = vmatpush.bf16.msra.mxu0 0
        %2487 = vmatpush.bf16.msra.mxu0 0
        %2488 = vmatpush.bf16.msra.mxu0 0
        %2489 = vmatpush.bf16.msra.mxu0 0
        %2490 = vmatpush.bf16.msra.mxu0 0
        %2491 = vmatpush.bf16.msra.mxu0 0
        %2492 = vmatpush.bf16.msra.mxu0 %v2483
        %2493 = vmatmul.bf16.gmra.mxu0 %v837
        %v2494 = vpop.f32.mrf.mxu0
        %v2495 = vadd.f32 0.0, %v2494
        %v2496 = vpop.f32.mrf.mxu0
        %v2497 = vadd.f32 0.0, %v2496
        %2498 = vdwg.mxu0
        %v2499 = vpack.c.bf16 %v2357, %v2355
        %v2500 = vpack.c.bf16 %v2377, %v2375
        %v2501 = vpack.c.bf16 %v2397, %v2395
        %v2502 = vpack.c.bf16 %v2417, %v2415
        %v2503 = vpack.c.bf16 %v2437, %v2435
        %v2504 = vpack.c.bf16 %v2457, %v2455
        %v2505 = vpack.c.bf16 %v2477, %v2475
        %v2506 = vpack.c.bf16 %v2497, %v2495
        %s2507 = scalar_lea.vmem [#allocation7], 128
        %v2508 = vld [vmem:[%s2507] sm:$0xf]
        %v2509 = vld [vmem:[%s2507 + $0x4] sm:$0xf]
        %v2510 = vld [vmem:[%s2507 + $0x8] sm:$0xf]
        %v2511 = vld [vmem:[%s2507 + $0xc] sm:$0xf]
        %v2512 = vld [vmem:[%s2507 + $0x10] sm:$0xf]
        %v2513 = vld [vmem:[%s2507 + $0x14] sm:$0xf]
        %v2514 = vld [vmem:[%s2507 + $0x18] sm:$0xf]
        %v2515 = vld [vmem:[%s2507 + $0x1c] sm:$0xf]
        %v2516 = vld [vmem:[%s2507 + $0x20] sm:$0xf]
        %v2517 = vld [vmem:[%s2507 + $0x24] sm:$0xf]
        %v2518 = vld [vmem:[%s2507 + $0x28] sm:$0xf]
        %v2519 = vld [vmem:[%s2507 + $0x2c] sm:$0xf]
        %v2520 = vld [vmem:[%s2507 + $0x30] sm:$0xf]
        %v2521 = vld [vmem:[%s2507 + $0x34] sm:$0xf]
        %v2522 = vld [vmem:[%s2507 + $0x38] sm:$0xf]
        %v2523 = vld [vmem:[%s2507 + $0x3c] sm:$0xf]
        %s2524 = scalar_lea.vmem [#allocation8], 2
        %v2525 = vld [vmem:[%s2524] sm:$0x1]
        %v2527 = vperm.slane %v2525, 0
        %v2545 = vunpack.c.l.b16 %v2508
        %v2546 = vunpack.c.l.b16 %v2509
        %v2547 = vunpack.c.l.b16 %v2510
        %v2548 = vunpack.c.l.b16 %v2511
        %v2549 = vunpack.c.l.b16 %v2512
        %v2550 = vunpack.c.l.b16 %v2513
        %v2551 = vunpack.c.l.b16 %v2514
        %v2552 = vunpack.c.l.b16 %v2515
        %v2553 = vunpack.c.l.b16 %v2516
        %v2554 = vunpack.c.l.b16 %v2517
        %v2555 = vunpack.c.l.b16 %v2518
        %v2556 = vunpack.c.l.b16 %v2519
        %v2557 = vunpack.c.l.b16 %v2520
        %v2558 = vunpack.c.l.b16 %v2521
        %v2559 = vunpack.c.l.b16 %v2522
        %v2560 = vunpack.c.l.b16 %v2523
        %v2561 = vpack.c.b16 %v2546, %v2545
        %v2562 = vpack.c.b16 %v2548, %v2547
        %v2563 = vpack.c.b16 %v2550, %v2549
        %v2564 = vpack.c.b16 %v2552, %v2551
        %v2565 = vpack.c.b16 %v2554, %v2553
        %v2566 = vpack.c.b16 %v2556, %v2555
        %v2567 = vpack.c.b16 %v2558, %v2557
        %v2568 = vpack.c.b16 %v2560, %v2559
        %2577 = vmatpush.bf16.msra.mxu0 %v2568
        %2578 = vmatpush.bf16.msra.mxu0 %v2567
        %2579 = vmatpush.bf16.msra.mxu0 %v2566
        %2580 = vmatpush.bf16.msra.mxu0 %v2565
        %2581 = vmatpush.bf16.msra.mxu0 %v2564
        %2582 = vmatpush.bf16.msra.mxu0 %v2563
        %2583 = vmatpush.bf16.msra.mxu0 %v2562
        %2584 = vmatpush.bf16.msra.mxu0 %v2561
        %2585 = vmatmul.bf16.gmra.mxu0 %v2499
        %v2586 = vpop.f32.mrf.mxu0
        %v2587 = vadd.f32 %v2527, %v2586
        %v2588 = vpop.f32.mrf.mxu0
        %v2589 = vadd.f32 %v2527, %v2588
        %2590 = vmatmul.bf16.gmra.mxu0 %v2500
        %v2591 = vpop.f32.mrf.mxu0
        %v2592 = vadd.f32 %v2527, %v2591
        %v2593 = vpop.f32.mrf.mxu0
        %v2594 = vadd.f32 %v2527, %v2593
        %2595 = vmatmul.bf16.gmra.mxu0 %v2501
        %v2596 = vpop.f32.mrf.mxu0
        %v2597 = vadd.f32 %v2527, %v2596
        %v2598 = vpop.f32.mrf.mxu0
        %v2599 = vadd.f32 %v2527, %v2598
        %2600 = vmatmul.bf16.gmra.mxu0 %v2502
        %v2601 = vpop.f32.mrf.mxu0
        %v2602 = vadd.f32 %v2527, %v2601
        %v2603 = vpop.f32.mrf.mxu0
        %v2604 = vadd.f32 %v2527, %v2603
        %2605 = vmatmul.bf16.gmra.mxu0 %v2503
        %v2606 = vpop.f32.mrf.mxu0
        %v2607 = vadd.f32 %v2527, %v2606
        %v2608 = vpop.f32.mrf.mxu0
        %v2609 = vadd.f32 %v2527, %v2608
        %2610 = vmatmul.bf16.gmra.mxu0 %v2504
        %v2611 = vpop.f32.mrf.mxu0
        %v2612 = vadd.f32 %v2527, %v2611
        %v2613 = vpop.f32.mrf.mxu0
        %v2614 = vadd.f32 %v2527, %v2613
        %2615 = vmatmul.bf16.gmra.mxu0 %v2505
        %v2616 = vpop.f32.mrf.mxu0
        %v2617 = vadd.f32 %v2527, %v2616
        %v2618 = vpop.f32.mrf.mxu0
        %v2619 = vadd.f32 %v2527, %v2618
        %2620 = vmatmul.bf16.gmra.mxu0 %v2506
        %v2621 = vpop.f32.mrf.mxu0
        %v2622 = vadd.f32 %v2527, %v2621
        %v2623 = vpop.f32.mrf.mxu0
        %v2624 = vadd.f32 %v2527, %v2623
        %2625 = vdwg.mxu0
        %v2626 = vmax.f32 %v2587, 0.0
        %v2627 = vmax.f32 %v2589, 0.0
        %v2628 = vmax.f32 %v2592, 0.0
        %v2629 = vmax.f32 %v2594, 0.0
        %v2630 = vmax.f32 %v2597, 0.0
        %v2631 = vmax.f32 %v2599, 0.0
        %v2632 = vmax.f32 %v2602, 0.0
        %v2633 = vmax.f32 %v2604, 0.0
        %v2634 = vmax.f32 %v2607, 0.0
        %v2635 = vmax.f32 %v2609, 0.0
        %v2636 = vmax.f32 %v2612, 0.0
        %v2637 = vmax.f32 %v2614, 0.0
        %v2638 = vmax.f32 %v2617, 0.0
        %v2639 = vmax.f32 %v2619, 0.0
        %v2640 = vmax.f32 %v2622, 0.0
        %v2641 = vmax.f32 %v2624, 0.0
        %v2642 = vpack.c.bf16 %v2627, %v2626
        %v2643 = vpack.c.bf16 %v2629, %v2628
        %v2644 = vpack.c.bf16 %v2631, %v2630
        %v2645 = vpack.c.bf16 %v2633, %v2632
        %v2646 = vpack.c.bf16 %v2635, %v2634
        %v2647 = vpack.c.bf16 %v2637, %v2636
        %v2648 = vpack.c.bf16 %v2639, %v2638
        %v2649 = vpack.c.bf16 %v2641, %v2640
        %s2650 = scalar_lea.vmem [#allocation10], 128
        %v2651 = vld [vmem:[%s2650] sm:$0xf]
        %v2652 = vld [vmem:[%s2650 + $0x4] sm:$0xf]
        %v2653 = vld [vmem:[%s2650 + $0x8] sm:$0xf]
        %v2654 = vld [vmem:[%s2650 + $0xc] sm:$0xf]
        %v2655 = vld [vmem:[%s2650 + $0x10] sm:$0xf]
        %v2656 = vld [vmem:[%s2650 + $0x14] sm:$0xf]
        %v2657 = vld [vmem:[%s2650 + $0x18] sm:$0xf]
        %v2658 = vld [vmem:[%s2650 + $0x1c] sm:$0xf]
        %v2659 = vld [vmem:[%s2650 + $0x20] sm:$0xf]
        %v2660 = vld [vmem:[%s2650 + $0x24] sm:$0xf]
        %v2661 = vld [vmem:[%s2650 + $0x28] sm:$0xf]
        %v2662 = vld [vmem:[%s2650 + $0x2c] sm:$0xf]
        %v2663 = vld [vmem:[%s2650 + $0x30] sm:$0xf]
        %v2664 = vld [vmem:[%s2650 + $0x34] sm:$0xf]
        %v2665 = vld [vmem:[%s2650 + $0x38] sm:$0xf]
        %v2666 = vld [vmem:[%s2650 + $0x3c] sm:$0xf]
        %s2667 = scalar_lea.vmem [#allocation11], 2
        %v2668 = vld [vmem:[%s2667] sm:$0x1]
        %v2670 = vperm.slane %v2668, 0
        %v2688 = vunpack.c.l.b16 %v2651
        %v2689 = vunpack.c.l.b16 %v2652
        %v2690 = vunpack.c.l.b16 %v2653
        %v2691 = vunpack.c.l.b16 %v2654
        %v2692 = vunpack.c.l.b16 %v2655
        %v2693 = vunpack.c.l.b16 %v2656
        %v2694 = vunpack.c.l.b16 %v2657
        %v2695 = vunpack.c.l.b16 %v2658
        %v2696 = vunpack.c.l.b16 %v2659
        %v2697 = vunpack.c.l.b16 %v2660
        %v2698 = vunpack.c.l.b16 %v2661
        %v2699 = vunpack.c.l.b16 %v2662
        %v2700 = vunpack.c.l.b16 %v2663
        %v2701 = vunpack.c.l.b16 %v2664
        %v2702 = vunpack.c.l.b16 %v2665
        %v2703 = vunpack.c.l.b16 %v2666
        %v2704 = vpack.c.b16 %v2689, %v2688
        %v2705 = vpack.c.b16 %v2691, %v2690
        %v2706 = vpack.c.b16 %v2693, %v2692
        %v2707 = vpack.c.b16 %v2695, %v2694
        %v2708 = vpack.c.b16 %v2697, %v2696
        %v2709 = vpack.c.b16 %v2699, %v2698
        %v2710 = vpack.c.b16 %v2701, %v2700
        %v2711 = vpack.c.b16 %v2703, %v2702
        %2720 = vmatpush.bf16.msra.mxu0 %v2711
        %2721 = vmatpush.bf16.msra.mxu0 %v2710
        %2722 = vmatpush.bf16.msra.mxu0 %v2709
        %2723 = vmatpush.bf16.msra.mxu0 %v2708
        %2724 = vmatpush.bf16.msra.mxu0 %v2707
        %2725 = vmatpush.bf16.msra.mxu0 %v2706
        %2726 = vmatpush.bf16.msra.mxu0 %v2705
        %2727 = vmatpush.bf16.msra.mxu0 %v2704
        %2728 = vmatmul.bf16.gmra.mxu0 %v2642
        %v2729 = vpop.f32.mrf.mxu0
        %v2730 = vadd.f32 %v2670, %v2729
        %v2731 = vpop.f32.mrf.mxu0
        %v2732 = vadd.f32 %v2670, %v2731
        %2733 = vmatmul.bf16.gmra.mxu0 %v2643
        %v2734 = vpop.f32.mrf.mxu0
        %v2735 = vadd.f32 %v2670, %v2734
        %v2736 = vpop.f32.mrf.mxu0
        %v2737 = vadd.f32 %v2670, %v2736
        %2738 = vmatmul.bf16.gmra.mxu0 %v2644
        %v2739 = vpop.f32.mrf.mxu0
        %v2740 = vadd.f32 %v2670, %v2739
        %v2741 = vpop.f32.mrf.mxu0
        %v2742 = vadd.f32 %v2670, %v2741
        %2743 = vmatmul.bf16.gmra.mxu0 %v2645
        %v2744 = vpop.f32.mrf.mxu0
        %v2745 = vadd.f32 %v2670, %v2744
        %v2746 = vpop.f32.mrf.mxu0
        %v2747 = vadd.f32 %v2670, %v2746
        %2748 = vmatmul.bf16.gmra.mxu0 %v2646
        %v2749 = vpop.f32.mrf.mxu0
        %v2750 = vadd.f32 %v2670, %v2749
        %v2751 = vpop.f32.mrf.mxu0
        %v2752 = vadd.f32 %v2670, %v2751
        %2753 = vmatmul.bf16.gmra.mxu0 %v2647
        %v2754 = vpop.f32.mrf.mxu0
        %v2755 = vadd.f32 %v2670, %v2754
        %v2756 = vpop.f32.mrf.mxu0
        %v2757 = vadd.f32 %v2670, %v2756
        %2758 = vmatmul.bf16.gmra.mxu0 %v2648
        %v2759 = vpop.f32.mrf.mxu0
        %v2760 = vadd.f32 %v2670, %v2759
        %v2761 = vpop.f32.mrf.mxu0
        %v2762 = vadd.f32 %v2670, %v2761
        %2763 = vmatmul.bf16.gmra.mxu0 %v2649
        %v2764 = vpop.f32.mrf.mxu0
        %v2765 = vadd.f32 %v2670, %v2764
        %v2766 = vpop.f32.mrf.mxu0
        %v2767 = vadd.f32 %v2670, %v2766
        %2768 = vdwg.mxu0
        %v2769 = vmax.f32 %v2730, 0.0
        %v2770 = vmax.f32 %v2732, 0.0
        %v2771 = vmax.f32 %v2735, 0.0
        %v2772 = vmax.f32 %v2737, 0.0
        %v2773 = vmax.f32 %v2740, 0.0
        %v2774 = vmax.f32 %v2742, 0.0
        %v2775 = vmax.f32 %v2745, 0.0
        %v2776 = vmax.f32 %v2747, 0.0
        %v2777 = vmax.f32 %v2750, 0.0
        %v2778 = vmax.f32 %v2752, 0.0
        %v2779 = vmax.f32 %v2755, 0.0
        %v2780 = vmax.f32 %v2757, 0.0
        %v2781 = vmax.f32 %v2760, 0.0
        %v2782 = vmax.f32 %v2762, 0.0
        %v2783 = vmax.f32 %v2765, 0.0
        %v2784 = vmax.f32 %v2767, 0.0
        %v2785 = vadd.f32 %v2769, %v2770
        %v2786 = vrot.slane %v2785, 4
        %v2787 = vadd.f32 %v2785, %v2786
        %v2788 = vrot.slane %v2787, 2
        %v2789 = vadd.f32 %v2787, %v2788
        %v2790 = vrot.slane %v2789, 1
        %v2791 = vadd.f32 %v2789, %v2790
        %v2792 = vadd.f32 %v2771, %v2772
        %v2793 = vrot.slane %v2792, 4
        %v2794 = vadd.f32 %v2792, %v2793
        %v2795 = vrot.slane %v2794, 2
        %v2796 = vadd.f32 %v2794, %v2795
        %v2797 = vrot.slane %v2796, 1
        %v2798 = vadd.f32 %v2796, %v2797
        %v2799 = vadd.f32 %v2773, %v2774
        %v2800 = vrot.slane %v2799, 4
        %v2801 = vadd.f32 %v2799, %v2800
        %v2802 = vrot.slane %v2801, 2
        %v2803 = vadd.f32 %v2801, %v2802
        %v2804 = vrot.slane %v2803, 1
        %v2805 = vadd.f32 %v2803, %v2804
        %v2806 = vadd.f32 %v2775, %v2776
        %v2807 = vrot.slane %v2806, 4
        %v2808 = vadd.f32 %v2806, %v2807
        %v2809 = vrot.slane %v2808, 2
        %v2810 = vadd.f32 %v2808, %v2809
        %v2811 = vrot.slane %v2810, 1
        %v2812 = vadd.f32 %v2810, %v2811
        %v2813 = vadd.f32 %v2777, %v2778
        %v2814 = vrot.slane %v2813, 4
        %v2815 = vadd.f32 %v2813, %v2814
        %v2816 = vrot.slane %v2815, 2
        %v2817 = vadd.f32 %v2815, %v2816
        %v2818 = vrot.slane %v2817, 1
        %v2819 = vadd.f32 %v2817, %v2818
        %v2820 = vadd.f32 %v2779, %v2780
        %v2821 = vrot.slane %v2820, 4
        %v2822 = vadd.f32 %v2820, %v2821
        %v2823 = vrot.slane %v2822, 2
        %v2824 = vadd.f32 %v2822, %v2823
        %v2825 = vrot.slane %v2824, 1
        %v2826 = vadd.f32 %v2824, %v2825
        %v2827 = vadd.f32 %v2781, %v2782
        %v2828 = vrot.slane %v2827, 4
        %v2829 = vadd.f32 %v2827, %v2828
        %v2830 = vrot.slane %v2829, 2
        %v2831 = vadd.f32 %v2829, %v2830
        %v2832 = vrot.slane %v2831, 1
        %v2833 = vadd.f32 %v2831, %v2832
        %v2834 = vadd.f32 %v2783, %v2784
        %v2835 = vrot.slane %v2834, 4
        %v2836 = vadd.f32 %v2834, %v2835
        %v2837 = vrot.slane %v2836, 2
        %v2838 = vadd.f32 %v2836, %v2837
        %v2839 = vrot.slane %v2838, 1
        %v2840 = vadd.f32 %v2838, %v2839
        %v2841 = vmul.f32 %v2769, %v2769
        %v2842 = vmul.f32 %v2770, %v2770
        %v2843 = vmul.f32 %v2771, %v2771
        %v2844 = vmul.f32 %v2772, %v2772
        %v2845 = vmul.f32 %v2773, %v2773
        %v2846 = vmul.f32 %v2774, %v2774
        %v2847 = vmul.f32 %v2775, %v2775
        %v2848 = vmul.f32 %v2776, %v2776
        %v2849 = vmul.f32 %v2777, %v2777
        %v2850 = vmul.f32 %v2778, %v2778
        %v2851 = vmul.f32 %v2779, %v2779
        %v2852 = vmul.f32 %v2780, %v2780
        %v2853 = vmul.f32 %v2781, %v2781
        %v2854 = vmul.f32 %v2782, %v2782
        %v2855 = vmul.f32 %v2783, %v2783
        %v2856 = vmul.f32 %v2784, %v2784
        %v2857 = vadd.f32 %v2841, %v2842
        %v2858 = vrot.slane %v2857, 4
        %v2859 = vadd.f32 %v2857, %v2858
        %v2860 = vrot.slane %v2859, 2
        %v2861 = vadd.f32 %v2859, %v2860
        %v2862 = vrot.slane %v2861, 1
        %v2863 = vadd.f32 %v2861, %v2862
        %v2864 = vadd.f32 %v2843, %v2844
        %v2865 = vrot.slane %v2864, 4
        %v2866 = vadd.f32 %v2864, %v2865
        %v2867 = vrot.slane %v2866, 2
        %v2868 = vadd.f32 %v2866, %v2867
        %v2869 = vrot.slane %v2868, 1
        %v2870 = vadd.f32 %v2868, %v2869
        %v2871 = vadd.f32 %v2845, %v2846
        %v2872 = vrot.slane %v2871, 4
        %v2873 = vadd.f32 %v2871, %v2872
        %v2874 = vrot.slane %v2873, 2
        %v2875 = vadd.f32 %v2873, %v2874
        %v2876 = vrot.slane %v2875, 1
        %v2877 = vadd.f32 %v2875, %v2876
        %v2878 = vadd.f32 %v2847, %v2848
        %v2879 = vrot.slane %v2878, 4
        %v2880 = vadd.f32 %v2878, %v2879
        %v2881 = vrot.slane %v2880, 2
        %v2882 = vadd.f32 %v2880, %v2881
        %v2883 = vrot.slane %v2882, 1
        %v2884 = vadd.f32 %v2882, %v2883
        %v2885 = vadd.f32 %v2849, %v2850
        %v2886 = vrot.slane %v2885, 4
        %v2887 = vadd.f32 %v2885, %v2886
        %v2888 = vrot.slane %v2887, 2
        %v2889 = vadd.f32 %v2887, %v2888
        %v2890 = vrot.slane %v2889, 1
        %v2891 = vadd.f32 %v2889, %v2890
        %v2892 = vadd.f32 %v2851, %v2852
        %v2893 = vrot.slane %v2892, 4
        %v2894 = vadd.f32 %v2892, %v2893
        %v2895 = vrot.slane %v2894, 2
        %v2896 = vadd.f32 %v2894, %v2895
        %v2897 = vrot.slane %v2896, 1
        %v2898 = vadd.f32 %v2896, %v2897
        %v2899 = vadd.f32 %v2853, %v2854
        %v2900 = vrot.slane %v2899, 4
        %v2901 = vadd.f32 %v2899, %v2900
        %v2902 = vrot.slane %v2901, 2
        %v2903 = vadd.f32 %v2901, %v2902
        %v2904 = vrot.slane %v2903, 1
        %v2905 = vadd.f32 %v2903, %v2904
        %v2906 = vadd.f32 %v2855, %v2856
        %v2907 = vrot.slane %v2906, 4
        %v2908 = vadd.f32 %v2906, %v2907
        %v2909 = vrot.slane %v2908, 2
        %v2910 = vadd.f32 %v2908, %v2909
        %v2911 = vrot.slane %v2910, 1
        %v2912 = vadd.f32 %v2910, %v2911
        %v2913 = vmul.f32 %v2791, 0.0625
        %v2914 = vmul.f32 %v2798, 0.0625
        %v2915 = vmul.f32 %v2805, 0.0625
        %v2916 = vmul.f32 %v2812, 0.0625
        %v2917 = vmul.f32 %v2819, 0.0625
        %v2918 = vmul.f32 %v2826, 0.0625
        %v2919 = vmul.f32 %v2833, 0.0625
        %v2920 = vmul.f32 %v2840, 0.0625
        %v2921 = vmul.f32 %v2863, 0.0625
        %v2922 = vmul.f32 %v2870, 0.0625
        %v2923 = vmul.f32 %v2877, 0.0625
        %v2924 = vmul.f32 %v2884, 0.0625
        %v2925 = vmul.f32 %v2891, 0.0625
        %v2926 = vmul.f32 %v2898, 0.0625
        %v2927 = vmul.f32 %v2905, 0.0625
        %v2928 = vmul.f32 %v2912, 0.0625
        %v2929 = vmul.f32 %v2913, %v2913
        %v2930 = vmul.f32 %v2914, %v2914
        %v2931 = vmul.f32 %v2915, %v2915
        %v2932 = vmul.f32 %v2916, %v2916
        %v2933 = vmul.f32 %v2917, %v2917
        %v2934 = vmul.f32 %v2918, %v2918
        %v2935 = vmul.f32 %v2919, %v2919
        %v2936 = vmul.f32 %v2920, %v2920
        %v2937 = vsub.f32 %v2921, %v2929
        %v2938 = vsub.f32 %v2922, %v2930
        %v2939 = vsub.f32 %v2923, %v2931
        %v2940 = vsub.f32 %v2924, %v2932
        %v2941 = vsub.f32 %v2925, %v2933
        %v2942 = vsub.f32 %v2926, %v2934
        %v2943 = vsub.f32 %v2927, %v2935
        %v2944 = vsub.f32 %v2928, %v2936
        %v2945 = vmax.f32 %v2937, 0.0
        %v2946 = vmax.f32 %v2938, 0.0
        %v2947 = vmax.f32 %v2939, 0.0
        %v2948 = vmax.f32 %v2940, 0.0
        %v2949 = vmax.f32 %v2941, 0.0
        %v2950 = vmax.f32 %v2942, 0.0
        %v2951 = vmax.f32 %v2943, 0.0
        %v2952 = vmax.f32 %v2944, 0.0
        %s2953 = scalar_lea.vmem %s6, 2
        %v2954 = vld [vmem:[%s2953] sm:$0x1]
        %v2955 = vadd.f32 %v2945, 1e-05
        %v2956 = vadd.f32 %v2946, 1e-05
        %v2957 = vadd.f32 %v2947, 1e-05
        %v2958 = vadd.f32 %v2948, 1e-05
        %v2959 = vadd.f32 %v2949, 1e-05
        %v2960 = vadd.f32 %v2950, 1e-05
        %v2961 = vadd.f32 %v2951, 1e-05
        %v2962 = vadd.f32 %v2952, 1e-05
        %v2963 = vrsqrt.pop %v2955
        %v2964 = vmul.f32 %v2963, %v2955
        %v2965 = vmul.f32 %v2964, %v2963
        %v2966 = vmul.f32 0.5, %v2965
        %v2967 = vsub.f32 1.5, %v2966
        %v2968 = vmul.f32 %v2963, %v2967
        %vm2969 = vweird.f32 %v2955
        %vm2970 = vweird.f32 %v2963
        %vm2971 = vmor %vm2969, %vm2970
        %v2972 = vsel %vm2971, %v2963, %v2968
        %v2973 = vrsqrt.pop %v2956
        %v2974 = vmul.f32 %v2973, %v2956
        %v2975 = vmul.f32 %v2974, %v2973
        %v2976 = vmul.f32 0.5, %v2975
        %v2977 = vsub.f32 1.5, %v2976
        %v2978 = vmul.f32 %v2973, %v2977
        %vm2979 = vweird.f32 %v2956
        %vm2980 = vweird.f32 %v2973
        %vm2981 = vmor %vm2979, %vm2980
        %v2982 = vsel %vm2981, %v2973, %v2978
        %v2983 = vrsqrt.pop %v2957
        %v2984 = vmul.f32 %v2983, %v2957
        %v2985 = vmul.f32 %v2984, %v2983
        %v2986 = vmul.f32 0.5, %v2985
        %v2987 = vsub.f32 1.5, %v2986
        %v2988 = vmul.f32 %v2983, %v2987
        %vm2989 = vweird.f32 %v2957
        %vm2990 = vweird.f32 %v2983
        %vm2991 = vmor %vm2989, %vm2990
        %v2992 = vsel %vm2991, %v2983, %v2988
        %v2993 = vrsqrt.pop %v2958
        %v2994 = vmul.f32 %v2993, %v2958
        %v2995 = vmul.f32 %v2994, %v2993
        %v2996 = vmul.f32 0.5, %v2995
        %v2997 = vsub.f32 1.5, %v2996
        %v2998 = vmul.f32 %v2993, %v2997
        %vm2999 = vweird.f32 %v2958
        %vm3000 = vweird.f32 %v2993
        %vm3001 = vmor %vm2999, %vm3000
        %v3002 = vsel %vm3001, %v2993, %v2998
        %v3003 = vrsqrt.pop %v2959
        %v3004 = vmul.f32 %v3003, %v2959
        %v3005 = vmul.f32 %v3004, %v3003
        %v3006 = vmul.f32 0.5, %v3005
        %v3007 = vsub.f32 1.5, %v3006
        %v3008 = vmul.f32 %v3003, %v3007
        %vm3009 = vweird.f32 %v2959
        %vm3010 = vweird.f32 %v3003
        %vm3011 = vmor %vm3009, %vm3010
        %v3012 = vsel %vm3011, %v3003, %v3008
        %v3013 = vrsqrt.pop %v2960
        %v3014 = vmul.f32 %v3013, %v2960
        %v3015 = vmul.f32 %v3014, %v3013
        %v3016 = vmul.f32 0.5, %v3015
        %v3017 = vsub.f32 1.5, %v3016
        %v3018 = vmul.f32 %v3013, %v3017
        %vm3019 = vweird.f32 %v2960
        %vm3020 = vweird.f32 %v3013
        %vm3021 = vmor %vm3019, %vm3020
        %v3022 = vsel %vm3021, %v3013, %v3018
        %v3023 = vrsqrt.pop %v2961
        %v3024 = vmul.f32 %v3023, %v2961
        %v3025 = vmul.f32 %v3024, %v3023
        %v3026 = vmul.f32 0.5, %v3025
        %v3027 = vsub.f32 1.5, %v3026
        %v3028 = vmul.f32 %v3023, %v3027
        %vm3029 = vweird.f32 %v2961
        %vm3030 = vweird.f32 %v3023
        %vm3031 = vmor %vm3029, %vm3030
        %v3032 = vsel %vm3031, %v3023, %v3028
        %v3033 = vrsqrt.pop %v2962
        %v3034 = vmul.f32 %v3033, %v2962
        %v3035 = vmul.f32 %v3034, %v3033
        %v3036 = vmul.f32 0.5, %v3035
        %v3037 = vsub.f32 1.5, %v3036
        %v3038 = vmul.f32 %v3033, %v3037
        %vm3039 = vweird.f32 %v2962
        %vm3040 = vweird.f32 %v3033
        %vm3041 = vmor %vm3039, %vm3040
        %v3042 = vsel %vm3041, %v3033, %v3038
        %v3043 = vmul.f32 %v2954, %v2972
        %v3044 = vmul.f32 %v2954, %v2982
        %v3045 = vmul.f32 %v2954, %v2992
        %v3046 = vmul.f32 %v2954, %v3002
        %v3047 = vmul.f32 %v2954, %v3012
        %v3048 = vmul.f32 %v2954, %v3022
        %v3049 = vmul.f32 %v2954, %v3032
        %v3050 = vmul.f32 %v2954, %v3042
        %s3051 = scalar_lea.vmem [#allocation13], 2
        %v3052 = vld [vmem:[%s3051] sm:$0x1]
        %v3053 = vmul.f32 %v2913, %v3043
        %v3054 = vmul.f32 %v2914, %v3044
        %v3055 = vmul.f32 %v2915, %v3045
        %v3056 = vmul.f32 %v2916, %v3046
        %v3057 = vmul.f32 %v2917, %v3047
        %v3058 = vmul.f32 %v2918, %v3048
        %v3059 = vmul.f32 %v2919, %v3049
        %v3060 = vmul.f32 %v2920, %v3050
        %v3061 = vsub.f32 %v3052, %v3053
        %v3062 = vsub.f32 %v3052, %v3054
        %v3063 = vsub.f32 %v3052, %v3055
        %v3064 = vsub.f32 %v3052, %v3056
        %v3065 = vsub.f32 %v3052, %v3057
        %v3066 = vsub.f32 %v3052, %v3058
        %v3067 = vsub.f32 %v3052, %v3059
        %v3068 = vsub.f32 %v3052, %v3060
        %v3077 = vperm.slane %v3043, 0
        %v3078 = vperm.slane %v3044, 0
        %v3079 = vperm.slane %v3045, 0
        %v3080 = vperm.slane %v3046, 0
        %v3081 = vperm.slane %v3047, 0
        %v3082 = vperm.slane %v3048, 0
        %v3083 = vperm.slane %v3049, 0
        %v3084 = vperm.slane %v3050, 0
        %v3093 = vmul.f32 %v2769, %v3077
        %v3094 = vmul.f32 %v2770, %v3077
        %v3095 = vmul.f32 %v2771, %v3078
        %v3096 = vmul.f32 %v2772, %v3078
        %v3097 = vmul.f32 %v2773, %v3079
        %v3098 = vmul.f32 %v2774, %v3079
        %v3099 = vmul.f32 %v2775, %v3080
        %v3100 = vmul.f32 %v2776, %v3080
        %v3101 = vmul.f32 %v2777, %v3081
        %v3102 = vmul.f32 %v2778, %v3081
        %v3103 = vmul.f32 %v2779, %v3082
        %v3104 = vmul.f32 %v2780, %v3082
        %v3105 = vmul.f32 %v2781, %v3083
        %v3106 = vmul.f32 %v2782, %v3083
        %v3107 = vmul.f32 %v2783, %v3084
        %v3108 = vmul.f32 %v2784, %v3084
        %v3117 = vperm.slane %v3061, 0
        %v3118 = vperm.slane %v3062, 0
        %v3119 = vperm.slane %v3063, 0
        %v3120 = vperm.slane %v3064, 0
        %v3121 = vperm.slane %v3065, 0
        %v3122 = vperm.slane %v3066, 0
        %v3123 = vperm.slane %v3067, 0
        %v3124 = vperm.slane %v3068, 0
        %v3133 = vadd.f32 %v3093, %v3117
        %v3134 = vadd.f32 %v3094, %v3117
        %v3135 = vadd.f32 %v3095, %v3118
        %v3136 = vadd.f32 %v3096, %v3118
        %v3137 = vadd.f32 %v3097, %v3119
        %v3138 = vadd.f32 %v3098, %v3119
        %v3139 = vadd.f32 %v3099, %v3120
        %v3140 = vadd.f32 %v3100, %v3120
        %v3141 = vadd.f32 %v3101, %v3121
        %v3142 = vadd.f32 %v3102, %v3121
        %v3143 = vadd.f32 %v3103, %v3122
        %v3144 = vadd.f32 %v3104, %v3122
        %v3145 = vadd.f32 %v3105, %v3123
        %v3146 = vadd.f32 %v3106, %v3123
        %v3147 = vadd.f32 %v3107, %v3124
        %v3148 = vadd.f32 %v3108, %v3124
        %v3149 = vpack.c.bf16 %v3133, %v3133
        %v3150 = vpack.c.bf16 %v3134, %v3134
        %v3151 = vpack.c.bf16 %v3135, %v3135
        %v3152 = vpack.c.bf16 %v3136, %v3136
        %v3153 = vpack.c.bf16 %v3137, %v3137
        %v3154 = vpack.c.bf16 %v3138, %v3138
        %v3155 = vpack.c.bf16 %v3139, %v3139
        %v3156 = vpack.c.bf16 %v3140, %v3140
        %v3157 = vpack.c.bf16 %v3141, %v3141
        %v3158 = vpack.c.bf16 %v3142, %v3142
        %v3159 = vpack.c.bf16 %v3143, %v3143
        %v3160 = vpack.c.bf16 %v3144, %v3144
        %v3161 = vpack.c.bf16 %v3145, %v3145
        %v3162 = vpack.c.bf16 %v3146, %v3146
        %v3163 = vpack.c.bf16 %v3147, %v3147
        %v3164 = vpack.c.bf16 %v3148, %v3148
        %v3167 = vunpack.c.l.b16 %v3149
        %v3168 = vunpack.c.l.b16 %v3150
        %v3169 = vpack.c.b16 %v3168, %v3167
        %3171 = vmatpush.bf16.msra.mxu0 0
        %3172 = vmatpush.bf16.msra.mxu0 0
        %3173 = vmatpush.bf16.msra.mxu0 0
        %3174 = vmatpush.bf16.msra.mxu0 0
        %3175 = vmatpush.bf16.msra.mxu0 0
        %3176 = vmatpush.bf16.msra.mxu0 0
        %3177 = vmatpush.bf16.msra.mxu0 0
        %3178 = vmatpush.bf16.msra.mxu0 %v3169
        %3179 = vmatmul.bf16.gmra.mxu0 %v641
        %v3180 = vpop.f32.mrf.mxu0
        %v3181 = vadd.f32 0.0, %v3180
        %v3182 = vpop.f32.mrf.mxu0
        %v3183 = vadd.f32 0.0, %v3182
        %3184 = vdwg.mxu0
        %v3187 = vunpack.c.l.b16 %v3151
        %v3188 = vunpack.c.l.b16 %v3152
        %v3189 = vpack.c.b16 %v3188, %v3187
        %3191 = vmatpush.bf16.msra.mxu0 0
        %3192 = vmatpush.bf16.msra.mxu0 0
        %3193 = vmatpush.bf16.msra.mxu0 0
        %3194 = vmatpush.bf16.msra.mxu0 0
        %3195 = vmatpush.bf16.msra.mxu0 0
        %3196 = vmatpush.bf16.msra.mxu0 0
        %3197 = vmatpush.bf16.msra.mxu0 0
        %3198 = vmatpush.bf16.msra.mxu0 %v3189
        %3199 = vmatmul.bf16.gmra.mxu0 %v669
        %v3200 = vpop.f32.mrf.mxu0
        %v3201 = vadd.f32 0.0, %v3200
        %v3202 = vpop.f32.mrf.mxu0
        %v3203 = vadd.f32 0.0, %v3202
        %3204 = vdwg.mxu0
        %v3207 = vunpack.c.l.b16 %v3153
        %v3208 = vunpack.c.l.b16 %v3154
        %v3209 = vpack.c.b16 %v3208, %v3207
        %3211 = vmatpush.bf16.msra.mxu0 0
        %3212 = vmatpush.bf16.msra.mxu0 0
        %3213 = vmatpush.bf16.msra.mxu0 0
        %3214 = vmatpush.bf16.msra.mxu0 0
        %3215 = vmatpush.bf16.msra.mxu0 0
        %3216 = vmatpush.bf16.msra.mxu0 0
        %3217 = vmatpush.bf16.msra.mxu0 0
        %3218 = vmatpush.bf16.msra.mxu0 %v3209
        %3219 = vmatmul.bf16.gmra.mxu0 %v697
        %v3220 = vpop.f32.mrf.mxu0
        %v3221 = vadd.f32 0.0, %v3220
        %v3222 = vpop.f32.mrf.mxu0
        %v3223 = vadd.f32 0.0, %v3222
        %3224 = vdwg.mxu0
        %v3227 = vunpack.c.l.b16 %v3155
        %v3228 = vunpack.c.l.b16 %v3156
        %v3229 = vpack.c.b16 %v3228, %v3227
        %3231 = vmatpush.bf16.msra.mxu0 0
        %3232 = vmatpush.bf16.msra.mxu0 0
        %3233 = vmatpush.bf16.msra.mxu0 0
        %3234 = vmatpush.bf16.msra.mxu0 0
        %3235 = vmatpush.bf16.msra.mxu0 0
        %3236 = vmatpush.bf16.msra.mxu0 0
        %3237 = vmatpush.bf16.msra.mxu0 0
        %3238 = vmatpush.bf16.msra.mxu0 %v3229
        %3239 = vmatmul.bf16.gmra.mxu0 %v725
        %v3240 = vpop.f32.mrf.mxu0
        %v3241 = vadd.f32 0.0, %v3240
        %v3242 = vpop.f32.mrf.mxu0
        %v3243 = vadd.f32 0.0, %v3242
        %3244 = vdwg.mxu0
        %v3247 = vunpack.c.l.b16 %v3157
        %v3248 = vunpack.c.l.b16 %v3158
        %v3249 = vpack.c.b16 %v3248, %v3247
        %3251 = vmatpush.bf16.msra.mxu0 0
        %3252 = vmatpush.bf16.msra.mxu0 0
        %3253 = vmatpush.bf16.msra.mxu0 0
        %3254 = vmatpush.bf16.msra.mxu0 0
        %3255 = vmatpush.bf16.msra.mxu0 0
        %3256 = vmatpush.bf16.msra.mxu0 0
        %3257 = vmatpush.bf16.msra.mxu0 0
        %3258 = vmatpush.bf16.msra.mxu0 %v3249
        %3259 = vmatmul.bf16.gmra.mxu0 %v753
        %v3260 = vpop.f32.mrf.mxu0
        %v3261 = vadd.f32 0.0, %v3260
        %v3262 = vpop.f32.mrf.mxu0
        %v3263 = vadd.f32 0.0, %v3262
        %3264 = vdwg.mxu0
        %v3267 = vunpack.c.l.b16 %v3159
        %v3268 = vunpack.c.l.b16 %v3160
        %v3269 = vpack.c.b16 %v3268, %v3267
        %3271 = vmatpush.bf16.msra.mxu0 0
        %3272 = vmatpush.bf16.msra.mxu0 0
        %3273 = vmatpush.bf16.msra.mxu0 0
        %3274 = vmatpush.bf16.msra.mxu0 0
        %3275 = vmatpush.bf16.msra.mxu0 0
        %3276 = vmatpush.bf16.msra.mxu0 0
        %3277 = vmatpush.bf16.msra.mxu0 0
        %3278 = vmatpush.bf16.msra.mxu0 %v3269
        %3279 = vmatmul.bf16.gmra.mxu0 %v781
        %v3280 = vpop.f32.mrf.mxu0
        %v3281 = vadd.f32 0.0, %v3280
        %v3282 = vpop.f32.mrf.mxu0
        %v3283 = vadd.f32 0.0, %v3282
        %3284 = vdwg.mxu0
        %v3287 = vunpack.c.l.b16 %v3161
        %v3288 = vunpack.c.l.b16 %v3162
        %v3289 = vpack.c.b16 %v3288, %v3287
        %3291 = vmatpush.bf16.msra.mxu0 0
        %3292 = vmatpush.bf16.msra.mxu0 0
        %3293 = vmatpush.bf16.msra.mxu0 0
        %3294 = vmatpush.bf16.msra.mxu0 0
        %3295 = vmatpush.bf16.msra.mxu0 0
        %3296 = vmatpush.bf16.msra.mxu0 0
        %3297 = vmatpush.bf16.msra.mxu0 0
        %3298 = vmatpush.bf16.msra.mxu0 %v3289
        %3299 = vmatmul.bf16.gmra.mxu0 %v809
        %v3300 = vpop.f32.mrf.mxu0
        %v3301 = vadd.f32 0.0, %v3300
        %v3302 = vpop.f32.mrf.mxu0
        %v3303 = vadd.f32 0.0, %v3302
        %3304 = vdwg.mxu0
        %v3307 = vunpack.c.l.b16 %v3163
        %v3308 = vunpack.c.l.b16 %v3164
        %v3309 = vpack.c.b16 %v3308, %v3307
        %3311 = vmatpush.bf16.msra.mxu0 0
        %3312 = vmatpush.bf16.msra.mxu0 0
        %3313 = vmatpush.bf16.msra.mxu0 0
        %3314 = vmatpush.bf16.msra.mxu0 0
        %3315 = vmatpush.bf16.msra.mxu0 0
        %3316 = vmatpush.bf16.msra.mxu0 0
        %3317 = vmatpush.bf16.msra.mxu0 0
        %3318 = vmatpush.bf16.msra.mxu0 %v3309
        %3319 = vmatmul.bf16.gmra.mxu0 %v837
        %v3320 = vpop.f32.mrf.mxu0
        %v3321 = vadd.f32 0.0, %v3320
        %v3322 = vpop.f32.mrf.mxu0
        %v3323 = vadd.f32 0.0, %v3322
        %3324 = vdwg.mxu0
        %v3325 = vpack.c.bf16 %v3183, %v3181
        %v3326 = vpack.c.bf16 %v3203, %v3201
        %v3327 = vpack.c.bf16 %v3223, %v3221
        %v3328 = vpack.c.bf16 %v3243, %v3241
        %v3329 = vpack.c.bf16 %v3263, %v3261
        %v3330 = vpack.c.bf16 %v3283, %v3281
        %v3331 = vpack.c.bf16 %v3303, %v3301
        %v3332 = vpack.c.bf16 %v3323, %v3321
        %s3333 = scalar_lea.vmem [#allocation7], 192
        %v3334 = vld [vmem:[%s3333] sm:$0xf]
        %v3335 = vld [vmem:[%s3333 + $0x4] sm:$0xf]
        %v3336 = vld [vmem:[%s3333 + $0x8] sm:$0xf]
        %v3337 = vld [vmem:[%s3333 + $0xc] sm:$0xf]
        %v3338 = vld [vmem:[%s3333 + $0x10] sm:$0xf]
        %v3339 = vld [vmem:[%s3333 + $0x14] sm:$0xf]
        %v3340 = vld [vmem:[%s3333 + $0x18] sm:$0xf]
        %v3341 = vld [vmem:[%s3333 + $0x1c] sm:$0xf]
        %v3342 = vld [vmem:[%s3333 + $0x20] sm:$0xf]
        %v3343 = vld [vmem:[%s3333 + $0x24] sm:$0xf]
        %v3344 = vld [vmem:[%s3333 + $0x28] sm:$0xf]
        %v3345 = vld [vmem:[%s3333 + $0x2c] sm:$0xf]
        %v3346 = vld [vmem:[%s3333 + $0x30] sm:$0xf]
        %v3347 = vld [vmem:[%s3333 + $0x34] sm:$0xf]
        %v3348 = vld [vmem:[%s3333 + $0x38] sm:$0xf]
        %v3349 = vld [vmem:[%s3333 + $0x3c] sm:$0xf]
        %s3350 = scalar_lea.vmem [#allocation8], 3
        %v3351 = vld [vmem:[%s3350] sm:$0x1]
        %v3353 = vperm.slane %v3351, 0
        %v3371 = vunpack.c.l.b16 %v3334
        %v3372 = vunpack.c.l.b16 %v3335
        %v3373 = vunpack.c.l.b16 %v3336
        %v3374 = vunpack.c.l.b16 %v3337
        %v3375 = vunpack.c.l.b16 %v3338
        %v3376 = vunpack.c.l.b16 %v3339
        %v3377 = vunpack.c.l.b16 %v3340
        %v3378 = vunpack.c.l.b16 %v3341
        %v3379 = vunpack.c.l.b16 %v3342
        %v3380 = vunpack.c.l.b16 %v3343
        %v3381 = vunpack.c.l.b16 %v3344
        %v3382 = vunpack.c.l.b16 %v3345
        %v3383 = vunpack.c.l.b16 %v3346
        %v3384 = vunpack.c.l.b16 %v3347
        %v3385 = vunpack.c.l.b16 %v3348
        %v3386 = vunpack.c.l.b16 %v3349
        %v3387 = vpack.c.b16 %v3372, %v3371
        %v3388 = vpack.c.b16 %v3374, %v3373
        %v3389 = vpack.c.b16 %v3376, %v3375
        %v3390 = vpack.c.b16 %v3378, %v3377
        %v3391 = vpack.c.b16 %v3380, %v3379
        %v3392 = vpack.c.b16 %v3382, %v3381
        %v3393 = vpack.c.b16 %v3384, %v3383
        %v3394 = vpack.c.b16 %v3386, %v3385
        %3403 = vmatpush.bf16.msra.mxu0 %v3394
        %3404 = vmatpush.bf16.msra.mxu0 %v3393
        %3405 = vmatpush.bf16.msra.mxu0 %v3392
        %3406 = vmatpush.bf16.msra.mxu0 %v3391
        %3407 = vmatpush.bf16.msra.mxu0 %v3390
        %3408 = vmatpush.bf16.msra.mxu0 %v3389
        %3409 = vmatpush.bf16.msra.mxu0 %v3388
        %3410 = vmatpush.bf16.msra.mxu0 %v3387
        %3411 = vmatmul.bf16.gmra.mxu0 %v3325
        %v3412 = vpop.f32.mrf.mxu0
        %v3413 = vadd.f32 %v3353, %v3412
        %v3414 = vpop.f32.mrf.mxu0
        %v3415 = vadd.f32 %v3353, %v3414
        %3416 = vmatmul.bf16.gmra.mxu0 %v3326
        %v3417 = vpop.f32.mrf.mxu0
        %v3418 = vadd.f32 %v3353, %v3417
        %v3419 = vpop.f32.mrf.mxu0
        %v3420 = vadd.f32 %v3353, %v3419
        %3421 = vmatmul.bf16.gmra.mxu0 %v3327
        %v3422 = vpop.f32.mrf.mxu0
        %v3423 = vadd.f32 %v3353, %v3422
        %v3424 = vpop.f32.mrf.mxu0
        %v3425 = vadd.f32 %v3353, %v3424
        %3426 = vmatmul.bf16.gmra.mxu0 %v3328
        %v3427 = vpop.f32.mrf.mxu0
        %v3428 = vadd.f32 %v3353, %v3427
        %v3429 = vpop.f32.mrf.mxu0
        %v3430 = vadd.f32 %v3353, %v3429
        %3431 = vmatmul.bf16.gmra.mxu0 %v3329
        %v3432 = vpop.f32.mrf.mxu0
        %v3433 = vadd.f32 %v3353, %v3432
        %v3434 = vpop.f32.mrf.mxu0
        %v3435 = vadd.f32 %v3353, %v3434
        %3436 = vmatmul.bf16.gmra.mxu0 %v3330
        %v3437 = vpop.f32.mrf.mxu0
        %v3438 = vadd.f32 %v3353, %v3437
        %v3439 = vpop.f32.mrf.mxu0
        %v3440 = vadd.f32 %v3353, %v3439
        %3441 = vmatmul.bf16.gmra.mxu0 %v3331
        %v3442 = vpop.f32.mrf.mxu0
        %v3443 = vadd.f32 %v3353, %v3442
        %v3444 = vpop.f32.mrf.mxu0
        %v3445 = vadd.f32 %v3353, %v3444
        %3446 = vmatmul.bf16.gmra.mxu0 %v3332
        %v3447 = vpop.f32.mrf.mxu0
        %v3448 = vadd.f32 %v3353, %v3447
        %v3449 = vpop.f32.mrf.mxu0
        %v3450 = vadd.f32 %v3353, %v3449
        %3451 = vdwg.mxu0
        %v3452 = vmax.f32 %v3413, 0.0
        %v3453 = vmax.f32 %v3415, 0.0
        %v3454 = vmax.f32 %v3418, 0.0
        %v3455 = vmax.f32 %v3420, 0.0
        %v3456 = vmax.f32 %v3423, 0.0
        %v3457 = vmax.f32 %v3425, 0.0
        %v3458 = vmax.f32 %v3428, 0.0
        %v3459 = vmax.f32 %v3430, 0.0
        %v3460 = vmax.f32 %v3433, 0.0
        %v3461 = vmax.f32 %v3435, 0.0
        %v3462 = vmax.f32 %v3438, 0.0
        %v3463 = vmax.f32 %v3440, 0.0
        %v3464 = vmax.f32 %v3443, 0.0
        %v3465 = vmax.f32 %v3445, 0.0
        %v3466 = vmax.f32 %v3448, 0.0
        %v3467 = vmax.f32 %v3450, 0.0
        %v3468 = vpack.c.bf16 %v3453, %v3452
        %v3469 = vpack.c.bf16 %v3455, %v3454
        %v3470 = vpack.c.bf16 %v3457, %v3456
        %v3471 = vpack.c.bf16 %v3459, %v3458
        %v3472 = vpack.c.bf16 %v3461, %v3460
        %v3473 = vpack.c.bf16 %v3463, %v3462
        %v3474 = vpack.c.bf16 %v3465, %v3464
        %v3475 = vpack.c.bf16 %v3467, %v3466
        %s3476 = scalar_lea.vmem [#allocation10], 192
        %v3477 = vld [vmem:[%s3476] sm:$0xf]
        %v3478 = vld [vmem:[%s3476 + $0x4] sm:$0xf]
        %v3479 = vld [vmem:[%s3476 + $0x8] sm:$0xf]
        %v3480 = vld [vmem:[%s3476 + $0xc] sm:$0xf]
        %v3481 = vld [vmem:[%s3476 + $0x10] sm:$0xf]
        %v3482 = vld [vmem:[%s3476 + $0x14] sm:$0xf]
        %v3483 = vld [vmem:[%s3476 + $0x18] sm:$0xf]
        %v3484 = vld [vmem:[%s3476 + $0x1c] sm:$0xf]
        %v3485 = vld [vmem:[%s3476 + $0x20] sm:$0xf]
        %v3486 = vld [vmem:[%s3476 + $0x24] sm:$0xf]
        %v3487 = vld [vmem:[%s3476 + $0x28] sm:$0xf]
        %v3488 = vld [vmem:[%s3476 + $0x2c] sm:$0xf]
        %v3489 = vld [vmem:[%s3476 + $0x30] sm:$0xf]
        %v3490 = vld [vmem:[%s3476 + $0x34] sm:$0xf]
        %v3491 = vld [vmem:[%s3476 + $0x38] sm:$0xf]
        %v3492 = vld [vmem:[%s3476 + $0x3c] sm:$0xf]
        %s3493 = scalar_lea.vmem [#allocation11], 3
        %v3494 = vld [vmem:[%s3493] sm:$0x1]
        %v3496 = vperm.slane %v3494, 0
        %v3514 = vunpack.c.l.b16 %v3477
        %v3515 = vunpack.c.l.b16 %v3478
        %v3516 = vunpack.c.l.b16 %v3479
        %v3517 = vunpack.c.l.b16 %v3480
        %v3518 = vunpack.c.l.b16 %v3481
        %v3519 = vunpack.c.l.b16 %v3482
        %v3520 = vunpack.c.l.b16 %v3483
        %v3521 = vunpack.c.l.b16 %v3484
        %v3522 = vunpack.c.l.b16 %v3485
        %v3523 = vunpack.c.l.b16 %v3486
        %v3524 = vunpack.c.l.b16 %v3487
        %v3525 = vunpack.c.l.b16 %v3488
        %v3526 = vunpack.c.l.b16 %v3489
        %v3527 = vunpack.c.l.b16 %v3490
        %v3528 = vunpack.c.l.b16 %v3491
        %v3529 = vunpack.c.l.b16 %v3492
        %v3530 = vpack.c.b16 %v3515, %v3514
        %v3531 = vpack.c.b16 %v3517, %v3516
        %v3532 = vpack.c.b16 %v3519, %v3518
        %v3533 = vpack.c.b16 %v3521, %v3520
        %v3534 = vpack.c.b16 %v3523, %v3522
        %v3535 = vpack.c.b16 %v3525, %v3524
        %v3536 = vpack.c.b16 %v3527, %v3526
        %v3537 = vpack.c.b16 %v3529, %v3528
        %3546 = vmatpush.bf16.msra.mxu0 %v3537
        %3547 = vmatpush.bf16.msra.mxu0 %v3536
        %3548 = vmatpush.bf16.msra.mxu0 %v3535
        %3549 = vmatpush.bf16.msra.mxu0 %v3534
        %3550 = vmatpush.bf16.msra.mxu0 %v3533
        %3551 = vmatpush.bf16.msra.mxu0 %v3532
        %3552 = vmatpush.bf16.msra.mxu0 %v3531
        %3553 = vmatpush.bf16.msra.mxu0 %v3530
        %3554 = vmatmul.bf16.gmra.mxu0 %v3468
        %v3555 = vpop.f32.mrf.mxu0
        %v3556 = vadd.f32 %v3496, %v3555
        %v3557 = vpop.f32.mrf.mxu0
        %v3558 = vadd.f32 %v3496, %v3557
        %3559 = vmatmul.bf16.gmra.mxu0 %v3469
        %v3560 = vpop.f32.mrf.mxu0
        %v3561 = vadd.f32 %v3496, %v3560
        %v3562 = vpop.f32.mrf.mxu0
        %v3563 = vadd.f32 %v3496, %v3562
        %3564 = vmatmul.bf16.gmra.mxu0 %v3470
        %v3565 = vpop.f32.mrf.mxu0
        %v3566 = vadd.f32 %v3496, %v3565
        %v3567 = vpop.f32.mrf.mxu0
        %v3568 = vadd.f32 %v3496, %v3567
        %3569 = vmatmul.bf16.gmra.mxu0 %v3471
        %v3570 = vpop.f32.mrf.mxu0
        %v3571 = vadd.f32 %v3496, %v3570
        %v3572 = vpop.f32.mrf.mxu0
        %v3573 = vadd.f32 %v3496, %v3572
        %3574 = vmatmul.bf16.gmra.mxu0 %v3472
        %v3575 = vpop.f32.mrf.mxu0
        %v3576 = vadd.f32 %v3496, %v3575
        %v3577 = vpop.f32.mrf.mxu0
        %v3578 = vadd.f32 %v3496, %v3577
        %3579 = vmatmul.bf16.gmra.mxu0 %v3473
        %v3580 = vpop.f32.mrf.mxu0
        %v3581 = vadd.f32 %v3496, %v3580
        %v3582 = vpop.f32.mrf.mxu0
        %v3583 = vadd.f32 %v3496, %v3582
        %3584 = vmatmul.bf16.gmra.mxu0 %v3474
        %v3585 = vpop.f32.mrf.mxu0
        %v3586 = vadd.f32 %v3496, %v3585
        %v3587 = vpop.f32.mrf.mxu0
        %v3588 = vadd.f32 %v3496, %v3587
        %3589 = vmatmul.bf16.gmra.mxu0 %v3475
        %v3590 = vpop.f32.mrf.mxu0
        %v3591 = vadd.f32 %v3496, %v3590
        %v3592 = vpop.f32.mrf.mxu0
        %v3593 = vadd.f32 %v3496, %v3592
        %3594 = vdwg.mxu0
        %v3595 = vmax.f32 %v3556, 0.0
        %v3596 = vmax.f32 %v3558, 0.0
        %v3597 = vmax.f32 %v3561, 0.0
        %v3598 = vmax.f32 %v3563, 0.0
        %v3599 = vmax.f32 %v3566, 0.0
        %v3600 = vmax.f32 %v3568, 0.0
        %v3601 = vmax.f32 %v3571, 0.0
        %v3602 = vmax.f32 %v3573, 0.0
        %v3603 = vmax.f32 %v3576, 0.0
        %v3604 = vmax.f32 %v3578, 0.0
        %v3605 = vmax.f32 %v3581, 0.0
        %v3606 = vmax.f32 %v3583, 0.0
        %v3607 = vmax.f32 %v3586, 0.0
        %v3608 = vmax.f32 %v3588, 0.0
        %v3609 = vmax.f32 %v3591, 0.0
        %v3610 = vmax.f32 %v3593, 0.0
        %v3611 = vadd.f32 %v3595, %v3596
        %v3612 = vrot.slane %v3611, 4
        %v3613 = vadd.f32 %v3611, %v3612
        %v3614 = vrot.slane %v3613, 2
        %v3615 = vadd.f32 %v3613, %v3614
        %v3616 = vrot.slane %v3615, 1
        %v3617 = vadd.f32 %v3615, %v3616
        %v3618 = vadd.f32 %v3597, %v3598
        %v3619 = vrot.slane %v3618, 4
        %v3620 = vadd.f32 %v3618, %v3619
        %v3621 = vrot.slane %v3620, 2
        %v3622 = vadd.f32 %v3620, %v3621
        %v3623 = vrot.slane %v3622, 1
        %v3624 = vadd.f32 %v3622, %v3623
        %v3625 = vadd.f32 %v3599, %v3600
        %v3626 = vrot.slane %v3625, 4
        %v3627 = vadd.f32 %v3625, %v3626
        %v3628 = vrot.slane %v3627, 2
        %v3629 = vadd.f32 %v3627, %v3628
        %v3630 = vrot.slane %v3629, 1
        %v3631 = vadd.f32 %v3629, %v3630
        %v3632 = vadd.f32 %v3601, %v3602
        %v3633 = vrot.slane %v3632, 4
        %v3634 = vadd.f32 %v3632, %v3633
        %v3635 = vrot.slane %v3634, 2
        %v3636 = vadd.f32 %v3634, %v3635
        %v3637 = vrot.slane %v3636, 1
        %v3638 = vadd.f32 %v3636, %v3637
        %v3639 = vadd.f32 %v3603, %v3604
        %v3640 = vrot.slane %v3639, 4
        %v3641 = vadd.f32 %v3639, %v3640
        %v3642 = vrot.slane %v3641, 2
        %v3643 = vadd.f32 %v3641, %v3642
        %v3644 = vrot.slane %v3643, 1
        %v3645 = vadd.f32 %v3643, %v3644
        %v3646 = vadd.f32 %v3605, %v3606
        %v3647 = vrot.slane %v3646, 4
        %v3648 = vadd.f32 %v3646, %v3647
        %v3649 = vrot.slane %v3648, 2
        %v3650 = vadd.f32 %v3648, %v3649
        %v3651 = vrot.slane %v3650, 1
        %v3652 = vadd.f32 %v3650, %v3651
        %v3653 = vadd.f32 %v3607, %v3608
        %v3654 = vrot.slane %v3653, 4
        %v3655 = vadd.f32 %v3653, %v3654
        %v3656 = vrot.slane %v3655, 2
        %v3657 = vadd.f32 %v3655, %v3656
        %v3658 = vrot.slane %v3657, 1
        %v3659 = vadd.f32 %v3657, %v3658
        %v3660 = vadd.f32 %v3609, %v3610
        %v3661 = vrot.slane %v3660, 4
        %v3662 = vadd.f32 %v3660, %v3661
        %v3663 = vrot.slane %v3662, 2
        %v3664 = vadd.f32 %v3662, %v3663
        %v3665 = vrot.slane %v3664, 1
        %v3666 = vadd.f32 %v3664, %v3665
        %v3667 = vmul.f32 %v3595, %v3595
        %v3668 = vmul.f32 %v3596, %v3596
        %v3669 = vmul.f32 %v3597, %v3597
        %v3670 = vmul.f32 %v3598, %v3598
        %v3671 = vmul.f32 %v3599, %v3599
        %v3672 = vmul.f32 %v3600, %v3600
        %v3673 = vmul.f32 %v3601, %v3601
        %v3674 = vmul.f32 %v3602, %v3602
        %v3675 = vmul.f32 %v3603, %v3603
        %v3676 = vmul.f32 %v3604, %v3604
        %v3677 = vmul.f32 %v3605, %v3605
        %v3678 = vmul.f32 %v3606, %v3606
        %v3679 = vmul.f32 %v3607, %v3607
        %v3680 = vmul.f32 %v3608, %v3608
        %v3681 = vmul.f32 %v3609, %v3609
        %v3682 = vmul.f32 %v3610, %v3610
        %v3683 = vadd.f32 %v3667, %v3668
        %v3684 = vrot.slane %v3683, 4
        %v3685 = vadd.f32 %v3683, %v3684
        %v3686 = vrot.slane %v3685, 2
        %v3687 = vadd.f32 %v3685, %v3686
        %v3688 = vrot.slane %v3687, 1
        %v3689 = vadd.f32 %v3687, %v3688
        %v3690 = vadd.f32 %v3669, %v3670
        %v3691 = vrot.slane %v3690, 4
        %v3692 = vadd.f32 %v3690, %v3691
        %v3693 = vrot.slane %v3692, 2
        %v3694 = vadd.f32 %v3692, %v3693
        %v3695 = vrot.slane %v3694, 1
        %v3696 = vadd.f32 %v3694, %v3695
        %v3697 = vadd.f32 %v3671, %v3672
        %v3698 = vrot.slane %v3697, 4
        %v3699 = vadd.f32 %v3697, %v3698
        %v3700 = vrot.slane %v3699, 2
        %v3701 = vadd.f32 %v3699, %v3700
        %v3702 = vrot.slane %v3701, 1
        %v3703 = vadd.f32 %v3701, %v3702
        %v3704 = vadd.f32 %v3673, %v3674
        %v3705 = vrot.slane %v3704, 4
        %v3706 = vadd.f32 %v3704, %v3705
        %v3707 = vrot.slane %v3706, 2
        %v3708 = vadd.f32 %v3706, %v3707
        %v3709 = vrot.slane %v3708, 1
        %v3710 = vadd.f32 %v3708, %v3709
        %v3711 = vadd.f32 %v3675, %v3676
        %v3712 = vrot.slane %v3711, 4
        %v3713 = vadd.f32 %v3711, %v3712
        %v3714 = vrot.slane %v3713, 2
        %v3715 = vadd.f32 %v3713, %v3714
        %v3716 = vrot.slane %v3715, 1
        %v3717 = vadd.f32 %v3715, %v3716
        %v3718 = vadd.f32 %v3677, %v3678
        %v3719 = vrot.slane %v3718, 4
        %v3720 = vadd.f32 %v3718, %v3719
        %v3721 = vrot.slane %v3720, 2
        %v3722 = vadd.f32 %v3720, %v3721
        %v3723 = vrot.slane %v3722, 1
        %v3724 = vadd.f32 %v3722, %v3723
        %v3725 = vadd.f32 %v3679, %v3680
        %v3726 = vrot.slane %v3725, 4
        %v3727 = vadd.f32 %v3725, %v3726
        %v3728 = vrot.slane %v3727, 2
        %v3729 = vadd.f32 %v3727, %v3728
        %v3730 = vrot.slane %v3729, 1
        %v3731 = vadd.f32 %v3729, %v3730
        %v3732 = vadd.f32 %v3681, %v3682
        %v3733 = vrot.slane %v3732, 4
        %v3734 = vadd.f32 %v3732, %v3733
        %v3735 = vrot.slane %v3734, 2
        %v3736 = vadd.f32 %v3734, %v3735
        %v3737 = vrot.slane %v3736, 1
        %v3738 = vadd.f32 %v3736, %v3737
        %v3739 = vmul.f32 %v3617, 0.0625
        %v3740 = vmul.f32 %v3624, 0.0625
        %v3741 = vmul.f32 %v3631, 0.0625
        %v3742 = vmul.f32 %v3638, 0.0625
        %v3743 = vmul.f32 %v3645, 0.0625
        %v3744 = vmul.f32 %v3652, 0.0625
        %v3745 = vmul.f32 %v3659, 0.0625
        %v3746 = vmul.f32 %v3666, 0.0625
        %v3747 = vmul.f32 %v3689, 0.0625
        %v3748 = vmul.f32 %v3696, 0.0625
        %v3749 = vmul.f32 %v3703, 0.0625
        %v3750 = vmul.f32 %v3710, 0.0625
        %v3751 = vmul.f32 %v3717, 0.0625
        %v3752 = vmul.f32 %v3724, 0.0625
        %v3753 = vmul.f32 %v3731, 0.0625
        %v3754 = vmul.f32 %v3738, 0.0625
        %v3755 = vmul.f32 %v3739, %v3739
        %v3756 = vmul.f32 %v3740, %v3740
        %v3757 = vmul.f32 %v3741, %v3741
        %v3758 = vmul.f32 %v3742, %v3742
        %v3759 = vmul.f32 %v3743, %v3743
        %v3760 = vmul.f32 %v3744, %v3744
        %v3761 = vmul.f32 %v3745, %v3745
        %v3762 = vmul.f32 %v3746, %v3746
        %v3763 = vsub.f32 %v3747, %v3755
        %v3764 = vsub.f32 %v3748, %v3756
        %v3765 = vsub.f32 %v3749, %v3757
        %v3766 = vsub.f32 %v3750, %v3758
        %v3767 = vsub.f32 %v3751, %v3759
        %v3768 = vsub.f32 %v3752, %v3760
        %v3769 = vsub.f32 %v3753, %v3761
        %v3770 = vsub.f32 %v3754, %v3762
        %v3771 = vmax.f32 %v3763, 0.0
        %v3772 = vmax.f32 %v3764, 0.0
        %v3773 = vmax.f32 %v3765, 0.0
        %v3774 = vmax.f32 %v3766, 0.0
        %v3775 = vmax.f32 %v3767, 0.0
        %v3776 = vmax.f32 %v3768, 0.0
        %v3777 = vmax.f32 %v3769, 0.0
        %v3778 = vmax.f32 %v3770, 0.0
        %s3779 = scalar_lea.vmem %s6, 3
        %v3780 = vld [vmem:[%s3779] sm:$0x1]
        %v3781 = vadd.f32 %v3771, 1e-05
        %v3782 = vadd.f32 %v3772, 1e-05
        %v3783 = vadd.f32 %v3773, 1e-05
        %v3784 = vadd.f32 %v3774, 1e-05
        %v3785 = vadd.f32 %v3775, 1e-05
        %v3786 = vadd.f32 %v3776, 1e-05
        %v3787 = vadd.f32 %v3777, 1e-05
        %v3788 = vadd.f32 %v3778, 1e-05
        %v3789 = vrsqrt.pop %v3781
        %v3790 = vmul.f32 %v3789, %v3781
        %v3791 = vmul.f32 %v3790, %v3789
        %v3792 = vmul.f32 0.5, %v3791
        %v3793 = vsub.f32 1.5, %v3792
        %v3794 = vmul.f32 %v3789, %v3793
        %vm3795 = vweird.f32 %v3781
        %vm3796 = vweird.f32 %v3789
        %vm3797 = vmor %vm3795, %vm3796
        %v3798 = vsel %vm3797, %v3789, %v3794
        %v3799 = vrsqrt.pop %v3782
        %v3800 = vmul.f32 %v3799, %v3782
        %v3801 = vmul.f32 %v3800, %v3799
        %v3802 = vmul.f32 0.5, %v3801
        %v3803 = vsub.f32 1.5, %v3802
        %v3804 = vmul.f32 %v3799, %v3803
        %vm3805 = vweird.f32 %v3782
        %vm3806 = vweird.f32 %v3799
        %vm3807 = vmor %vm3805, %vm3806
        %v3808 = vsel %vm3807, %v3799, %v3804
        %v3809 = vrsqrt.pop %v3783
        %v3810 = vmul.f32 %v3809, %v3783
        %v3811 = vmul.f32 %v3810, %v3809
        %v3812 = vmul.f32 0.5, %v3811
        %v3813 = vsub.f32 1.5, %v3812
        %v3814 = vmul.f32 %v3809, %v3813
        %vm3815 = vweird.f32 %v3783
        %vm3816 = vweird.f32 %v3809
        %vm3817 = vmor %vm3815, %vm3816
        %v3818 = vsel %vm3817, %v3809, %v3814
        %v3819 = vrsqrt.pop %v3784
        %v3820 = vmul.f32 %v3819, %v3784
        %v3821 = vmul.f32 %v3820, %v3819
        %v3822 = vmul.f32 0.5, %v3821
        %v3823 = vsub.f32 1.5, %v3822
        %v3824 = vmul.f32 %v3819, %v3823
        %vm3825 = vweird.f32 %v3784
        %vm3826 = vweird.f32 %v3819
        %vm3827 = vmor %vm3825, %vm3826
        %v3828 = vsel %vm3827, %v3819, %v3824
        %v3829 = vrsqrt.pop %v3785
        %v3830 = vmul.f32 %v3829, %v3785
        %v3831 = vmul.f32 %v3830, %v3829
        %v3832 = vmul.f32 0.5, %v3831
        %v3833 = vsub.f32 1.5, %v3832
        %v3834 = vmul.f32 %v3829, %v3833
        %vm3835 = vweird.f32 %v3785
        %vm3836 = vweird.f32 %v3829
        %vm3837 = vmor %vm3835, %vm3836
        %v3838 = vsel %vm3837, %v3829, %v3834
        %v3839 = vrsqrt.pop %v3786
        %v3840 = vmul.f32 %v3839, %v3786
        %v3841 = vmul.f32 %v3840, %v3839
        %v3842 = vmul.f32 0.5, %v3841
        %v3843 = vsub.f32 1.5, %v3842
        %v3844 = vmul.f32 %v3839, %v3843
        %vm3845 = vweird.f32 %v3786
        %vm3846 = vweird.f32 %v3839
        %vm3847 = vmor %vm3845, %vm3846
        %v3848 = vsel %vm3847, %v3839, %v3844
        %v3849 = vrsqrt.pop %v3787
        %v3850 = vmul.f32 %v3849, %v3787
        %v3851 = vmul.f32 %v3850, %v3849
        %v3852 = vmul.f32 0.5, %v3851
        %v3853 = vsub.f32 1.5, %v3852
        %v3854 = vmul.f32 %v3849, %v3853
        %vm3855 = vweird.f32 %v3787
        %vm3856 = vweird.f32 %v3849
        %vm3857 = vmor %vm3855, %vm3856
        %v3858 = vsel %vm3857, %v3849, %v3854
        %v3859 = vrsqrt.pop %v3788
        %v3860 = vmul.f32 %v3859, %v3788
        %v3861 = vmul.f32 %v3860, %v3859
        %v3862 = vmul.f32 0.5, %v3861
        %v3863 = vsub.f32 1.5, %v3862
        %v3864 = vmul.f32 %v3859, %v3863
        %vm3865 = vweird.f32 %v3788
        %vm3866 = vweird.f32 %v3859
        %vm3867 = vmor %vm3865, %vm3866
        %v3868 = vsel %vm3867, %v3859, %v3864
        %v3869 = vmul.f32 %v3780, %v3798
        %v3870 = vmul.f32 %v3780, %v3808
        %v3871 = vmul.f32 %v3780, %v3818
        %v3872 = vmul.f32 %v3780, %v3828
        %v3873 = vmul.f32 %v3780, %v3838
        %v3874 = vmul.f32 %v3780, %v3848
        %v3875 = vmul.f32 %v3780, %v3858
        %v3876 = vmul.f32 %v3780, %v3868
        %s3877 = scalar_lea.vmem [#allocation13], 3
        %v3878 = vld [vmem:[%s3877] sm:$0x1]
        %v3879 = vmul.f32 %v3739, %v3869
        %v3880 = vmul.f32 %v3740, %v3870
        %v3881 = vmul.f32 %v3741, %v3871
        %v3882 = vmul.f32 %v3742, %v3872
        %v3883 = vmul.f32 %v3743, %v3873
        %v3884 = vmul.f32 %v3744, %v3874
        %v3885 = vmul.f32 %v3745, %v3875
        %v3886 = vmul.f32 %v3746, %v3876
        %v3887 = vsub.f32 %v3878, %v3879
        %v3888 = vsub.f32 %v3878, %v3880
        %v3889 = vsub.f32 %v3878, %v3881
        %v3890 = vsub.f32 %v3878, %v3882
        %v3891 = vsub.f32 %v3878, %v3883
        %v3892 = vsub.f32 %v3878, %v3884
        %v3893 = vsub.f32 %v3878, %v3885
        %v3894 = vsub.f32 %v3878, %v3886
        %v3903 = vperm.slane %v3869, 0
        %v3904 = vperm.slane %v3870, 0
        %v3905 = vperm.slane %v3871, 0
        %v3906 = vperm.slane %v3872, 0
        %v3907 = vperm.slane %v3873, 0
        %v3908 = vperm.slane %v3874, 0
        %v3909 = vperm.slane %v3875, 0
        %v3910 = vperm.slane %v3876, 0
        %v3919 = vmul.f32 %v3595, %v3903
        %v3920 = vmul.f32 %v3596, %v3903
        %v3921 = vmul.f32 %v3597, %v3904
        %v3922 = vmul.f32 %v3598, %v3904
        %v3923 = vmul.f32 %v3599, %v3905
        %v3924 = vmul.f32 %v3600, %v3905
        %v3925 = vmul.f32 %v3601, %v3906
        %v3926 = vmul.f32 %v3602, %v3906
        %v3927 = vmul.f32 %v3603, %v3907
        %v3928 = vmul.f32 %v3604, %v3907
        %v3929 = vmul.f32 %v3605, %v3908
        %v3930 = vmul.f32 %v3606, %v3908
        %v3931 = vmul.f32 %v3607, %v3909
        %v3932 = vmul.f32 %v3608, %v3909
        %v3933 = vmul.f32 %v3609, %v3910
        %v3934 = vmul.f32 %v3610, %v3910
        %v3943 = vperm.slane %v3887, 0
        %v3944 = vperm.slane %v3888, 0
        %v3945 = vperm.slane %v3889, 0
        %v3946 = vperm.slane %v3890, 0
        %v3947 = vperm.slane %v3891, 0
        %v3948 = vperm.slane %v3892, 0
        %v3949 = vperm.slane %v3893, 0
        %v3950 = vperm.slane %v3894, 0
        %v3959 = vadd.f32 %v3919, %v3943
        %v3960 = vadd.f32 %v3920, %v3943
        %v3961 = vadd.f32 %v3921, %v3944
        %v3962 = vadd.f32 %v3922, %v3944
        %v3963 = vadd.f32 %v3923, %v3945
        %v3964 = vadd.f32 %v3924, %v3945
        %v3965 = vadd.f32 %v3925, %v3946
        %v3966 = vadd.f32 %v3926, %v3946
        %v3967 = vadd.f32 %v3927, %v3947
        %v3968 = vadd.f32 %v3928, %v3947
        %v3969 = vadd.f32 %v3929, %v3948
        %v3970 = vadd.f32 %v3930, %v3948
        %v3971 = vadd.f32 %v3931, %v3949
        %v3972 = vadd.f32 %v3932, %v3949
        %v3973 = vadd.f32 %v3933, %v3950
        %v3974 = vadd.f32 %v3934, %v3950
        %v3975 = vpack.c.bf16 %v3959, %v3959
        %v3976 = vpack.c.bf16 %v3960, %v3960
        %v3977 = vpack.c.bf16 %v3961, %v3961
        %v3978 = vpack.c.bf16 %v3962, %v3962
        %v3979 = vpack.c.bf16 %v3963, %v3963
        %v3980 = vpack.c.bf16 %v3964, %v3964
        %v3981 = vpack.c.bf16 %v3965, %v3965
        %v3982 = vpack.c.bf16 %v3966, %v3966
        %v3983 = vpack.c.bf16 %v3967, %v3967
        %v3984 = vpack.c.bf16 %v3968, %v3968
        %v3985 = vpack.c.bf16 %v3969, %v3969
        %v3986 = vpack.c.bf16 %v3970, %v3970
        %v3987 = vpack.c.bf16 %v3971, %v3971
        %v3988 = vpack.c.bf16 %v3972, %v3972
        %v3989 = vpack.c.bf16 %v3973, %v3973
        %v3990 = vpack.c.bf16 %v3974, %v3974
        %v3993 = vunpack.c.l.b16 %v3975
        %v3994 = vunpack.c.l.b16 %v3976
        %v3995 = vpack.c.b16 %v3994, %v3993
        %3997 = vmatpush.bf16.msra.mxu0 0
        %3998 = vmatpush.bf16.msra.mxu0 0
        %3999 = vmatpush.bf16.msra.mxu0 0
        %4000 = vmatpush.bf16.msra.mxu0 0
        %4001 = vmatpush.bf16.msra.mxu0 0
        %4002 = vmatpush.bf16.msra.mxu0 0
        %4003 = vmatpush.bf16.msra.mxu0 0
        %4004 = vmatpush.bf16.msra.mxu0 %v3995
        %4005 = vmatmul.bf16.gmra.mxu0 %v641
        %v4006 = vpop.f32.mrf.mxu0
        %v4007 = vadd.f32 0.0, %v4006
        %v4008 = vpop.f32.mrf.mxu0
        %v4009 = vadd.f32 0.0, %v4008
        %4010 = vdwg.mxu0
        %v4013 = vunpack.c.l.b16 %v3977
        %v4014 = vunpack.c.l.b16 %v3978
        %v4015 = vpack.c.b16 %v4014, %v4013
        %4017 = vmatpush.bf16.msra.mxu0 0
        %4018 = vmatpush.bf16.msra.mxu0 0
        %4019 = vmatpush.bf16.msra.mxu0 0
        %4020 = vmatpush.bf16.msra.mxu0 0
        %4021 = vmatpush.bf16.msra.mxu0 0
        %4022 = vmatpush.bf16.msra.mxu0 0
        %4023 = vmatpush.bf16.msra.mxu0 0
        %4024 = vmatpush.bf16.msra.mxu0 %v4015
        %4025 = vmatmul.bf16.gmra.mxu0 %v669
        %v4026 = vpop.f32.mrf.mxu0
        %v4027 = vadd.f32 0.0, %v4026
        %v4028 = vpop.f32.mrf.mxu0
        %v4029 = vadd.f32 0.0, %v4028
        %4030 = vdwg.mxu0
        %v4033 = vunpack.c.l.b16 %v3979
        %v4034 = vunpack.c.l.b16 %v3980
        %v4035 = vpack.c.b16 %v4034, %v4033
        %4037 = vmatpush.bf16.msra.mxu0 0
        %4038 = vmatpush.bf16.msra.mxu0 0
        %4039 = vmatpush.bf16.msra.mxu0 0
        %4040 = vmatpush.bf16.msra.mxu0 0
        %4041 = vmatpush.bf16.msra.mxu0 0
        %4042 = vmatpush.bf16.msra.mxu0 0
        %4043 = vmatpush.bf16.msra.mxu0 0
        %4044 = vmatpush.bf16.msra.mxu0 %v4035
        %4045 = vmatmul.bf16.gmra.mxu0 %v697
        %v4046 = vpop.f32.mrf.mxu0
        %v4047 = vadd.f32 0.0, %v4046
        %v4048 = vpop.f32.mrf.mxu0
        %v4049 = vadd.f32 0.0, %v4048
        %4050 = vdwg.mxu0
        %v4053 = vunpack.c.l.b16 %v3981
        %v4054 = vunpack.c.l.b16 %v3982
        %v4055 = vpack.c.b16 %v4054, %v4053
        %4057 = vmatpush.bf16.msra.mxu0 0
        %4058 = vmatpush.bf16.msra.mxu0 0
        %4059 = vmatpush.bf16.msra.mxu0 0
        %4060 = vmatpush.bf16.msra.mxu0 0
        %4061 = vmatpush.bf16.msra.mxu0 0
        %4062 = vmatpush.bf16.msra.mxu0 0
        %4063 = vmatpush.bf16.msra.mxu0 0
        %4064 = vmatpush.bf16.msra.mxu0 %v4055
        %4065 = vmatmul.bf16.gmra.mxu0 %v725
        %v4066 = vpop.f32.mrf.mxu0
        %v4067 = vadd.f32 0.0, %v4066
        %v4068 = vpop.f32.mrf.mxu0
        %v4069 = vadd.f32 0.0, %v4068
        %4070 = vdwg.mxu0
        %v4073 = vunpack.c.l.b16 %v3983
        %v4074 = vunpack.c.l.b16 %v3984
        %v4075 = vpack.c.b16 %v4074, %v4073
        %4077 = vmatpush.bf16.msra.mxu0 0
        %4078 = vmatpush.bf16.msra.mxu0 0
        %4079 = vmatpush.bf16.msra.mxu0 0
        %4080 = vmatpush.bf16.msra.mxu0 0
        %4081 = vmatpush.bf16.msra.mxu0 0
        %4082 = vmatpush.bf16.msra.mxu0 0
        %4083 = vmatpush.bf16.msra.mxu0 0
        %4084 = vmatpush.bf16.msra.mxu0 %v4075
        %4085 = vmatmul.bf16.gmra.mxu0 %v753
        %v4086 = vpop.f32.mrf.mxu0
        %v4087 = vadd.f32 0.0, %v4086
        %v4088 = vpop.f32.mrf.mxu0
        %v4089 = vadd.f32 0.0, %v4088
        %4090 = vdwg.mxu0
        %v4093 = vunpack.c.l.b16 %v3985
        %v4094 = vunpack.c.l.b16 %v3986
        %v4095 = vpack.c.b16 %v4094, %v4093
        %4097 = vmatpush.bf16.msra.mxu0 0
        %4098 = vmatpush.bf16.msra.mxu0 0
        %4099 = vmatpush.bf16.msra.mxu0 0
        %4100 = vmatpush.bf16.msra.mxu0 0
        %4101 = vmatpush.bf16.msra.mxu0 0
        %4102 = vmatpush.bf16.msra.mxu0 0
        %4103 = vmatpush.bf16.msra.mxu0 0
        %4104 = vmatpush.bf16.msra.mxu0 %v4095
        %4105 = vmatmul.bf16.gmra.mxu0 %v781
        %v4106 = vpop.f32.mrf.mxu0
        %v4107 = vadd.f32 0.0, %v4106
        %v4108 = vpop.f32.mrf.mxu0
        %v4109 = vadd.f32 0.0, %v4108
        %4110 = vdwg.mxu0
        %v4113 = vunpack.c.l.b16 %v3987
        %v4114 = vunpack.c.l.b16 %v3988
        %v4115 = vpack.c.b16 %v4114, %v4113
        %4117 = vmatpush.bf16.msra.mxu0 0
        %4118 = vmatpush.bf16.msra.mxu0 0
        %4119 = vmatpush.bf16.msra.mxu0 0
        %4120 = vmatpush.bf16.msra.mxu0 0
        %4121 = vmatpush.bf16.msra.mxu0 0
        %4122 = vmatpush.bf16.msra.mxu0 0
        %4123 = vmatpush.bf16.msra.mxu0 0
        %4124 = vmatpush.bf16.msra.mxu0 %v4115
        %4125 = vmatmul.bf16.gmra.mxu0 %v809
        %v4126 = vpop.f32.mrf.mxu0
        %v4127 = vadd.f32 0.0, %v4126
        %v4128 = vpop.f32.mrf.mxu0
        %v4129 = vadd.f32 0.0, %v4128
        %4130 = vdwg.mxu0
        %v4133 = vunpack.c.l.b16 %v3989
        %v4134 = vunpack.c.l.b16 %v3990
        %v4135 = vpack.c.b16 %v4134, %v4133
        %4137 = vmatpush.bf16.msra.mxu0 0
        %4138 = vmatpush.bf16.msra.mxu0 0
        %4139 = vmatpush.bf16.msra.mxu0 0
        %4140 = vmatpush.bf16.msra.mxu0 0
        %4141 = vmatpush.bf16.msra.mxu0 0
        %4142 = vmatpush.bf16.msra.mxu0 0
        %4143 = vmatpush.bf16.msra.mxu0 0
        %4144 = vmatpush.bf16.msra.mxu0 %v4135
        %4145 = vmatmul.bf16.gmra.mxu0 %v837
        %v4146 = vpop.f32.mrf.mxu0
        %v4147 = vadd.f32 0.0, %v4146
        %v4148 = vpop.f32.mrf.mxu0
        %v4149 = vadd.f32 0.0, %v4148
        %4150 = vdwg.mxu0
        %v4151 = vpack.c.bf16 %v4009, %v4007
        %v4152 = vpack.c.bf16 %v4029, %v4027
        %v4153 = vpack.c.bf16 %v4049, %v4047
        %v4154 = vpack.c.bf16 %v4069, %v4067
        %v4155 = vpack.c.bf16 %v4089, %v4087
        %v4156 = vpack.c.bf16 %v4109, %v4107
        %v4157 = vpack.c.bf16 %v4129, %v4127
        %v4158 = vpack.c.bf16 %v4149, %v4147
        %s4159 = scalar_lea.vmem [#allocation7], 256
        %v4160 = vld [vmem:[%s4159] sm:$0xf]
        %v4161 = vld [vmem:[%s4159 + $0x4] sm:$0xf]
        %v4162 = vld [vmem:[%s4159 + $0x8] sm:$0xf]
        %v4163 = vld [vmem:[%s4159 + $0xc] sm:$0xf]
        %v4164 = vld [vmem:[%s4159 + $0x10] sm:$0xf]
        %v4165 = vld [vmem:[%s4159 + $0x14] sm:$0xf]
        %v4166 = vld [vmem:[%s4159 + $0x18] sm:$0xf]
        %v4167 = vld [vmem:[%s4159 + $0x1c] sm:$0xf]
        %v4168 = vld [vmem:[%s4159 + $0x20] sm:$0xf]
        %v4169 = vld [vmem:[%s4159 + $0x24] sm:$0xf]
        %v4170 = vld [vmem:[%s4159 + $0x28] sm:$0xf]
        %v4171 = vld [vmem:[%s4159 + $0x2c] sm:$0xf]
        %v4172 = vld [vmem:[%s4159 + $0x30] sm:$0xf]
        %v4173 = vld [vmem:[%s4159 + $0x34] sm:$0xf]
        %v4174 = vld [vmem:[%s4159 + $0x38] sm:$0xf]
        %v4175 = vld [vmem:[%s4159 + $0x3c] sm:$0xf]
        %s4176 = scalar_lea.vmem [#allocation8], 4
        %v4177 = vld [vmem:[%s4176] sm:$0x1]
        %v4179 = vperm.slane %v4177, 0
        %v4197 = vunpack.c.l.b16 %v4160
        %v4198 = vunpack.c.l.b16 %v4161
        %v4199 = vunpack.c.l.b16 %v4162
        %v4200 = vunpack.c.l.b16 %v4163
        %v4201 = vunpack.c.l.b16 %v4164
        %v4202 = vunpack.c.l.b16 %v4165
        %v4203 = vunpack.c.l.b16 %v4166
        %v4204 = vunpack.c.l.b16 %v4167
        %v4205 = vunpack.c.l.b16 %v4168
        %v4206 = vunpack.c.l.b16 %v4169
        %v4207 = vunpack.c.l.b16 %v4170
        %v4208 = vunpack.c.l.b16 %v4171
        %v4209 = vunpack.c.l.b16 %v4172
        %v4210 = vunpack.c.l.b16 %v4173
        %v4211 = vunpack.c.l.b16 %v4174
        %v4212 = vunpack.c.l.b16 %v4175
        %v4213 = vpack.c.b16 %v4198, %v4197
        %v4214 = vpack.c.b16 %v4200, %v4199
        %v4215 = vpack.c.b16 %v4202, %v4201
        %v4216 = vpack.c.b16 %v4204, %v4203
        %v4217 = vpack.c.b16 %v4206, %v4205
        %v4218 = vpack.c.b16 %v4208, %v4207
        %v4219 = vpack.c.b16 %v4210, %v4209
        %v4220 = vpack.c.b16 %v4212, %v4211
        %4229 = vmatpush.bf16.msra.mxu0 %v4220
        %4230 = vmatpush.bf16.msra.mxu0 %v4219
        %4231 = vmatpush.bf16.msra.mxu0 %v4218
        %4232 = vmatpush.bf16.msra.mxu0 %v4217
        %4233 = vmatpush.bf16.msra.mxu0 %v4216
        %4234 = vmatpush.bf16.msra.mxu0 %v4215
        %4235 = vmatpush.bf16.msra.mxu0 %v4214
        %4236 = vmatpush.bf16.msra.mxu0 %v4213
        %4237 = vmatmul.bf16.gmra.mxu0 %v4151
        %v4238 = vpop.f32.mrf.mxu0
        %v4239 = vadd.f32 %v4179, %v4238
        %v4240 = vpop.f32.mrf.mxu0
        %v4241 = vadd.f32 %v4179, %v4240
        %4242 = vmatmul.bf16.gmra.mxu0 %v4152
        %v4243 = vpop.f32.mrf.mxu0
        %v4244 = vadd.f32 %v4179, %v4243
        %v4245 = vpop.f32.mrf.mxu0
        %v4246 = vadd.f32 %v4179, %v4245
        %4247 = vmatmul.bf16.gmra.mxu0 %v4153
        %v4248 = vpop.f32.mrf.mxu0
        %v4249 = vadd.f32 %v4179, %v4248
        %v4250 = vpop.f32.mrf.mxu0
        %v4251 = vadd.f32 %v4179, %v4250
        %4252 = vmatmul.bf16.gmra.mxu0 %v4154
        %v4253 = vpop.f32.mrf.mxu0
        %v4254 = vadd.f32 %v4179, %v4253
        %v4255 = vpop.f32.mrf.mxu0
        %v4256 = vadd.f32 %v4179, %v4255
        %4257 = vmatmul.bf16.gmra.mxu0 %v4155
        %v4258 = vpop.f32.mrf.mxu0
        %v4259 = vadd.f32 %v4179, %v4258
        %v4260 = vpop.f32.mrf.mxu0
        %v4261 = vadd.f32 %v4179, %v4260
        %4262 = vmatmul.bf16.gmra.mxu0 %v4156
        %v4263 = vpop.f32.mrf.mxu0
        %v4264 = vadd.f32 %v4179, %v4263
        %v4265 = vpop.f32.mrf.mxu0
        %v4266 = vadd.f32 %v4179, %v4265
        %4267 = vmatmul.bf16.gmra.mxu0 %v4157
        %v4268 = vpop.f32.mrf.mxu0
        %v4269 = vadd.f32 %v4179, %v4268
        %v4270 = vpop.f32.mrf.mxu0
        %v4271 = vadd.f32 %v4179, %v4270
        %4272 = vmatmul.bf16.gmra.mxu0 %v4158
        %v4273 = vpop.f32.mrf.mxu0
        %v4274 = vadd.f32 %v4179, %v4273
        %v4275 = vpop.f32.mrf.mxu0
        %v4276 = vadd.f32 %v4179, %v4275
        %4277 = vdwg.mxu0
        %v4278 = vmax.f32 %v4239, 0.0
        %v4279 = vmax.f32 %v4241, 0.0
        %v4280 = vmax.f32 %v4244, 0.0
        %v4281 = vmax.f32 %v4246, 0.0
        %v4282 = vmax.f32 %v4249, 0.0
        %v4283 = vmax.f32 %v4251, 0.0
        %v4284 = vmax.f32 %v4254, 0.0
        %v4285 = vmax.f32 %v4256, 0.0
        %v4286 = vmax.f32 %v4259, 0.0
        %v4287 = vmax.f32 %v4261, 0.0
        %v4288 = vmax.f32 %v4264, 0.0
        %v4289 = vmax.f32 %v4266, 0.0
        %v4290 = vmax.f32 %v4269, 0.0
        %v4291 = vmax.f32 %v4271, 0.0
        %v4292 = vmax.f32 %v4274, 0.0
        %v4293 = vmax.f32 %v4276, 0.0
        %v4294 = vpack.c.bf16 %v4279, %v4278
        %v4295 = vpack.c.bf16 %v4281, %v4280
        %v4296 = vpack.c.bf16 %v4283, %v4282
        %v4297 = vpack.c.bf16 %v4285, %v4284
        %v4298 = vpack.c.bf16 %v4287, %v4286
        %v4299 = vpack.c.bf16 %v4289, %v4288
        %v4300 = vpack.c.bf16 %v4291, %v4290
        %v4301 = vpack.c.bf16 %v4293, %v4292
        %s4302 = scalar_lea.vmem [#allocation10], 256
        %v4303 = vld [vmem:[%s4302] sm:$0xf]
        %v4304 = vld [vmem:[%s4302 + $0x4] sm:$0xf]
        %v4305 = vld [vmem:[%s4302 + $0x8] sm:$0xf]
        %v4306 = vld [vmem:[%s4302 + $0xc] sm:$0xf]
        %v4307 = vld [vmem:[%s4302 + $0x10] sm:$0xf]
        %v4308 = vld [vmem:[%s4302 + $0x14] sm:$0xf]
        %v4309 = vld [vmem:[%s4302 + $0x18] sm:$0xf]
        %v4310 = vld [vmem:[%s4302 + $0x1c] sm:$0xf]
        %v4311 = vld [vmem:[%s4302 + $0x20] sm:$0xf]
        %v4312 = vld [vmem:[%s4302 + $0x24] sm:$0xf]
        %v4313 = vld [vmem:[%s4302 + $0x28] sm:$0xf]
        %v4314 = vld [vmem:[%s4302 + $0x2c] sm:$0xf]
        %v4315 = vld [vmem:[%s4302 + $0x30] sm:$0xf]
        %v4316 = vld [vmem:[%s4302 + $0x34] sm:$0xf]
        %v4317 = vld [vmem:[%s4302 + $0x38] sm:$0xf]
        %v4318 = vld [vmem:[%s4302 + $0x3c] sm:$0xf]
        %s4319 = scalar_lea.vmem [#allocation11], 4
        %v4320 = vld [vmem:[%s4319] sm:$0x1]
        %v4322 = vperm.slane %v4320, 0
        %v4340 = vunpack.c.l.b16 %v4303
        %v4341 = vunpack.c.l.b16 %v4304
        %v4342 = vunpack.c.l.b16 %v4305
        %v4343 = vunpack.c.l.b16 %v4306
        %v4344 = vunpack.c.l.b16 %v4307
        %v4345 = vunpack.c.l.b16 %v4308
        %v4346 = vunpack.c.l.b16 %v4309
        %v4347 = vunpack.c.l.b16 %v4310
        %v4348 = vunpack.c.l.b16 %v4311
        %v4349 = vunpack.c.l.b16 %v4312
        %v4350 = vunpack.c.l.b16 %v4313
        %v4351 = vunpack.c.l.b16 %v4314
        %v4352 = vunpack.c.l.b16 %v4315
        %v4353 = vunpack.c.l.b16 %v4316
        %v4354 = vunpack.c.l.b16 %v4317
        %v4355 = vunpack.c.l.b16 %v4318
        %v4356 = vpack.c.b16 %v4341, %v4340
        %v4357 = vpack.c.b16 %v4343, %v4342
        %v4358 = vpack.c.b16 %v4345, %v4344
        %v4359 = vpack.c.b16 %v4347, %v4346
        %v4360 = vpack.c.b16 %v4349, %v4348
        %v4361 = vpack.c.b16 %v4351, %v4350
        %v4362 = vpack.c.b16 %v4353, %v4352
        %v4363 = vpack.c.b16 %v4355, %v4354
        %4372 = vmatpush.bf16.msra.mxu0 %v4363
        %4373 = vmatpush.bf16.msra.mxu0 %v4362
        %4374 = vmatpush.bf16.msra.mxu0 %v4361
        %4375 = vmatpush.bf16.msra.mxu0 %v4360
        %4376 = vmatpush.bf16.msra.mxu0 %v4359
        %4377 = vmatpush.bf16.msra.mxu0 %v4358
        %4378 = vmatpush.bf16.msra.mxu0 %v4357
        %4379 = vmatpush.bf16.msra.mxu0 %v4356
        %4380 = vmatmul.bf16.gmra.mxu0 %v4294
        %v4381 = vpop.f32.mrf.mxu0
        %v4382 = vadd.f32 %v4322, %v4381
        %v4383 = vpop.f32.mrf.mxu0
        %v4384 = vadd.f32 %v4322, %v4383
        %4385 = vmatmul.bf16.gmra.mxu0 %v4295
        %v4386 = vpop.f32.mrf.mxu0
        %v4387 = vadd.f32 %v4322, %v4386
        %v4388 = vpop.f32.mrf.mxu0
        %v4389 = vadd.f32 %v4322, %v4388
        %4390 = vmatmul.bf16.gmra.mxu0 %v4296
        %v4391 = vpop.f32.mrf.mxu0
        %v4392 = vadd.f32 %v4322, %v4391
        %v4393 = vpop.f32.mrf.mxu0
        %v4394 = vadd.f32 %v4322, %v4393
        %4395 = vmatmul.bf16.gmra.mxu0 %v4297
        %v4396 = vpop.f32.mrf.mxu0
        %v4397 = vadd.f32 %v4322, %v4396
        %v4398 = vpop.f32.mrf.mxu0
        %v4399 = vadd.f32 %v4322, %v4398
        %4400 = vmatmul.bf16.gmra.mxu0 %v4298
        %v4401 = vpop.f32.mrf.mxu0
        %v4402 = vadd.f32 %v4322, %v4401
        %v4403 = vpop.f32.mrf.mxu0
        %v4404 = vadd.f32 %v4322, %v4403
        %4405 = vmatmul.bf16.gmra.mxu0 %v4299
        %v4406 = vpop.f32.mrf.mxu0
        %v4407 = vadd.f32 %v4322, %v4406
        %v4408 = vpop.f32.mrf.mxu0
        %v4409 = vadd.f32 %v4322, %v4408
        %4410 = vmatmul.bf16.gmra.mxu0 %v4300
        %v4411 = vpop.f32.mrf.mxu0
        %v4412 = vadd.f32 %v4322, %v4411
        %v4413 = vpop.f32.mrf.mxu0
        %v4414 = vadd.f32 %v4322, %v4413
        %4415 = vmatmul.bf16.gmra.mxu0 %v4301
        %v4416 = vpop.f32.mrf.mxu0
        %v4417 = vadd.f32 %v4322, %v4416
        %v4418 = vpop.f32.mrf.mxu0
        %v4419 = vadd.f32 %v4322, %v4418
        %4420 = vdwg.mxu0
        %v4421 = vmax.f32 %v4382, 0.0
        %v4422 = vmax.f32 %v4384, 0.0
        %v4423 = vmax.f32 %v4387, 0.0
        %v4424 = vmax.f32 %v4389, 0.0
        %v4425 = vmax.f32 %v4392, 0.0
        %v4426 = vmax.f32 %v4394, 0.0
        %v4427 = vmax.f32 %v4397, 0.0
        %v4428 = vmax.f32 %v4399, 0.0
        %v4429 = vmax.f32 %v4402, 0.0
        %v4430 = vmax.f32 %v4404, 0.0
        %v4431 = vmax.f32 %v4407, 0.0
        %v4432 = vmax.f32 %v4409, 0.0
        %v4433 = vmax.f32 %v4412, 0.0
        %v4434 = vmax.f32 %v4414, 0.0
        %v4435 = vmax.f32 %v4417, 0.0
        %v4436 = vmax.f32 %v4419, 0.0
        %v4437 = vadd.f32 %v4421, %v4422
        %v4438 = vrot.slane %v4437, 4
        %v4439 = vadd.f32 %v4437, %v4438
        %v4440 = vrot.slane %v4439, 2
        %v4441 = vadd.f32 %v4439, %v4440
        %v4442 = vrot.slane %v4441, 1
        %v4443 = vadd.f32 %v4441, %v4442
        %v4444 = vadd.f32 %v4423, %v4424
        %v4445 = vrot.slane %v4444, 4
        %v4446 = vadd.f32 %v4444, %v4445
        %v4447 = vrot.slane %v4446, 2
        %v4448 = vadd.f32 %v4446, %v4447
        %v4449 = vrot.slane %v4448, 1
        %v4450 = vadd.f32 %v4448, %v4449
        %v4451 = vadd.f32 %v4425, %v4426
        %v4452 = vrot.slane %v4451, 4
        %v4453 = vadd.f32 %v4451, %v4452
        %v4454 = vrot.slane %v4453, 2
        %v4455 = vadd.f32 %v4453, %v4454
        %v4456 = vrot.slane %v4455, 1
        %v4457 = vadd.f32 %v4455, %v4456
        %v4458 = vadd.f32 %v4427, %v4428
        %v4459 = vrot.slane %v4458, 4
        %v4460 = vadd.f32 %v4458, %v4459
        %v4461 = vrot.slane %v4460, 2
        %v4462 = vadd.f32 %v4460, %v4461
        %v4463 = vrot.slane %v4462, 1
        %v4464 = vadd.f32 %v4462, %v4463
        %v4465 = vadd.f32 %v4429, %v4430
        %v4466 = vrot.slane %v4465, 4
        %v4467 = vadd.f32 %v4465, %v4466
        %v4468 = vrot.slane %v4467, 2
        %v4469 = vadd.f32 %v4467, %v4468
        %v4470 = vrot.slane %v4469, 1
        %v4471 = vadd.f32 %v4469, %v4470
        %v4472 = vadd.f32 %v4431, %v4432
        %v4473 = vrot.slane %v4472, 4
        %v4474 = vadd.f32 %v4472, %v4473
        %v4475 = vrot.slane %v4474, 2
        %v4476 = vadd.f32 %v4474, %v4475
        %v4477 = vrot.slane %v4476, 1
        %v4478 = vadd.f32 %v4476, %v4477
        %v4479 = vadd.f32 %v4433, %v4434
        %v4480 = vrot.slane %v4479, 4
        %v4481 = vadd.f32 %v4479, %v4480
        %v4482 = vrot.slane %v4481, 2
        %v4483 = vadd.f32 %v4481, %v4482
        %v4484 = vrot.slane %v4483, 1
        %v4485 = vadd.f32 %v4483, %v4484
        %v4486 = vadd.f32 %v4435, %v4436
        %v4487 = vrot.slane %v4486, 4
        %v4488 = vadd.f32 %v4486, %v4487
        %v4489 = vrot.slane %v4488, 2
        %v4490 = vadd.f32 %v4488, %v4489
        %v4491 = vrot.slane %v4490, 1
        %v4492 = vadd.f32 %v4490, %v4491
        %v4493 = vmul.f32 %v4421, %v4421
        %v4494 = vmul.f32 %v4422, %v4422
        %v4495 = vmul.f32 %v4423, %v4423
        %v4496 = vmul.f32 %v4424, %v4424
        %v4497 = vmul.f32 %v4425, %v4425
        %v4498 = vmul.f32 %v4426, %v4426
        %v4499 = vmul.f32 %v4427, %v4427
        %v4500 = vmul.f32 %v4428, %v4428
        %v4501 = vmul.f32 %v4429, %v4429
        %v4502 = vmul.f32 %v4430, %v4430
        %v4503 = vmul.f32 %v4431, %v4431
        %v4504 = vmul.f32 %v4432, %v4432
        %v4505 = vmul.f32 %v4433, %v4433
        %v4506 = vmul.f32 %v4434, %v4434
        %v4507 = vmul.f32 %v4435, %v4435
        %v4508 = vmul.f32 %v4436, %v4436
        %v4509 = vadd.f32 %v4493, %v4494
        %v4510 = vrot.slane %v4509, 4
        %v4511 = vadd.f32 %v4509, %v4510
        %v4512 = vrot.slane %v4511, 2
        %v4513 = vadd.f32 %v4511, %v4512
        %v4514 = vrot.slane %v4513, 1
        %v4515 = vadd.f32 %v4513, %v4514
        %v4516 = vadd.f32 %v4495, %v4496
        %v4517 = vrot.slane %v4516, 4
        %v4518 = vadd.f32 %v4516, %v4517
        %v4519 = vrot.slane %v4518, 2
        %v4520 = vadd.f32 %v4518, %v4519
        %v4521 = vrot.slane %v4520, 1
        %v4522 = vadd.f32 %v4520, %v4521
        %v4523 = vadd.f32 %v4497, %v4498
        %v4524 = vrot.slane %v4523, 4
        %v4525 = vadd.f32 %v4523, %v4524
        %v4526 = vrot.slane %v4525, 2
        %v4527 = vadd.f32 %v4525, %v4526
        %v4528 = vrot.slane %v4527, 1
        %v4529 = vadd.f32 %v4527, %v4528
        %v4530 = vadd.f32 %v4499, %v4500
        %v4531 = vrot.slane %v4530, 4
        %v4532 = vadd.f32 %v4530, %v4531
        %v4533 = vrot.slane %v4532, 2
        %v4534 = vadd.f32 %v4532, %v4533
        %v4535 = vrot.slane %v4534, 1
        %v4536 = vadd.f32 %v4534, %v4535
        %v4537 = vadd.f32 %v4501, %v4502
        %v4538 = vrot.slane %v4537, 4
        %v4539 = vadd.f32 %v4537, %v4538
        %v4540 = vrot.slane %v4539, 2
        %v4541 = vadd.f32 %v4539, %v4540
        %v4542 = vrot.slane %v4541, 1
        %v4543 = vadd.f32 %v4541, %v4542
        %v4544 = vadd.f32 %v4503, %v4504
        %v4545 = vrot.slane %v4544, 4
        %v4546 = vadd.f32 %v4544, %v4545
        %v4547 = vrot.slane %v4546, 2
        %v4548 = vadd.f32 %v4546, %v4547
        %v4549 = vrot.slane %v4548, 1
        %v4550 = vadd.f32 %v4548, %v4549
        %v4551 = vadd.f32 %v4505, %v4506
        %v4552 = vrot.slane %v4551, 4
        %v4553 = vadd.f32 %v4551, %v4552
        %v4554 = vrot.slane %v4553, 2
        %v4555 = vadd.f32 %v4553, %v4554
        %v4556 = vrot.slane %v4555, 1
        %v4557 = vadd.f32 %v4555, %v4556
        %v4558 = vadd.f32 %v4507, %v4508
        %v4559 = vrot.slane %v4558, 4
        %v4560 = vadd.f32 %v4558, %v4559
        %v4561 = vrot.slane %v4560, 2
        %v4562 = vadd.f32 %v4560, %v4561
        %v4563 = vrot.slane %v4562, 1
        %v4564 = vadd.f32 %v4562, %v4563
        %v4565 = vmul.f32 %v4443, 0.0625
        %v4566 = vmul.f32 %v4450, 0.0625
        %v4567 = vmul.f32 %v4457, 0.0625
        %v4568 = vmul.f32 %v4464, 0.0625
        %v4569 = vmul.f32 %v4471, 0.0625
        %v4570 = vmul.f32 %v4478, 0.0625
        %v4571 = vmul.f32 %v4485, 0.0625
        %v4572 = vmul.f32 %v4492, 0.0625
        %v4573 = vmul.f32 %v4515, 0.0625
        %v4574 = vmul.f32 %v4522, 0.0625
        %v4575 = vmul.f32 %v4529, 0.0625
        %v4576 = vmul.f32 %v4536, 0.0625
        %v4577 = vmul.f32 %v4543, 0.0625
        %v4578 = vmul.f32 %v4550, 0.0625
        %v4579 = vmul.f32 %v4557, 0.0625
        %v4580 = vmul.f32 %v4564, 0.0625
        %v4581 = vmul.f32 %v4565, %v4565
        %v4582 = vmul.f32 %v4566, %v4566
        %v4583 = vmul.f32 %v4567, %v4567
        %v4584 = vmul.f32 %v4568, %v4568
        %v4585 = vmul.f32 %v4569, %v4569
        %v4586 = vmul.f32 %v4570, %v4570
        %v4587 = vmul.f32 %v4571, %v4571
        %v4588 = vmul.f32 %v4572, %v4572
        %v4589 = vsub.f32 %v4573, %v4581
        %v4590 = vsub.f32 %v4574, %v4582
        %v4591 = vsub.f32 %v4575, %v4583
        %v4592 = vsub.f32 %v4576, %v4584
        %v4593 = vsub.f32 %v4577, %v4585
        %v4594 = vsub.f32 %v4578, %v4586
        %v4595 = vsub.f32 %v4579, %v4587
        %v4596 = vsub.f32 %v4580, %v4588
        %v4597 = vmax.f32 %v4589, 0.0
        %v4598 = vmax.f32 %v4590, 0.0
        %v4599 = vmax.f32 %v4591, 0.0
        %v4600 = vmax.f32 %v4592, 0.0
        %v4601 = vmax.f32 %v4593, 0.0
        %v4602 = vmax.f32 %v4594, 0.0
        %v4603 = vmax.f32 %v4595, 0.0
        %v4604 = vmax.f32 %v4596, 0.0
        %s4605 = scalar_lea.vmem %s6, 4
        %v4606 = vld [vmem:[%s4605] sm:$0x1]
        %v4607 = vadd.f32 %v4597, 1e-05
        %v4608 = vadd.f32 %v4598, 1e-05
        %v4609 = vadd.f32 %v4599, 1e-05
        %v4610 = vadd.f32 %v4600, 1e-05
        %v4611 = vadd.f32 %v4601, 1e-05
        %v4612 = vadd.f32 %v4602, 1e-05
        %v4613 = vadd.f32 %v4603, 1e-05
        %v4614 = vadd.f32 %v4604, 1e-05
        %v4615 = vrsqrt.pop %v4607
        %v4616 = vmul.f32 %v4615, %v4607
        %v4617 = vmul.f32 %v4616, %v4615
        %v4618 = vmul.f32 0.5, %v4617
        %v4619 = vsub.f32 1.5, %v4618
        %v4620 = vmul.f32 %v4615, %v4619
        %vm4621 = vweird.f32 %v4607
        %vm4622 = vweird.f32 %v4615
        %vm4623 = vmor %vm4621, %vm4622
        %v4624 = vsel %vm4623, %v4615, %v4620
        %v4625 = vrsqrt.pop %v4608
        %v4626 = vmul.f32 %v4625, %v4608
        %v4627 = vmul.f32 %v4626, %v4625
        %v4628 = vmul.f32 0.5, %v4627
        %v4629 = vsub.f32 1.5, %v4628
        %v4630 = vmul.f32 %v4625, %v4629
        %vm4631 = vweird.f32 %v4608
        %vm4632 = vweird.f32 %v4625
        %vm4633 = vmor %vm4631, %vm4632
        %v4634 = vsel %vm4633, %v4625, %v4630
        %v4635 = vrsqrt.pop %v4609
        %v4636 = vmul.f32 %v4635, %v4609
        %v4637 = vmul.f32 %v4636, %v4635
        %v4638 = vmul.f32 0.5, %v4637
        %v4639 = vsub.f32 1.5, %v4638
        %v4640 = vmul.f32 %v4635, %v4639
        %vm4641 = vweird.f32 %v4609
        %vm4642 = vweird.f32 %v4635
        %vm4643 = vmor %vm4641, %vm4642
        %v4644 = vsel %vm4643, %v4635, %v4640
        %v4645 = vrsqrt.pop %v4610
        %v4646 = vmul.f32 %v4645, %v4610
        %v4647 = vmul.f32 %v4646, %v4645
        %v4648 = vmul.f32 0.5, %v4647
        %v4649 = vsub.f32 1.5, %v4648
        %v4650 = vmul.f32 %v4645, %v4649
        %vm4651 = vweird.f32 %v4610
        %vm4652 = vweird.f32 %v4645
        %vm4653 = vmor %vm4651, %vm4652
        %v4654 = vsel %vm4653, %v4645, %v4650
        %v4655 = vrsqrt.pop %v4611
        %v4656 = vmul.f32 %v4655, %v4611
        %v4657 = vmul.f32 %v4656, %v4655
        %v4658 = vmul.f32 0.5, %v4657
        %v4659 = vsub.f32 1.5, %v4658
        %v4660 = vmul.f32 %v4655, %v4659
        %vm4661 = vweird.f32 %v4611
        %vm4662 = vweird.f32 %v4655
        %vm4663 = vmor %vm4661, %vm4662
        %v4664 = vsel %vm4663, %v4655, %v4660
        %v4665 = vrsqrt.pop %v4612
        %v4666 = vmul.f32 %v4665, %v4612
        %v4667 = vmul.f32 %v4666, %v4665
        %v4668 = vmul.f32 0.5, %v4667
        %v4669 = vsub.f32 1.5, %v4668
        %v4670 = vmul.f32 %v4665, %v4669
        %vm4671 = vweird.f32 %v4612
        %vm4672 = vweird.f32 %v4665
        %vm4673 = vmor %vm4671, %vm4672
        %v4674 = vsel %vm4673, %v4665, %v4670
        %v4675 = vrsqrt.pop %v4613
        %v4676 = vmul.f32 %v4675, %v4613
        %v4677 = vmul.f32 %v4676, %v4675
        %v4678 = vmul.f32 0.5, %v4677
        %v4679 = vsub.f32 1.5, %v4678
        %v4680 = vmul.f32 %v4675, %v4679
        %vm4681 = vweird.f32 %v4613
        %vm4682 = vweird.f32 %v4675
        %vm4683 = vmor %vm4681, %vm4682
        %v4684 = vsel %vm4683, %v4675, %v4680
        %v4685 = vrsqrt.pop %v4614
        %v4686 = vmul.f32 %v4685, %v4614
        %v4687 = vmul.f32 %v4686, %v4685
        %v4688 = vmul.f32 0.5, %v4687
        %v4689 = vsub.f32 1.5, %v4688
        %v4690 = vmul.f32 %v4685, %v4689
        %vm4691 = vweird.f32 %v4614
        %vm4692 = vweird.f32 %v4685
        %vm4693 = vmor %vm4691, %vm4692
        %v4694 = vsel %vm4693, %v4685, %v4690
        %v4695 = vmul.f32 %v4606, %v4624
        %v4696 = vmul.f32 %v4606, %v4634
        %v4697 = vmul.f32 %v4606, %v4644
        %v4698 = vmul.f32 %v4606, %v4654
        %v4699 = vmul.f32 %v4606, %v4664
        %v4700 = vmul.f32 %v4606, %v4674
        %v4701 = vmul.f32 %v4606, %v4684
        %v4702 = vmul.f32 %v4606, %v4694
        %s4703 = scalar_lea.vmem [#allocation13], 4
        %v4704 = vld [vmem:[%s4703] sm:$0x1]
        %v4705 = vmul.f32 %v4565, %v4695
        %v4706 = vmul.f32 %v4566, %v4696
        %v4707 = vmul.f32 %v4567, %v4697
        %v4708 = vmul.f32 %v4568, %v4698
        %v4709 = vmul.f32 %v4569, %v4699
        %v4710 = vmul.f32 %v4570, %v4700
        %v4711 = vmul.f32 %v4571, %v4701
        %v4712 = vmul.f32 %v4572, %v4702
        %v4713 = vsub.f32 %v4704, %v4705
        %v4714 = vsub.f32 %v4704, %v4706
        %v4715 = vsub.f32 %v4704, %v4707
        %v4716 = vsub.f32 %v4704, %v4708
        %v4717 = vsub.f32 %v4704, %v4709
        %v4718 = vsub.f32 %v4704, %v4710
        %v4719 = vsub.f32 %v4704, %v4711
        %v4720 = vsub.f32 %v4704, %v4712
        %v4729 = vperm.slane %v4695, 0
        %v4730 = vperm.slane %v4696, 0
        %v4731 = vperm.slane %v4697, 0
        %v4732 = vperm.slane %v4698, 0
        %v4733 = vperm.slane %v4699, 0
        %v4734 = vperm.slane %v4700, 0
        %v4735 = vperm.slane %v4701, 0
        %v4736 = vperm.slane %v4702, 0
        %v4745 = vmul.f32 %v4421, %v4729
        %v4746 = vmul.f32 %v4422, %v4729
        %v4747 = vmul.f32 %v4423, %v4730
        %v4748 = vmul.f32 %v4424, %v4730
        %v4749 = vmul.f32 %v4425, %v4731
        %v4750 = vmul.f32 %v4426, %v4731
        %v4751 = vmul.f32 %v4427, %v4732
        %v4752 = vmul.f32 %v4428, %v4732
        %v4753 = vmul.f32 %v4429, %v4733
        %v4754 = vmul.f32 %v4430, %v4733
        %v4755 = vmul.f32 %v4431, %v4734
        %v4756 = vmul.f32 %v4432, %v4734
        %v4757 = vmul.f32 %v4433, %v4735
        %v4758 = vmul.f32 %v4434, %v4735
        %v4759 = vmul.f32 %v4435, %v4736
        %v4760 = vmul.f32 %v4436, %v4736
        %v4769 = vperm.slane %v4713, 0
        %v4770 = vperm.slane %v4714, 0
        %v4771 = vperm.slane %v4715, 0
        %v4772 = vperm.slane %v4716, 0
        %v4773 = vperm.slane %v4717, 0
        %v4774 = vperm.slane %v4718, 0
        %v4775 = vperm.slane %v4719, 0
        %v4776 = vperm.slane %v4720, 0
        %v4785 = vadd.f32 %v4745, %v4769
        %v4786 = vadd.f32 %v4746, %v4769
        %v4787 = vadd.f32 %v4747, %v4770
        %v4788 = vadd.f32 %v4748, %v4770
        %v4789 = vadd.f32 %v4749, %v4771
        %v4790 = vadd.f32 %v4750, %v4771
        %v4791 = vadd.f32 %v4751, %v4772
        %v4792 = vadd.f32 %v4752, %v4772
        %v4793 = vadd.f32 %v4753, %v4773
        %v4794 = vadd.f32 %v4754, %v4773
        %v4795 = vadd.f32 %v4755, %v4774
        %v4796 = vadd.f32 %v4756, %v4774
        %v4797 = vadd.f32 %v4757, %v4775
        %v4798 = vadd.f32 %v4758, %v4775
        %v4799 = vadd.f32 %v4759, %v4776
        %v4800 = vadd.f32 %v4760, %v4776
        %v4801 = vpack.c.bf16 %v4786, %v4785
        %v4802 = vpack.c.bf16 %v4788, %v4787
        %v4803 = vpack.c.bf16 %v4790, %v4789
        %v4804 = vpack.c.bf16 %v4792, %v4791
        %v4805 = vpack.c.bf16 %v4794, %v4793
        %v4806 = vpack.c.bf16 %v4796, %v4795
        %v4807 = vpack.c.bf16 %v4798, %v4797
        %v4808 = vpack.c.bf16 %v4800, %v4799
        %v4809 = vunpack.c.l.bf16 %v4801
        %v4810 = vunpack.c.h.bf16 %v4801
        %v4811 = vunpack.c.l.bf16 %v4802
        %v4812 = vunpack.c.h.bf16 %v4802
        %v4813 = vunpack.c.l.bf16 %v4803
        %v4814 = vunpack.c.h.bf16 %v4803
        %v4815 = vunpack.c.l.bf16 %v4804
        %v4816 = vunpack.c.h.bf16 %v4804
        %v4817 = vunpack.c.l.bf16 %v4805
        %v4818 = vunpack.c.h.bf16 %v4805
        %v4819 = vunpack.c.l.bf16 %v4806
        %v4820 = vunpack.c.h.bf16 %v4806
        %v4821 = vunpack.c.l.bf16 %v4807
        %v4822 = vunpack.c.h.bf16 %v4807
        %v4823 = vunpack.c.l.bf16 %v4808
        %v4824 = vunpack.c.h.bf16 %v4808
        %v4825 = vadd.f32 %v4809, %v4810
        %v4826 = vrot.slane %v4825, 4
        %v4827 = vadd.f32 %v4825, %v4826
        %v4828 = vrot.slane %v4827, 2
        %v4829 = vadd.f32 %v4827, %v4828
        %v4830 = vrot.slane %v4829, 1
        %v4831 = vadd.f32 %v4829, %v4830
        %v4832 = vadd.f32 %v4811, %v4812
        %v4833 = vrot.slane %v4832, 4
        %v4834 = vadd.f32 %v4832, %v4833
        %v4835 = vrot.slane %v4834, 2
        %v4836 = vadd.f32 %v4834, %v4835
        %v4837 = vrot.slane %v4836, 1
        %v4838 = vadd.f32 %v4836, %v4837
        %v4839 = vadd.f32 %v4813, %v4814
        %v4840 = vrot.slane %v4839, 4
        %v4841 = vadd.f32 %v4839, %v4840
        %v4842 = vrot.slane %v4841, 2
        %v4843 = vadd.f32 %v4841, %v4842
        %v4844 = vrot.slane %v4843, 1
        %v4845 = vadd.f32 %v4843, %v4844
        %v4846 = vadd.f32 %v4815, %v4816
        %v4847 = vrot.slane %v4846, 4
        %v4848 = vadd.f32 %v4846, %v4847
        %v4849 = vrot.slane %v4848, 2
        %v4850 = vadd.f32 %v4848, %v4849
        %v4851 = vrot.slane %v4850, 1
        %v4852 = vadd.f32 %v4850, %v4851
        %v4853 = vadd.f32 %v4817, %v4818
        %v4854 = vrot.slane %v4853, 4
        %v4855 = vadd.f32 %v4853, %v4854
        %v4856 = vrot.slane %v4855, 2
        %v4857 = vadd.f32 %v4855, %v4856
        %v4858 = vrot.slane %v4857, 1
        %v4859 = vadd.f32 %v4857, %v4858
        %v4860 = vadd.f32 %v4819, %v4820
        %v4861 = vrot.slane %v4860, 4
        %v4862 = vadd.f32 %v4860, %v4861
        %v4863 = vrot.slane %v4862, 2
        %v4864 = vadd.f32 %v4862, %v4863
        %v4865 = vrot.slane %v4864, 1
        %v4866 = vadd.f32 %v4864, %v4865
        %v4867 = vadd.f32 %v4821, %v4822
        %v4868 = vrot.slane %v4867, 4
        %v4869 = vadd.f32 %v4867, %v4868
        %v4870 = vrot.slane %v4869, 2
        %v4871 = vadd.f32 %v4869, %v4870
        %v4872 = vrot.slane %v4871, 1
        %v4873 = vadd.f32 %v4871, %v4872
        %v4874 = vadd.f32 %v4823, %v4824
        %v4875 = vrot.slane %v4874, 4
        %v4876 = vadd.f32 %v4874, %v4875
        %v4877 = vrot.slane %v4876, 2
        %v4878 = vadd.f32 %v4876, %v4877
        %v4879 = vrot.slane %v4878, 1
        %v4880 = vadd.f32 %v4878, %v4879
        %v4881 = vpack.c.bf16 %v4831, %v4831
        %v4882 = vpack.c.bf16 %v4838, %v4838
        %v4883 = vpack.c.bf16 %v4845, %v4845
        %v4884 = vpack.c.bf16 %v4852, %v4852
        %v4885 = vpack.c.bf16 %v4859, %v4859
        %v4886 = vpack.c.bf16 %v4866, %v4866
        %v4887 = vpack.c.bf16 %v4873, %v4873
        %v4888 = vpack.c.bf16 %v4880, %v4880
        %v4889 = vld [vmem:[#allocation14] sm:$0xf]
        %v4890 = vld [vmem:[#allocation14 + $0x4] sm:$0xf]
        %v4891 = vld [vmem:[#allocation14 + $0x8] sm:$0xf]
        %v4892 = vld [vmem:[#allocation14 + $0xc] sm:$0xf]
        %v4893 = vld [vmem:[#allocation14 + $0x10] sm:$0xf]
        %v4894 = vld [vmem:[#allocation14 + $0x14] sm:$0xf]
        %v4895 = vld [vmem:[#allocation14 + $0x18] sm:$0xf]
        %v4896 = vld [vmem:[#allocation14 + $0x1c] sm:$0xf]
        %v4897 = vld [vmem:[#allocation14 + $0x20] sm:$0xf]
        %v4898 = vld [vmem:[#allocation14 + $0x24] sm:$0xf]
        %v4899 = vld [vmem:[#allocation14 + $0x28] sm:$0xf]
        %v4900 = vld [vmem:[#allocation14 + $0x2c] sm:$0xf]
        %v4901 = vld [vmem:[#allocation14 + $0x30] sm:$0xf]
        %v4902 = vld [vmem:[#allocation14 + $0x34] sm:$0xf]
        %v4903 = vld [vmem:[#allocation14 + $0x38] sm:$0xf]
        %v4904 = vld [vmem:[#allocation14 + $0x3c] sm:$0xf]
        %v4905 = vld [vmem:[%s9] sm:$0x1]
        %v4907 = vperm.slane %v4905, 0
        %v4917 = vunpack.c.l.b16 %v4881
        %v4918 = vunpack.c.l.b16 %v4882
        %v4919 = vunpack.c.l.b16 %v4883
        %v4920 = vunpack.c.l.b16 %v4884
        %v4921 = vunpack.c.l.b16 %v4885
        %v4922 = vunpack.c.l.b16 %v4886
        %v4923 = vunpack.c.l.b16 %v4887
        %v4924 = vunpack.c.l.b16 %v4888
        %vm4925 = vcmask 1041409
        %v4926 = vsel %vm4925, %v4918, %v4917
        %vm4927 = vcmask 1042434
        %v4928 = vsel %vm4927, %v4919, %v4926
        %vm4929 = vcmask 1043459
        %v4930 = vsel %vm4929, %v4920, %v4928
        %vm4931 = vcmask 1044484
        %v4932 = vsel %vm4931, %v4921, %v4930
        %vm4933 = vcmask 1045509
        %v4934 = vsel %vm4933, %v4922, %v4932
        %vm4935 = vcmask 1046534
        %v4936 = vsel %vm4935, %v4923, %v4934
        %vm4937 = vcmask 1047559
        %v4938 = vsel %vm4937, %v4924, %v4936
        %v4939 = vpack.c.b16 %v4938, %v4938
        %v4957 = vunpack.c.l.b16 %v4889
        %v4958 = vunpack.c.l.b16 %v4890
        %v4959 = vunpack.c.l.b16 %v4891
        %v4960 = vunpack.c.l.b16 %v4892
        %v4961 = vunpack.c.l.b16 %v4893
        %v4962 = vunpack.c.l.b16 %v4894
        %v4963 = vunpack.c.l.b16 %v4895
        %v4964 = vunpack.c.l.b16 %v4896
        %v4965 = vunpack.c.l.b16 %v4897
        %v4966 = vunpack.c.l.b16 %v4898
        %v4967 = vunpack.c.l.b16 %v4899
        %v4968 = vunpack.c.l.b16 %v4900
        %v4969 = vunpack.c.l.b16 %v4901
        %v4970 = vunpack.c.l.b16 %v4902
        %v4971 = vunpack.c.l.b16 %v4903
        %v4972 = vunpack.c.l.b16 %v4904
        %v4973 = vpack.c.b16 %v4958, %v4957
        %v4974 = vpack.c.b16 %v4960, %v4959
        %v4975 = vpack.c.b16 %v4962, %v4961
        %v4976 = vpack.c.b16 %v4964, %v4963
        %v4977 = vpack.c.b16 %v4966, %v4965
        %v4978 = vpack.c.b16 %v4968, %v4967
        %v4979 = vpack.c.b16 %v4970, %v4969
        %v4980 = vpack.c.b16 %v4972, %v4971
        %4989 = vmatpush.bf16.msra.mxu0 %v4980
        %4990 = vmatpush.bf16.msra.mxu0 %v4979
        %4991 = vmatpush.bf16.msra.mxu0 %v4978
        %4992 = vmatpush.bf16.msra.mxu0 %v4977
        %4993 = vmatpush.bf16.msra.mxu0 %v4976
        %4994 = vmatpush.bf16.msra.mxu0 %v4975
        %4995 = vmatpush.bf16.msra.mxu0 %v4974
        %4996 = vmatpush.bf16.msra.mxu0 %v4973
        %4997 = vmatmul.bf16.gmra.mxu0 %v4939
        %v4998 = vpop.f32.mrf.mxu0
        %v4999 = vadd.f32 %v4907, %v4998
        %v5000 = vpop.f32.mrf.mxu0
        %5001 = vdwg.mxu0
        %v5002 = vmax.f32 %v4999, 0.0
        %v5003 = vpack.c.bf16 %v5002, %v5002
        %v5004 = vld [vmem:[#allocation16] sm:$0xf]
        %v5005 = vld [vmem:[#allocation16 + $0x4] sm:$0xf]
        %v5006 = vld [vmem:[#allocation16 + $0x8] sm:$0xf]
        %v5007 = vld [vmem:[#allocation16 + $0xc] sm:$0xf]
        %v5008 = vld [vmem:[#allocation16 + $0x10] sm:$0xf]
        %v5009 = vld [vmem:[#allocation16 + $0x14] sm:$0xf]
        %v5010 = vld [vmem:[#allocation16 + $0x18] sm:$0xf]
        %v5011 = vld [vmem:[#allocation16 + $0x1c] sm:$0xf]
        %v5012 = vld [vmem:[#allocation16 + $0x20] sm:$0xf]
        %v5013 = vld [vmem:[#allocation16 + $0x24] sm:$0xf]
        %v5014 = vld [vmem:[#allocation16 + $0x28] sm:$0xf]
        %v5015 = vld [vmem:[#allocation16 + $0x2c] sm:$0xf]
        %v5016 = vld [vmem:[#allocation16 + $0x30] sm:$0xf]
        %v5017 = vld [vmem:[#allocation16 + $0x34] sm:$0xf]
        %v5018 = vld [vmem:[#allocation16 + $0x38] sm:$0xf]
        %v5019 = vld [vmem:[#allocation16 + $0x3c] sm:$0xf]
        %v5020 = vld [vmem:[%s11] sm:$0x1]
        %v5022 = vperm.slane %v5020, 0
        %v5040 = vunpack.c.l.b16 %v5004
        %v5041 = vunpack.c.l.b16 %v5005
        %v5042 = vunpack.c.l.b16 %v5006
        %v5043 = vunpack.c.l.b16 %v5007
        %v5044 = vunpack.c.l.b16 %v5008
        %v5045 = vunpack.c.l.b16 %v5009
        %v5046 = vunpack.c.l.b16 %v5010
        %v5047 = vunpack.c.l.b16 %v5011
        %v5048 = vunpack.c.l.b16 %v5012
        %v5049 = vunpack.c.l.b16 %v5013
        %v5050 = vunpack.c.l.b16 %v5014
        %v5051 = vunpack.c.l.b16 %v5015
        %v5052 = vunpack.c.l.b16 %v5016
        %v5053 = vunpack.c.l.b16 %v5017
        %v5054 = vunpack.c.l.b16 %v5018
        %v5055 = vunpack.c.l.b16 %v5019
        %v5056 = vpack.c.b16 %v5041, %v5040
        %v5057 = vpack.c.b16 %v5043, %v5042
        %v5058 = vpack.c.b16 %v5045, %v5044
        %v5059 = vpack.c.b16 %v5047, %v5046
        %v5060 = vpack.c.b16 %v5049, %v5048
        %v5061 = vpack.c.b16 %v5051, %v5050
        %v5062 = vpack.c.b16 %v5053, %v5052
        %v5063 = vpack.c.b16 %v5055, %v5054
        %5072 = vmatpush.bf16.msra.mxu0 %v5063
        %5073 = vmatpush.bf16.msra.mxu0 %v5062
        %5074 = vmatpush.bf16.msra.mxu0 %v5061
        %5075 = vmatpush.bf16.msra.mxu0 %v5060
        %5076 = vmatpush.bf16.msra.mxu0 %v5059
        %5077 = vmatpush.bf16.msra.mxu0 %v5058
        %5078 = vmatpush.bf16.msra.mxu0 %v5057
        %5079 = vmatpush.bf16.msra.mxu0 %v5056
        %5080 = vmatmul.bf16.gmra.mxu0 %v5003
        %v5081 = vpop.f32.mrf.mxu0
        %v5082 = vadd.f32 %v5022, %v5081
        %v5083 = vpop.f32.mrf.mxu0
        %5084 = vdwg.mxu0
        %v5085 = vlaneseq
        %v5086 = vand.u32 %v5085, 127
        %vm5087 = vcmp.lt.s32.totalorder %v5086, 3
        %v5088 = vsel %vm5087, %v5082, -1e+30
        %5089 = vmax.xlane.f32.xlu0 %v5088
        %v5090 = vpop.xlane.xlu0 %5089
        %v5091 = vsub.f32 %v5088, %v5090
        %v5092 = vmul.f32 %v5091, 1.442695
        %v5093 = vpow.pop %v5092
        %v5094 = vsel %vm5087, %v5093, 0.0
        %5095 = vadd.xlane.f32.xlu0 %v5094
        %v5096 = vpop.xlane.xlu0 %5095
        %v5097 = vlog2.pop %v5096
        %v5098 = vmul.f32 %v5097, 0.6931472
        %v5099 = vsub.f32 %v5091, %v5098
        %v5100 = vsel %vm5087, %v5099, 0.0
        %5101 = vst [vmem:[%s592] sm:$0xff] %v5100
        %s5102 = sand.u32 %s305, 1
        %s5103 = scalar_lea.sflag [#allocation4], %s5102
        %s5104 = sand.u32 %s305, 1
        %s5105 = smul.addr %s5104, 8
        %s5106 = scalar_lea.vmem [#allocation17], %s5105
        // Predicated region
        $region105: #{tpu_custom_call.1} parent=67 // pred_check
          %p5107 = pneg %p315
        $region106: #{tpu_custom_call.1} parent=67 // pred_check_branch
          %5109 = sbr.rel (%p5107) target = $region108
        $region107: #{tpu_custom_call.1} parent=67 // pred_region
          %5111 = vsyncadd %s5103, 0
          %s5112 = smul.addr %s35, 8
          %s5113 = scalar_lea.hbm %s12, %s5112
          %s5115 = sshll.u32 %s5106, 4
          %s5116 = int_to_ptr.vmem [resolvable:$true] %s5115
          %s5117 = sshll.u32 %s5113, 4
          %s5118 = int_to_ptr.hbm [resolvable:$true] %s5117
          %5120 = dma.vmem_to_hbm [thread:$0]  %s5116, 128, %s5118, %s5103
        $region108: #{tpu_custom_call.1} parent=67 // pred_fallthru
          _
      $region68: #{tpu_custom_call.1} parent=5 // pred_fallthru
        _
      %p5121 = scmp.le.s32.totalorder 2, %s30
      // Predicated region
      $region109: #{tpu_custom_call.1} parent=5 // pred_check
        %p5122 = pneg %p5121
      $region110: #{tpu_custom_call.1} parent=5 // pred_check_branch
        %5124 = sbr.rel (%p5122) target = $region112
      $region111: #{tpu_custom_call.1} parent=5 // pred_region
        %s5125 = ssub.s32 %s30, 2
        // Predicated region
        $region113: #{tpu_custom_call.1} parent=111 // pred_check
          %p5126 = pneg %p321
        $region114: #{tpu_custom_call.1} parent=111 // pred_check_branch
          %5128 = sbr.rel (%p5126) target = $region116
        $region115: #{tpu_custom_call.1} parent=111 // pred_region
          %s5129 = sand.u32 %s306, 1
          %s5130 = scalar_lea.sflag [#allocation4], %s5129
          %s5131 = sand.u32 %s306, 1
          %s5132 = smul.addr %s5131, 8
          %s5133 = scalar_lea.vmem [#allocation17], %s5132
          %5135 = dma.done %s5130, 128
        $region116: #{tpu_custom_call.1} parent=111 // pred_fallthru
          _
      $region112: #{tpu_custom_call.1} parent=5 // pred_fallthru
        _
    $region6: #{tpu_custom_call.1} parent=1 // loop_footer
      %s34 = sadd.s32 1, %s30
    $region7: #{tpu_custom_call.1} parent=1 // loop_footer_branch
      %29 = sbr.rel target = $region3
    $region8: #{tpu_custom_call.1} parent=1 // loop_exit
      _
    %5136 = vsyncpa [#allocation3], 1
    %s5137 = scalar_lea.sflag [#allocation3], 1
    %5138 = vsyncpa %s5137, 1
    %5139 = vsyncpa [#allocation6], 1
    %s5140 = scalar_lea.sflag [#allocation6], 1
    %5141 = vsyncpa %s5140, 1
    %5142 = vsyncpa [#allocation9], 1
    %5143 = vsyncpa [#allocation12], 1
    %5144 = vsyncpa [#allocation15], 1
    %5145 = vsyncpa [#allocation4], 1
    %s5146 = scalar_lea.sflag [#allocation4], 1
    %5147 = vsyncpa %s5146, 1

</llo_original>
